<compile_context>
chip_gen: v6e
topology: v6e:2x2x1
jax: 0.10.0
libtpu: 0.0.40
codegen_flags: <defaults>
</compile_context>

<pallas_src>
import numpy as np
import jax
import jax.numpy as jnp
from jax import lax
from jax.experimental import pallas as pl
from jax.experimental.pallas import tpu as pltpu


# ----------------------------- Pallas kernel --------------------------------

def _aux_head_kernel(x_ref, pt_ref, w1_ref, sh1_ref, w2_ref, sh2_ref,
                     g_ref, wl_ref, bl_ref, out_ref):
    B = g_ref.shape[0]                  # images in this tile
    M1 = pt_ref.shape[0]                # 4 * S2p (tap-major pooled rows)
    S2p = M1 // 4
    C1 = w1_ref.shape[1] // B           # conv1 output channels (128)

    # ReLU hoisted once over the whole block (all B images at once).
    xr = jnp.maximum(x_ref[...], 0.0)                              # (HWp, B*Cp)

    # ReLU -> AvgPool2d(5, s=2) with the 2x2-conv tap selection pre-folded into
    # the pooling matrix: ONE (M1, HWp) x (HWp, B*Cp) matmul for the tile
    # (images live on lanes).
    pooled = jnp.dot(pt_ref[...], xr,
                     preferred_element_type=jnp.float32)           # (M1, B*Cp)

    # Conv2d(C->128, 1x1) with BN1 scale folded in, batched over the tile as a
    # single block-diagonal matmul (images stay on lanes), then BN1 shift+ReLU.
    h1 = jnp.dot(pooled.astype(jnp.bfloat16), w1_ref[...],
                 preferred_element_type=jnp.float32)               # (M1, B*C1)
    h1 = jnp.maximum(h1 + sh1_ref[...], 0.0)

    # Relayout (tap, pos) x (img, chan) -> (img, pos) x (tap, chan).  Every
    # slice offset is a multiple of S2p (>=8 sublanes) / C1 (=128 lanes), so
    # this is pure aligned vreg copies feeding a single fused K=512 conv2.
    h1cat = jnp.concatenate(
        [jnp.concatenate(
            [h1[k * S2p:(k + 1) * S2p, b * C1:(b + 1) * C1] for k in range(4)],
            axis=1)
         for b in range(B)], axis=0)                               # (B*S2p, 4*C1)

    # Conv2d(128->768, 2x2) with BN2 scale folded in: single K=512 matmul,
    # then BN2 shift + ReLU.
    h2 = jnp.dot(h1cat.astype(jnp.bfloat16), w2_ref[...],
                 preferred_element_type=jnp.float32)               # (B*S2p, 768)
    h2 = jnp.maximum(h2 + sh2_ref[...], 0.0)

    # AdaptiveAvgPool2d((1,1)) as a 0/1 row-selection matmul (1/S2 folded into
    # the classifier weights; padded tap / padded batch rows are never
    # selected), then Linear(768 -> NC_pad).  Both kept f32 (tiny matmuls).
    gap = jnp.dot(g_ref[...], h2, preferred_element_type=jnp.float32)   # (B, 768)
    out_ref[...] = (jnp.dot(gap, wl_ref[...],
                            preferred_element_type=jnp.float32)
                    + bl_ref[...])                                 # (B, NC_pad)


# -------------------------- trace-time constants -----------------------------

def _pool_select_matrix(H, W):
    """AvgPool2d(5,2) composed with the 2x2-conv tap selection.

    Returns (PT, S2, S2p):
      PT  : (4*S2p, H*W) f32, rows ordered [tap][spatial]; each tap block is
            padded with zero rows up to S2p (a multiple of 8).
      S2  : true number of conv2 output positions.
      S2p : padded number per tap block.
    """
    Ho, Wo = (H - 5) // 2 + 1, (W - 5) // 2 + 1
    P = np.zeros((Ho * Wo, H * W), np.float32)
    for qi in range(Ho):
        for qj in range(Wo):
            q = qi * Wo + qj
            for ki in range(5):
                for kj in range(5):
                    P[q, (2 * qi + ki) * W + (2 * qj + kj)] = 1.0 / 25.0
    H2, W2 = Ho - 1, Wo - 1
    S2 = H2 * W2
    S2p = -(-S2 // 8) * 8
    PT = np.zeros((4 * S2p, H * W), np.float32)
    for di in range(2):
        for dj in range(2):
            k = di * 2 + dj
            for qi in range(H2):
                for qj in range(W2):
                    PT[k * S2p + qi * W2 + qj] = P[(qi + di) * Wo + (qj + dj)]
    return PT, S2, S2p


# --------------------------------- wrapper -----------------------------------

def aux_head_forward(x_nchw, raw_params, *, b_tile=16):
    """AuxiliaryHeadImageNet forward.  x_nchw: (N, C, H, W) f32 -> (N, nc) f32."""
    (w1, g1, be1, m1, v1, w2, g2, be2, m2, v2, wl, bl) = raw_params
    eps = 1e-5
    N, C, H, W = x_nchw.shape
    HW = H * W
    nc = wl.shape[0]
    C1, C2 = 128, 768

    PT, S2, S2p = _pool_select_matrix(H, W)
    M1 = 4 * S2p

    # Batch tile: multiple of 8, default 16; keep >= 2 grid steps when the
    # batch allows it so both v7x TensorCores get work ("parallel" grid axis).
    want = max(8, (int(b_tile) // 8) * 8)
    cap = 8 * max(1, (N // 2) // 8) if N >= 16 else 8
    B_TILE = min(want, cap)
    N_pad = -(-N // B_TILE) * B_TILE

    # Channel pad only to the bf16 sublane tile (16), NOT 128: for small C this
    # keeps the x DMA ~2x raw instead of ~32x.  Images sit on lanes, so the x
    # block's lane dim (B_TILE*Cp) is still a multiple of 128 (lane-dense).
    Cp = max(16, -(-C // 16) * 16)
    HWp = -(-HW // 16) * 16
    NC_pad = max(128, -(-nc // 128) * 128)

    # Eval-mode BN folded into per-channel scale (into conv weights) + shift.
    a1 = g1 / jnp.sqrt(v1 + eps)
    sh1 = be1 - m1 * a1
    a2 = g2 / jnp.sqrt(v2 + eps)
    sh2 = be2 - m2 * a2

    # Conv1 (1x1) weights, BN1-scaled, channel-padded, replicated as a
    # block-diagonal (B_TILE*Cp, B_TILE*128) so the whole tile is one matmul.
    w1f = jnp.pad(w1.reshape(C1, C).T * a1[None, :], ((0, Cp - C), (0, 0)))
    w1bd = jnp.kron(jnp.eye(B_TILE, dtype=jnp.float32), w1f).astype(jnp.bfloat16)
    sh1t = jnp.tile(sh1, (B_TILE,)).reshape(1, B_TILE * C1).astype(jnp.float32)

    # Conv2 (2x2) weights, BN2-scaled, 4 taps stacked along K -> (512, 768).
    w2f = jnp.concatenate(
        [w2[:, :, di, dj].T * a2[None, :] for di in range(2) for dj in range(2)],
        axis=0).astype(jnp.bfloat16)
    sh2r = sh2.reshape(1, C2).astype(jnp.float32)

    # GAP selection matrix: picks the S2 true conv2 rows of each image.
    G = np.zeros((B_TILE, B_TILE * S2p), np.float32)
    for b in range(B_TILE):
        G[b, b * S2p: b * S2p + S2] = 1.0

    # Classifier with the 1/S2 of the global average pool folded in (f32).
    wlf = jnp.pad(wl.T / float(S2), ((0, 0), (0, NC_pad - nc))).astype(jnp.float32)
    blp = jnp.pad(bl, (0, NC_pad - nc)).reshape(1, NC_pad).astype(jnp.float32)

    # Input layout: NCHW -> (HWp, N_pad*Cp): spatial on sublanes, (image,
    # channel) on lanes, bf16.  Makes the pooling contraction one 2D matmul per
    # tile and the x DMA lane-dense.
    xt = jnp.transpose(x_nchw, (2, 3, 0, 1)).reshape(HW, N, C)
    xt = jnp.pad(xt, ((0, HWp - HW), (0, N_pad - N), (0, Cp - C)))
    xt = xt.reshape(HWp, N_pad * Cp).astype(jnp.bfloat16)

    pt = jnp.asarray(np.pad(PT, ((0, 0), (0, HWp - HW))), jnp.bfloat16)
    g = jnp.asarray(G)

    grid = (N_pad // B_TILE,)
    inv = lambda a: pl.BlockSpec(a.shape, lambda t: (0,) * a.ndim)

    per_tile_flops = (2 * M1 * HWp * (B_TILE * Cp)
                      + 2 * M1 * (B_TILE * Cp) * (B_TILE * C1)
                      + 2 * (B_TILE * S2p) * (4 * C1) * C2
                      + 2 * B_TILE * (B_TILE * S2p) * C2
                      + 2 * B_TILE * C2 * NC_pad)
    flops = int(grid[0] * per_tile_flops)
    bytes_accessed = int(sum(int(np.prod(a.shape)) * a.dtype.itemsize
                             for a in (xt, pt, w1bd, sh1t, w2f, sh2r, g, wlf, blp))
                         + N_pad * NC_pad * 4)

    # The parameter inputs are grid-invariant (constant index maps), so they
    # are DMA'd once; their double-buffered VMEM footprint (~2 MiB at
    # B_TILE=16) is well within budget on every generation.  If the head is
    # scaled up they could be single-buffered via pipeline_mode=pl.Buffered(1).
    out = pl.pallas_call(
        _aux_head_kernel,
        out_shape=jax.ShapeDtypeStruct((N_pad, NC_pad), jnp.float32),
        grid_spec=pltpu.PrefetchScalarGridSpec(
            num_scalar_prefetch=0,
            grid=grid,
            in_specs=[
                pl.BlockSpec((HWp, B_TILE * Cp), lambda t: (0, t)),   # x
                inv(pt),                        # pooling + tap-select matrix
                inv(w1bd), inv(sh1t),           # conv1 (block-diag) + BN1 shift
                inv(w2f), inv(sh2r),            # conv2 (taps on K) + BN2 shift
                inv(g),                         # GAP row-selection matrix
                inv(wlf), inv(blp),             # classifier
            ],
            out_specs=pl.BlockSpec((B_TILE, NC_pad), lambda t: (t, 0)),
        ),
        compiler_params=pltpu.CompilerParams(
            dimension_semantics=("parallel",)),
        cost_estimate=pl.CostEstimate(flops=flops, transcendentals=0,
                                      bytes_accessed=bytes_accessed),
    )(xt, pt, w1bd, sh1t, w2f, sh2r, g, wlf, blp)

    return out[:N, :nc]


# -------------------------- parameter construction ---------------------------

def build_params(key, in_channels, num_classes):
    """Random parameters laid out like the PyTorch module's state."""
    ks = jax.random.split(key, 11)
    w1 = jax.random.normal(ks[0], (128, in_channels, 1, 1), jnp.float32) * 0.1
    g1 = 1.0 + 0.1 * jax.random.normal(ks[1], (128,), jnp.float32)
    be1 = 0.1 * jax.random.normal(ks[2], (128,), jnp.float32)
    m1 = 0.1 * jax.random.normal(ks[3], (128,), jnp.float32)
    v1 = jax.random.uniform(ks[4], (128,), jnp.float32, 0.5, 1.5)

    w2 = jax.random.normal(ks[5], (768, 128, 2, 2), jnp.float32) * 0.05
    g2 = 1.0 + 0.1 * jax.random.normal(ks[6], (768,), jnp.float32)
    be2 = 0.1 * jax.random.normal(ks[7], (768,), jnp.float32)
    m2 = 0.1 * jax.random.normal(ks[8], (768,), jnp.float32)
    v2 = jax.random.uniform(ks[9], (768,), jnp.float32, 0.5, 1.5)

    kl, kb = jax.random.split(ks[10])
    wl = jax.random.normal(kl, (num_classes, 768), jnp.float32) * 0.05
    bl = jax.random.normal(kb, (num_classes,), jnp.float32) * 0.1
    return (w1, g1, be1, m1, v1, w2, g2, be2, m2, v2, wl, bl)


# ---------------------------- pure-JAX reference ------------------------------

def ref_forward(x, raw_params):
    (w1, g1, be1, m1, v1, w2, g2, be2, m2, v2, wl, bl) = raw_params
    eps = 1e-5
    a1 = g1 / jnp.sqrt(v1 + eps); sh1 = be1 - m1 * a1
    a2 = g2 / jnp.sqrt(v2 + eps); sh2 = be2 - m2 * a2
    dn = ('NCHW', 'OIHW', 'NCHW')
    xr = jnp.maximum(x, 0.0)
    pooled = lax.reduce_window(xr, 0.0, lax.add,
                               (1, 1, 5, 5), (1, 1, 2, 2), 'VALID') / 25.0
    h1 = lax.conv_general_dilated(pooled, w1, (1, 1), 'VALID',
                                  dimension_numbers=dn)
    h1 = jnp.maximum(h1 * a1[None, :, None, None] + sh1[None, :, None, None], 0.0)
    h2 = lax.conv_general_dilated(h1, w2, (1, 1), 'VALID',
                                  dimension_numbers=dn)
    h2 = jnp.maximum(h2 * a2[None, :, None, None] + sh2[None, :, None, None], 0.0)
    gap = jnp.mean(h2, axis=(2, 3))
    return gap @ wl.T + bl[None, :]


# ---------------------------------- main --------------------------------------

if __name__ == "__main__":
    N, C, H, W = 2, 4, 16, 16
    num_classes = 10

    key = jax.random.PRNGKey(0)
    kx, kp = jax.random.split(key)
    x = jax.random.normal(kx, (N, C, H, W), jnp.float32)
    raw_params = build_params(kp, C, num_classes)

    out = jax.block_until_ready(aux_head_forward(x, raw_params))
    ref = jax.block_until_ready(ref_forward(x, raw_params))

    assert out.shape == (N, num_classes)
    # bf16 conv path with f32 accumulation -> bf16-appropriate tolerance.
    np.testing.assert_allclose(np.asarray(out), np.asarray(ref),
                               rtol=2e-2, atol=2e-2)
    print("KERNEL_OK")
</pallas_src>

<mosaic_0001>
module attributes {stable_mosaic.version = 11 : i64} {
  func.func @_aux_head_kernel(%arg0: i32, %arg1: memref<256x128xbf16, #tpu.memory_space<vmem>>, %arg2: memref<128x256xbf16, #tpu.memory_space<vmem>>, %arg3: memref<128x1024xbf16, #tpu.memory_space<vmem>>, %arg4: memref<1x1024xf32, #tpu.memory_space<vmem>>, %arg5: memref<512x768xbf16, #tpu.memory_space<vmem>>, %arg6: memref<1x768xf32, #tpu.memory_space<vmem>>, %arg7: memref<8x256xf32, #tpu.memory_space<vmem>>, %arg8: memref<768x128xf32, #tpu.memory_space<vmem>>, %arg9: memref<1x128xf32, #tpu.memory_space<vmem>>, %arg10: memref<8x128xf32, #tpu.memory_space<vmem>>) attributes {dimension_semantics = [#tpu.dimension_semantics<parallel>], iteration_bounds = array<i64: 1>, scalar_prefetch = 0 : i64, scratch_operands = 0 : i64, tpu.core_type = #tpu.core_type<tc>, window_params = [{transform_indices = @transform_0, window_bounds = array<i64: 256, 128>}, {pipeline_mode = #tpu.pipeline_mode<synchronous>, transform_indices = @transform_1, window_bounds = array<i64: 128, 256>}, {pipeline_mode = #tpu.pipeline_mode<synchronous>, transform_indices = @transform_2, window_bounds = array<i64: 128, 1024>}, {pipeline_mode = #tpu.pipeline_mode<synchronous>, transform_indices = @transform_3, window_bounds = array<i64: 1, 1024>}, {pipeline_mode = #tpu.pipeline_mode<synchronous>, transform_indices = @transform_4, window_bounds = array<i64: 512, 768>}, {pipeline_mode = #tpu.pipeline_mode<synchronous>, transform_indices = @transform_5, window_bounds = array<i64: 1, 768>}, {pipeline_mode = #tpu.pipeline_mode<synchronous>, transform_indices = @transform_6, window_bounds = array<i64: 8, 256>}, {pipeline_mode = #tpu.pipeline_mode<synchronous>, transform_indices = @transform_7, window_bounds = array<i64: 768, 128>}, {pipeline_mode = #tpu.pipeline_mode<synchronous>, transform_indices = @transform_8, window_bounds = array<i64: 1, 128>}, {transform_indices = @transform_9, window_bounds = array<i64: 8, 128>}]} {
    %c0 = arith.constant 0 : index
    %c0_0 = arith.constant 0 : index
    %0 = vector.load %arg1[%c0, %c0_0] : memref<256x128xbf16, #tpu.memory_space<vmem>>, vector<256x128xbf16>
    %cst = arith.constant 0.000000e+00 : bf16
    %1 = vector.broadcast %cst : bf16 to vector<256x128xbf16>
    %2 = arith.maximumf %0, %1 : vector<256x128xbf16>
    %c0_1 = arith.constant 0 : index
    %c0_2 = arith.constant 0 : index
    %3 = vector.load %arg2[%c0_1, %c0_2] : memref<128x256xbf16, #tpu.memory_space<vmem>>, vector<128x256xbf16>
    %cst_3 = arith.constant dense<0.000000e+00> : vector<128x128xf32>
    %4 = tpu.matmul %3, %2, %cst_3 {dimension_numbers = #tpu.dot_dimension_numbers<[1], [0], [0], [1], [0, 0, 1, 1], [], []>} : vector<128x256xbf16>, vector<256x128xbf16>, vector<128x128xf32> -> vector<128x128xf32>
    %5 = arith.truncf %4 : vector<128x128xf32> to vector<128x128xbf16>
    %c0_4 = arith.constant 0 : index
    %c0_5 = arith.constant 0 : index
    %6 = vector.load %arg3[%c0_4, %c0_5] : memref<128x1024xbf16, #tpu.memory_space<vmem>>, vector<128x1024xbf16>
    %cst_6 = arith.constant dense<0.000000e+00> : vector<128x1024xf32>
    %7 = tpu.matmul %5, %6, %cst_6 {dimension_numbers = #tpu.dot_dimension_numbers<[1], [0], [0], [1], [0, 0, 1, 1], [], []>} : vector<128x128xbf16>, vector<128x1024xbf16>, vector<128x1024xf32> -> vector<128x1024xf32>
    %c0_7 = arith.constant 0 : index
    %c0_8 = arith.constant 0 : index
    %8 = vector.load %arg4[%c0_7, %c0_8] : memref<1x1024xf32, #tpu.memory_space<vmem>>, vector<1x1024xf32>
    %9 = vector.broadcast %8 : vector<1x1024xf32> to vector<128x1024xf32>
    %10 = arith.addf %7, %9 : vector<128x1024xf32>
    %cst_9 = arith.constant 0.000000e+00 : f32
    %11 = vector.broadcast %cst_9 : f32 to vector<128x1024xf32>
    %12 = arith.maximumf %10, %11 : vector<128x1024xf32>
    %13 = vector.extract_strided_slice %12 {offsets = [0, 0], sizes = [32, 128], strides = [1, 1]} : vector<128x1024xf32> to vector<32x128xf32>
    %14 = vector.extract_strided_slice %12 {offsets = [32, 0], sizes = [32, 128], strides = [1, 1]} : vector<128x1024xf32> to vector<32x128xf32>
    %15 = vector.extract_strided_slice %12 {offsets = [64, 0], sizes = [32, 128], strides = [1, 1]} : vector<128x1024xf32> to vector<32x128xf32>
    %16 = vector.extract_strided_slice %12 {offsets = [96, 0], sizes = [32, 128], strides = [1, 1]} : vector<128x1024xf32> to vector<32x128xf32>
    %17 = tpu.concatenate %13, %14, %15, %16 in 1 : vector<32x128xf32>, vector<32x128xf32>, vector<32x128xf32>, vector<32x128xf32> -> vector<32x512xf32>
    %18 = vector.extract_strided_slice %12 {offsets = [0, 128], sizes = [32, 128], strides = [1, 1]} : vector<128x1024xf32> to vector<32x128xf32>
    %19 = vector.extract_strided_slice %12 {offsets = [32, 128], sizes = [32, 128], strides = [1, 1]} : vector<128x1024xf32> to vector<32x128xf32>
    %20 = vector.extract_strided_slice %12 {offsets = [64, 128], sizes = [32, 128], strides = [1, 1]} : vector<128x1024xf32> to vector<32x128xf32>
    %21 = vector.extract_strided_slice %12 {offsets = [96, 128], sizes = [32, 128], strides = [1, 1]} : vector<128x1024xf32> to vector<32x128xf32>
    %22 = tpu.concatenate %18, %19, %20, %21 in 1 : vector<32x128xf32>, vector<32x128xf32>, vector<32x128xf32>, vector<32x128xf32> -> vector<32x512xf32>
    %23 = vector.extract_strided_slice %12 {offsets = [0, 256], sizes = [32, 128], strides = [1, 1]} : vector<128x1024xf32> to vector<32x128xf32>
    %24 = vector.extract_strided_slice %12 {offsets = [32, 256], sizes = [32, 128], strides = [1, 1]} : vector<128x1024xf32> to vector<32x128xf32>
    %25 = vector.extract_strided_slice %12 {offsets = [64, 256], sizes = [32, 128], strides = [1, 1]} : vector<128x1024xf32> to vector<32x128xf32>
    %26 = vector.extract_strided_slice %12 {offsets = [96, 256], sizes = [32, 128], strides = [1, 1]} : vector<128x1024xf32> to vector<32x128xf32>
    %27 = tpu.concatenate %23, %24, %25, %26 in 1 : vector<32x128xf32>, vector<32x128xf32>, vector<32x128xf32>, vector<32x128xf32> -> vector<32x512xf32>
    %28 = vector.extract_strided_slice %12 {offsets = [0, 384], sizes = [32, 128], strides = [1, 1]} : vector<128x1024xf32> to vector<32x128xf32>
    %29 = vector.extract_strided_slice %12 {offsets = [32, 384], sizes = [32, 128], strides = [1, 1]} : vector<128x1024xf32> to vector<32x128xf32>
    %30 = vector.extract_strided_slice %12 {offsets = [64, 384], sizes = [32, 128], strides = [1, 1]} : vector<128x1024xf32> to vector<32x128xf32>
    %31 = vector.extract_strided_slice %12 {offsets = [96, 384], sizes = [32, 128], strides = [1, 1]} : vector<128x1024xf32> to vector<32x128xf32>
    %32 = tpu.concatenate %28, %29, %30, %31 in 1 : vector<32x128xf32>, vector<32x128xf32>, vector<32x128xf32>, vector<32x128xf32> -> vector<32x512xf32>
    %33 = vector.extract_strided_slice %12 {offsets = [0, 512], sizes = [32, 128], strides = [1, 1]} : vector<128x1024xf32> to vector<32x128xf32>
    %34 = vector.extract_strided_slice %12 {offsets = [32, 512], sizes = [32, 128], strides = [1, 1]} : vector<128x1024xf32> to vector<32x128xf32>
    %35 = vector.extract_strided_slice %12 {offsets = [64, 512], sizes = [32, 128], strides = [1, 1]} : vector<128x1024xf32> to vector<32x128xf32>
    %36 = vector.extract_strided_slice %12 {offsets = [96, 512], sizes = [32, 128], strides = [1, 1]} : vector<128x1024xf32> to vector<32x128xf32>
    %37 = tpu.concatenate %33, %34, %35, %36 in 1 : vector<32x128xf32>, vector<32x128xf32>, vector<32x128xf32>, vector<32x128xf32> -> vector<32x512xf32>
    %38 = vector.extract_strided_slice %12 {offsets = [0, 640], sizes = [32, 128], strides = [1, 1]} : vector<128x1024xf32> to vector<32x128xf32>
    %39 = vector.extract_strided_slice %12 {offsets = [32, 640], sizes = [32, 128], strides = [1, 1]} : vector<128x1024xf32> to vector<32x128xf32>
    %40 = vector.extract_strided_slice %12 {offsets = [64, 640], sizes = [32, 128], strides = [1, 1]} : vector<128x1024xf32> to vector<32x128xf32>
    %41 = vector.extract_strided_slice %12 {offsets = [96, 640], sizes = [32, 128], strides = [1, 1]} : vector<128x1024xf32> to vector<32x128xf32>
    %42 = tpu.concatenate %38, %39, %40, %41 in 1 : vector<32x128xf32>, vector<32x128xf32>, vector<32x128xf32>, vector<32x128xf32> -> vector<32x512xf32>
    %43 = vector.extract_strided_slice %12 {offsets = [0, 768], sizes = [32, 128], strides = [1, 1]} : vector<128x1024xf32> to vector<32x128xf32>
    %44 = vector.extract_strided_slice %12 {offsets = [32, 768], sizes = [32, 128], strides = [1, 1]} : vector<128x1024xf32> to vector<32x128xf32>
    %45 = vector.extract_strided_slice %12 {offsets = [64, 768], sizes = [32, 128], strides = [1, 1]} : vector<128x1024xf32> to vector<32x128xf32>
    %46 = vector.extract_strided_slice %12 {offsets = [96, 768], sizes = [32, 128], strides = [1, 1]} : vector<128x1024xf32> to vector<32x128xf32>
    %47 = tpu.concatenate %43, %44, %45, %46 in 1 : vector<32x128xf32>, vector<32x128xf32>, vector<32x128xf32>, vector<32x128xf32> -> vector<32x512xf32>
    %48 = vector.extract_strided_slice %12 {offsets = [0, 896], sizes = [32, 128], strides = [1, 1]} : vector<128x1024xf32> to vector<32x128xf32>
    %49 = vector.extract_strided_slice %12 {offsets = [32, 896], sizes = [32, 128], strides = [1, 1]} : vector<128x1024xf32> to vector<32x128xf32>
    %50 = vector.extract_strided_slice %12 {offsets = [64, 896], sizes = [32, 128], strides = [1, 1]} : vector<128x1024xf32> to vector<32x128xf32>
    %51 = vector.extract_strided_slice %12 {offsets = [96, 896], sizes = [32, 128], strides = [1, 1]} : vector<128x1024xf32> to vector<32x128xf32>
    %52 = tpu.concatenate %48, %49, %50, %51 in 1 : vector<32x128xf32>, vector<32x128xf32>, vector<32x128xf32>, vector<32x128xf32> -> vector<32x512xf32>
    %53 = tpu.concatenate %17, %22, %27, %32, %37, %42, %47, %52 in 0 : vector<32x512xf32>, vector<32x512xf32>, vector<32x512xf32>, vector<32x512xf32>, vector<32x512xf32>, vector<32x512xf32>, vector<32x512xf32>, vector<32x512xf32> -> vector<256x512xf32>
    %54 = arith.truncf %53 : vector<256x512xf32> to vector<256x512xbf16>
    %c0_10 = arith.constant 0 : index
    %c0_11 = arith.constant 0 : index
    %55 = vector.load %arg5[%c0_10, %c0_11] : memref<512x768xbf16, #tpu.memory_space<vmem>>, vector<512x768xbf16>
    %cst_12 = arith.constant dense<0.000000e+00> : vector<256x768xf32>
    %56 = tpu.matmul %54, %55, %cst_12 {dimension_numbers = #tpu.dot_dimension_numbers<[1], [0], [0], [1], [0, 0, 1, 1], [], []>} : vector<256x512xbf16>, vector<512x768xbf16>, vector<256x768xf32> -> vector<256x768xf32>
    %c0_13 = arith.constant 0 : index
    %c0_14 = arith.constant 0 : index
    %57 = vector.load %arg6[%c0_13, %c0_14] : memref<1x768xf32, #tpu.memory_space<vmem>>, vector<1x768xf32>
    %58 = vector.broadcast %57 : vector<1x768xf32> to vector<256x768xf32>
    %59 = arith.addf %56, %58 : vector<256x768xf32>
    %cst_15 = arith.constant 0.000000e+00 : f32
    %60 = vector.broadcast %cst_15 : f32 to vector<256x768xf32>
    %61 = arith.maximumf %59, %60 : vector<256x768xf32>
    %c0_16 = arith.constant 0 : index
    %c0_17 = arith.constant 0 : index
    %62 = vector.load %arg7[%c0_16, %c0_17] : memref<8x256xf32, #tpu.memory_space<vmem>>, vector<8x256xf32>
    %cst_18 = arith.constant dense<0.000000e+00> : vector<8x768xf32>
    %63 = tpu.matmul %62, %61, %cst_18 {dimension_numbers = #tpu.dot_dimension_numbers<[1], [0], [0], [1], [0, 0, 1, 1], [], []>} : vector<8x256xf32>, vector<256x768xf32>, vector<8x768xf32> -> vector<8x768xf32>
    %c0_19 = arith.constant 0 : index
    %c0_20 = arith.constant 0 : index
    %64 = vector.load %arg8[%c0_19, %c0_20] : memref<768x128xf32, #tpu.memory_space<vmem>>, vector<768x128xf32>
    %cst_21 = arith.constant dense<0.000000e+00> : vector<8x128xf32>
    %65 = tpu.matmul %63, %64, %cst_21 {dimension_numbers = #tpu.dot_dimension_numbers<[1], [0], [0], [1], [0, 0, 1, 1], [], []>} : vector<8x768xf32>, vector<768x128xf32>, vector<8x128xf32> -> vector<8x128xf32>
    %c0_22 = arith.constant 0 : index
    %c0_23 = arith.constant 0 : index
    %66 = vector.load %arg9[%c0_22, %c0_23] : memref<1x128xf32, #tpu.memory_space<vmem>>, vector<1x128xf32>
    %67 = vector.broadcast %66 : vector<1x128xf32> to vector<8x128xf32>
    %68 = arith.addf %65, %67 : vector<8x128xf32>
    %c0_24 = arith.constant 0 : index
    %c0_25 = arith.constant 0 : index
    %69 = vector.load %arg10[%c0_24, %c0_25] : memref<8x128xf32, #tpu.memory_space<vmem>>, vector<8x128xf32>
    tpu.vector_store %arg10[%c0_24, %c0_25], %68 {strides = array<i32>} : memref<8x128xf32, #tpu.memory_space<vmem>>, vector<8x128xf32>,
    return
  }
  func.func @transform_0(%arg0: i32) -> (i32, i32) {
    %c0_i32 = arith.constant 0 : i32
    %c0_i32_0 = arith.constant 0 : i32
    return %c0_i32, %arg0 : i32, i32
  }
  func.func @transform_1(%arg0: i32) -> (i32, i32) {
    %c0_i32 = arith.constant 0 : i32
    %c0_i32_0 = arith.constant 0 : i32
    %c0_i32_1 = arith.constant 0 : i32
    return %c0_i32, %c0_i32_0 : i32, i32
  }
  func.func @transform_2(%arg0: i32) -> (i32, i32) {
    %c0_i32 = arith.constant 0 : i32
    %c0_i32_0 = arith.constant 0 : i32
    %c0_i32_1 = arith.constant 0 : i32
    return %c0_i32, %c0_i32_0 : i32, i32
  }
  func.func @transform_3(%arg0: i32) -> (i32, i32) {
    %c0_i32 = arith.constant 0 : i32
    %c0_i32_0 = arith.constant 0 : i32
    %c0_i32_1 = arith.constant 0 : i32
    return %c0_i32, %c0_i32_0 : i32, i32
  }
  func.func @transform_4(%arg0: i32) -> (i32, i32) {
    %c0_i32 = arith.constant 0 : i32
    %c0_i32_0 = arith.constant 0 : i32
    %c0_i32_1 = arith.constant 0 : i32
    return %c0_i32, %c0_i32_0 : i32, i32
  }
  func.func @transform_5(%arg0: i32) -> (i32, i32) {
    %c0_i32 = arith.constant 0 : i32
    %c0_i32_0 = arith.constant 0 : i32
    %c0_i32_1 = arith.constant 0 : i32
    return %c0_i32, %c0_i32_0 : i32, i32
  }
  func.func @transform_6(%arg0: i32) -> (i32, i32) {
    %c0_i32 = arith.constant 0 : i32
    %c0_i32_0 = arith.constant 0 : i32
    %c0_i32_1 = arith.constant 0 : i32
    return %c0_i32, %c0_i32_0 : i32, i32
  }
  func.func @transform_7(%arg0: i32) -> (i32, i32) {
    %c0_i32 = arith.constant 0 : i32
    %c0_i32_0 = arith.constant 0 : i32
    %c0_i32_1 = arith.constant 0 : i32
    return %c0_i32, %c0_i32_0 : i32, i32
  }
  func.func @transform_8(%arg0: i32) -> (i32, i32) {
    %c0_i32 = arith.constant 0 : i32
    %c0_i32_0 = arith.constant 0 : i32
    %c0_i32_1 = arith.constant 0 : i32
    return %c0_i32, %c0_i32_0 : i32, i32
  }
  func.func @transform_9(%arg0: i32) -> (i32, i32) {
    %c0_i32 = arith.constant 0 : i32
    %c0_i32_0 = arith.constant 0 : i32
    return %arg0, %c0_i32 : i32, i32
  }
}

</mosaic_0001>

<llo_original>
// kernel: tpu_custom_call.1
$region0: #{tpu_custom_call.1}
  #allocation0 [shape = 'u32[]', space=smem, size = 0x4, offset = 0x4, fixed_abs, tag = 'smem constant byte address 0x4 - core index']
  #allocation1 [shape = 'u32[144,128]{1,0:T(1,128)}', space=vmem, size = 0x12000, scoped, tag = 'internal scratch']
  %s0 = inlined_call_operand.hbm [shape: bf16[256,128], index: 0, kind: input, shape index: {}]
  %s1 = inlined_call_operand.hbm [shape: bf16[128,256], index: 1, kind: input, shape index: {}]
  %s2 = inlined_call_operand.hbm [shape: bf16[128,1024], index: 2, kind: input, shape index: {}]
  %s3 = inlined_call_operand.hbm [shape: f32[1,1024], index: 3, kind: input, shape index: {}]
  %s4 = inlined_call_operand.hbm [shape: bf16[512,768], index: 4, kind: input, shape index: {}]
  %s5 = inlined_call_operand.vmem [shape: f32[1,768], index: 5, kind: input, shape index: {}]
  %s6 = inlined_call_operand.hbm [shape: f32[8,256], index: 6, kind: input, shape index: {}]
  %s7 = inlined_call_operand.hbm [shape: f32[768,128], index: 7, kind: input, shape index: {}]
  %s8 = inlined_call_operand.vmem [shape: f32[1,128], index: 8, kind: input, shape index: {}]
  %s9 = inlined_call_operand.hbm [shape: f32[8,128], index: 9, kind: output, shape index: {}]
  %s10 = sld [smem:[#allocation0]]
  $region74: #{tpu_custom_call.1} parent=0
    _
  %s12 = ssub.s32 1, %s10
  %s13 = scalar_select 0, %s12, %s10
  $region1: #{tpu_custom_call.1} parent=0
    #allocation2 [shape = 'u8[65536]{0}', space=vmem, size = 0x10000, scoped, tag = 'input window, operand 0, single buffered']
    #allocation3 [shape = 's32[1]{0}', space=sflag, size = 0x4, scoped, tag = 'scoped memory for tpu_custom_call.1']
    #allocation4 [shape = 's32[1]{0}', space=sflag, size = 0x4, scoped, tag = 'scoped memory for tpu_custom_call.1']
    #allocation5 [shape = 'u8[65536]{0}', space=vmem, size = 0x10000, scoped, tag = 'input window, operand 1, single buffered']
    #allocation6 [shape = 's32[1]{0}', space=sflag, size = 0x4, scoped, tag = 'scoped memory for tpu_custom_call.1']
    #allocation7 [shape = 'u8[262144]{0}', space=vmem, size = 0x40000, scoped, tag = 'input window, operand 2, single buffered']
    #allocation8 [shape = 'u8[4096]{0}', space=vmem, size = 0x1000, scoped, tag = 'input window, operand 3, single buffered']
    #allocation9 [shape = 's32[1]{0}', space=sflag, size = 0x4, scoped, tag = 'scoped memory for tpu_custom_call.1']
    #allocation10 [shape = 'u8[786432]{0}', space=vmem, size = 0xc0000, scoped, tag = 'input window, operand 4, single buffered']
    #allocation11 [shape = 'u8[8192]{0}', space=vmem, size = 0x2000, scoped, tag = 'input window, operand 6, single buffered']
    #allocation12 [shape = 's32[1]{0}', space=sflag, size = 0x4, scoped, tag = 'scoped memory for tpu_custom_call.1']
    #allocation13 [shape = 'u8[393216]{0}', space=vmem, size = 0x60000, scoped, tag = 'input window, operand 7, single buffered']
    #allocation14 [shape = 'u8[4096]{0}', space=vmem, size = 0x1000, scoped, tag = 'output window, operand 0, single buffered']
    %14 = vsyncpa [#allocation3], 0
    %15 = vsyncpa [#allocation6], 0
    %16 = vsyncpa [#allocation9], 0
    %17 = vsyncpa [#allocation12], 0
    %18 = vsyncpa [#allocation4], 0
    // Predicated region
    $region2: #{tpu_custom_call.1} parent=1 // pred_check
      _
    $region3: #{tpu_custom_call.1} parent=1 // pred_check_branch
      %20 = sbr.rel (0) target = $region5
    $region4: #{tpu_custom_call.1} parent=1 // pred_region
      %s22 = ssub.s32 2048, 2048
      %23 = vsyncadd [#allocation3], %s22
      %s24 = sshll.u32 [#allocation2], 4
      %s25 = int_to_ptr.vmem [resolvable:$true] %s24
      %30 = dma.hbm_to_vmem [thread:$0]  %s0, 2048, %s25, [#allocation3], 64, 64, 4
    $region5: #{tpu_custom_call.1} parent=1 // pred_fallthru
      _
    // Predicated region
    $region6: #{tpu_custom_call.1} parent=1 // pred_check
      _
    $region7: #{tpu_custom_call.1} parent=1 // pred_check_branch
      %32 = sbr.rel (0) target = $region9
    $region8: #{tpu_custom_call.1} parent=1 // pred_region
      %s34 = ssub.s32 2048, 2048
      %35 = vsyncadd [#allocation6], %s34
      %s36 = sshll.u32 [#allocation5], 4
      %s37 = int_to_ptr.vmem [resolvable:$true] %s36
      %42 = dma.hbm_to_vmem [thread:$0]  %s1, 2048, %s37, [#allocation6], 128, 128, 8
    $region9: #{tpu_custom_call.1} parent=1 // pred_fallthru
      _
    // Predicated region
    $region10: #{tpu_custom_call.1} parent=1 // pred_check
      _
    $region11: #{tpu_custom_call.1} parent=1 // pred_check_branch
      %44 = sbr.rel (0) target = $region13
    $region12: #{tpu_custom_call.1} parent=1 // pred_region
      %s46 = ssub.s32 8192, 8192
      %47 = vsyncadd [#allocation6], %s46
      %s48 = sshll.u32 [#allocation7], 4
      %s49 = int_to_ptr.vmem [resolvable:$true] %s48
      %54 = dma.hbm_to_vmem [thread:$0]  %s2, 8192, %s49, [#allocation6], 512, 512, 32
    $region13: #{tpu_custom_call.1} parent=1 // pred_fallthru
      _
    // Predicated region
    $region14: #{tpu_custom_call.1} parent=1 // pred_check
      _
    $region15: #{tpu_custom_call.1} parent=1 // pred_check_branch
      %56 = sbr.rel (0) target = $region17
    $region16: #{tpu_custom_call.1} parent=1 // pred_region
      %s58 = ssub.s32 128, 128
      %59 = vsyncadd [#allocation9], %s58
      %s61 = sshll.u32 [#allocation8], 4
      %s62 = int_to_ptr.vmem [resolvable:$true] %s61
      %64 = dma.hbm_to_vmem [thread:$0]  %s3, 128, %s62, [#allocation9]
    $region17: #{tpu_custom_call.1} parent=1 // pred_fallthru
      _
    // Predicated region
    $region18: #{tpu_custom_call.1} parent=1 // pred_check
      _
    $region19: #{tpu_custom_call.1} parent=1 // pred_check_branch
      %66 = sbr.rel (0) target = $region21
    $region20: #{tpu_custom_call.1} parent=1 // pred_region
      %s68 = ssub.s32 24576, 24576
      %69 = vsyncadd [#allocation9], %s68
      %s70 = sshll.u32 [#allocation10], 4
      %s71 = int_to_ptr.vmem [resolvable:$true] %s70
      %76 = dma.hbm_to_vmem [thread:$0]  %s4, 24576, %s71, [#allocation9], 384, 384, 24
    $region21: #{tpu_custom_call.1} parent=1 // pred_fallthru
      _
    // Predicated region
    $region22: #{tpu_custom_call.1} parent=1 // pred_check
      _
    $region23: #{tpu_custom_call.1} parent=1 // pred_check_branch
      %78 = sbr.rel (0) target = $region25
    $region24: #{tpu_custom_call.1} parent=1 // pred_region
      _
    $region25: #{tpu_custom_call.1} parent=1 // pred_fallthru
      _
    // Predicated region
    $region26: #{tpu_custom_call.1} parent=1 // pred_check
      _
    $region27: #{tpu_custom_call.1} parent=1 // pred_check_branch
      %80 = sbr.rel (0) target = $region29
    $region28: #{tpu_custom_call.1} parent=1 // pred_region
      %s82 = ssub.s32 256, 256
      %83 = vsyncadd [#allocation12], %s82
      %s85 = sshll.u32 [#allocation11], 4
      %s86 = int_to_ptr.vmem [resolvable:$true] %s85
      %88 = dma.hbm_to_vmem [thread:$0]  %s6, 256, %s86, [#allocation12]
    $region29: #{tpu_custom_call.1} parent=1 // pred_fallthru
      _
    // Predicated region
    $region30: #{tpu_custom_call.1} parent=1 // pred_check
      _
    $region31: #{tpu_custom_call.1} parent=1 // pred_check_branch
      %90 = sbr.rel (0) target = $region33
    $region32: #{tpu_custom_call.1} parent=1 // pred_region
      %s92 = ssub.s32 12288, 12288
      %93 = vsyncadd [#allocation12], %s92
      %s94 = sshll.u32 [#allocation13], 4
      %s95 = int_to_ptr.vmem [resolvable:$true] %s94
      %100 = dma.hbm_to_vmem [thread:$0]  %s7, 12288, %s95, [#allocation12], 128, 128, 8
    $region33: #{tpu_custom_call.1} parent=1 // pred_fallthru
      _
    // Predicated region
    $region34: #{tpu_custom_call.1} parent=1 // pred_check
      _
    $region35: #{tpu_custom_call.1} parent=1 // pred_check_branch
      %102 = sbr.rel (0) target = $region37
    $region36: #{tpu_custom_call.1} parent=1 // pred_region
      _
    $region37: #{tpu_custom_call.1} parent=1 // pred_fallthru
      _
    // Predicated region
    $region38: #{tpu_custom_call.1} parent=1 // pred_check
      _
    $region39: #{tpu_custom_call.1} parent=1 // pred_check_branch
      %104 = sbr.rel (0) target = $region41
    $region40: #{tpu_custom_call.1} parent=1 // pred_region
      %105 = dma.done [#allocation3], 2048
    $region41: #{tpu_custom_call.1} parent=1 // pred_fallthru
      _
    // Predicated region
    $region42: #{tpu_custom_call.1} parent=1 // pred_check
      _
    $region43: #{tpu_custom_call.1} parent=1 // pred_check_branch
      %107 = sbr.rel (0) target = $region45
    $region44: #{tpu_custom_call.1} parent=1 // pred_region
      %108 = dma.done [#allocation6], 2048
    $region45: #{tpu_custom_call.1} parent=1 // pred_fallthru
      _
    // Predicated region
    $region46: #{tpu_custom_call.1} parent=1 // pred_check
      _
    $region47: #{tpu_custom_call.1} parent=1 // pred_check_branch
      %110 = sbr.rel (0) target = $region49
    $region48: #{tpu_custom_call.1} parent=1 // pred_region
      %111 = dma.done [#allocation6], 8192
    $region49: #{tpu_custom_call.1} parent=1 // pred_fallthru
      _
    // Predicated region
    $region50: #{tpu_custom_call.1} parent=1 // pred_check
      _
    $region51: #{tpu_custom_call.1} parent=1 // pred_check_branch
      %113 = sbr.rel (0) target = $region53
    $region52: #{tpu_custom_call.1} parent=1 // pred_region
      %114 = dma.done [#allocation9], 128
    $region53: #{tpu_custom_call.1} parent=1 // pred_fallthru
      _
    // Predicated region
    $region54: #{tpu_custom_call.1} parent=1 // pred_check
      _
    $region55: #{tpu_custom_call.1} parent=1 // pred_check_branch
      %116 = sbr.rel (0) target = $region57
    $region56: #{tpu_custom_call.1} parent=1 // pred_region
      %117 = dma.done [#allocation9], 24576
    $region57: #{tpu_custom_call.1} parent=1 // pred_fallthru
      _
    // Predicated region
    $region58: #{tpu_custom_call.1} parent=1 // pred_check
      _
    $region59: #{tpu_custom_call.1} parent=1 // pred_check_branch
      %119 = sbr.rel (0) target = $region61
    $region60: #{tpu_custom_call.1} parent=1 // pred_region
      %120 = dma.done [#allocation12], 256
    $region61: #{tpu_custom_call.1} parent=1 // pred_fallthru
      _
    // Predicated region
    $region62: #{tpu_custom_call.1} parent=1 // pred_check
      _
    $region63: #{tpu_custom_call.1} parent=1 // pred_check_branch
      %122 = sbr.rel (0) target = $region65
    $region64: #{tpu_custom_call.1} parent=1 // pred_region
      %123 = dma.done [#allocation12], 12288
    $region65: #{tpu_custom_call.1} parent=1 // pred_fallthru
      _
    %v125 = vld [vmem:[#allocation2] sm:$0xf]
    %v126 = vld [vmem:[#allocation2 + $0x4] sm:$0xf]
    %v127 = vld [vmem:[#allocation2 + $0x8] sm:$0xf]
    %v128 = vld [vmem:[#allocation2 + $0xc] sm:$0xf]
    %v129 = vld [vmem:[#allocation2 + $0x10] sm:$0xf]
    %v130 = vld [vmem:[#allocation2 + $0x14] sm:$0xf]
    %v131 = vld [vmem:[#allocation2 + $0x18] sm:$0xf]
    %v132 = vld [vmem:[#allocation2 + $0x1c] sm:$0xf]
    %v133 = vld [vmem:[#allocation2 + $0x20] sm:$0xf]
    %v134 = vld [vmem:[#allocation2 + $0x24] sm:$0xf]
    %v135 = vld [vmem:[#allocation2 + $0x28] sm:$0xf]
    %v136 = vld [vmem:[#allocation2 + $0x2c] sm:$0xf]
    %v137 = vld [vmem:[#allocation2 + $0x30] sm:$0xf]
    %v138 = vld [vmem:[#allocation2 + $0x34] sm:$0xf]
    %v139 = vld [vmem:[#allocation2 + $0x38] sm:$0xf]
    %v140 = vld [vmem:[#allocation2 + $0x3c] sm:$0xf]
    %v141 = vld [vmem:[#allocation2 + $0x40] sm:$0xf]
    %v142 = vld [vmem:[#allocation2 + $0x44] sm:$0xf]
    %v143 = vld [vmem:[#allocation2 + $0x48] sm:$0xf]
    %v144 = vld [vmem:[#allocation2 + $0x4c] sm:$0xf]
    %v145 = vld [vmem:[#allocation2 + $0x50] sm:$0xf]
    %v146 = vld [vmem:[#allocation2 + $0x54] sm:$0xf]
    %v147 = vld [vmem:[#allocation2 + $0x58] sm:$0xf]
    %v148 = vld [vmem:[#allocation2 + $0x5c] sm:$0xf]
    %v149 = vld [vmem:[#allocation2 + $0x60] sm:$0xf]
    %v150 = vld [vmem:[#allocation2 + $0x64] sm:$0xf]
    %v151 = vld [vmem:[#allocation2 + $0x68] sm:$0xf]
    %v152 = vld [vmem:[#allocation2 + $0x6c] sm:$0xf]
    %v153 = vld [vmem:[#allocation2 + $0x70] sm:$0xf]
    %v154 = vld [vmem:[#allocation2 + $0x74] sm:$0xf]
    %v155 = vld [vmem:[#allocation2 + $0x78] sm:$0xf]
    %v156 = vld [vmem:[#allocation2 + $0x7c] sm:$0xf]
    %v157 = vmax.bf16 %v125, 0
    %v158 = vmax.bf16 %v126, 0
    %v159 = vmax.bf16 %v127, 0
    %v160 = vmax.bf16 %v128, 0
    %v161 = vmax.bf16 %v129, 0
    %v162 = vmax.bf16 %v130, 0
    %v163 = vmax.bf16 %v131, 0
    %v164 = vmax.bf16 %v132, 0
    %v165 = vmax.bf16 %v133, 0
    %v166 = vmax.bf16 %v134, 0
    %v167 = vmax.bf16 %v135, 0
    %v168 = vmax.bf16 %v136, 0
    %v169 = vmax.bf16 %v137, 0
    %v170 = vmax.bf16 %v138, 0
    %v171 = vmax.bf16 %v139, 0
    %v172 = vmax.bf16 %v140, 0
    %v173 = vmax.bf16 %v141, 0
    %v174 = vmax.bf16 %v142, 0
    %v175 = vmax.bf16 %v143, 0
    %v176 = vmax.bf16 %v144, 0
    %v177 = vmax.bf16 %v145, 0
    %v178 = vmax.bf16 %v146, 0
    %v179 = vmax.bf16 %v147, 0
    %v180 = vmax.bf16 %v148, 0
    %v181 = vmax.bf16 %v149, 0
    %v182 = vmax.bf16 %v150, 0
    %v183 = vmax.bf16 %v151, 0
    %v184 = vmax.bf16 %v152, 0
    %v185 = vmax.bf16 %v153, 0
    %v186 = vmax.bf16 %v154, 0
    %v187 = vmax.bf16 %v155, 0
    %v188 = vmax.bf16 %v156, 0
    %v189 = vld [vmem:[#allocation5] sm:$0xff]
    %v190 = vld [vmem:[#allocation5 + $0x8] sm:$0xff]
    %v191 = vld [vmem:[#allocation5 + $0x10] sm:$0xff]
    %v192 = vld [vmem:[#allocation5 + $0x18] sm:$0xff]
    %v193 = vld [vmem:[#allocation5 + $0x20] sm:$0xff]
    %v194 = vld [vmem:[#allocation5 + $0x28] sm:$0xff]
    %v195 = vld [vmem:[#allocation5 + $0x30] sm:$0xff]
    %v196 = vld [vmem:[#allocation5 + $0x38] sm:$0xff]
    %v197 = vld [vmem:[#allocation5 + $0x40] sm:$0xff]
    %v198 = vld [vmem:[#allocation5 + $0x48] sm:$0xff]
    %v199 = vld [vmem:[#allocation5 + $0x50] sm:$0xff]
    %v200 = vld [vmem:[#allocation5 + $0x58] sm:$0xff]
    %v201 = vld [vmem:[#allocation5 + $0x60] sm:$0xff]
    %v202 = vld [vmem:[#allocation5 + $0x68] sm:$0xff]
    %v203 = vld [vmem:[#allocation5 + $0x70] sm:$0xff]
    %v204 = vld [vmem:[#allocation5 + $0x78] sm:$0xff]
    %v221 = vunpack.c.l.b16 %v189
    %v222 = vunpack.c.h.b16 %v189
    %v223 = vunpack.c.l.b16 %v190
    %v224 = vunpack.c.h.b16 %v190
    %v225 = vunpack.c.l.b16 %v191
    %v226 = vunpack.c.h.b16 %v191
    %v227 = vunpack.c.l.b16 %v192
    %v228 = vunpack.c.h.b16 %v192
    %v229 = vunpack.c.l.b16 %v193
    %v230 = vunpack.c.h.b16 %v193
    %v231 = vunpack.c.l.b16 %v194
    %v232 = vunpack.c.h.b16 %v194
    %v233 = vunpack.c.l.b16 %v195
    %v234 = vunpack.c.h.b16 %v195
    %v235 = vunpack.c.l.b16 %v196
    %v236 = vunpack.c.h.b16 %v196
    %v237 = vunpack.c.l.b16 %v197
    %v238 = vunpack.c.h.b16 %v197
    %v239 = vunpack.c.l.b16 %v198
    %v240 = vunpack.c.h.b16 %v198
    %v241 = vunpack.c.l.b16 %v199
    %v242 = vunpack.c.h.b16 %v199
    %v243 = vunpack.c.l.b16 %v200
    %v244 = vunpack.c.h.b16 %v200
    %v245 = vunpack.c.l.b16 %v201
    %v246 = vunpack.c.h.b16 %v201
    %v247 = vunpack.c.l.b16 %v202
    %v248 = vunpack.c.h.b16 %v202
    %v249 = vunpack.c.l.b16 %v203
    %v250 = vunpack.c.h.b16 %v203
    %v251 = vunpack.c.l.b16 %v204
    %v252 = vunpack.c.h.b16 %v204
    %v253 = vpack.c.b16 %v223, %v221
    %v254 = vpack.c.b16 %v224, %v222
    %v255 = vpack.c.b16 %v227, %v225
    %v256 = vpack.c.b16 %v228, %v226
    %v257 = vpack.c.b16 %v231, %v229
    %v258 = vpack.c.b16 %v232, %v230
    %v259 = vpack.c.b16 %v235, %v233
    %v260 = vpack.c.b16 %v236, %v234
    %v261 = vpack.c.b16 %v239, %v237
    %v262 = vpack.c.b16 %v240, %v238
    %v263 = vpack.c.b16 %v243, %v241
    %v264 = vpack.c.b16 %v244, %v242
    %v265 = vpack.c.b16 %v247, %v245
    %v266 = vpack.c.b16 %v248, %v246
    %v267 = vpack.c.b16 %v251, %v249
    %v268 = vpack.c.b16 %v252, %v250
    %v317 = vunpack.c.l.b16 %v157
    %v318 = vunpack.c.l.b16 %v158
    %v319 = vunpack.c.l.b16 %v159
    %v320 = vunpack.c.l.b16 %v160
    %v321 = vunpack.c.l.b16 %v161
    %v322 = vunpack.c.l.b16 %v162
    %v323 = vunpack.c.l.b16 %v163
    %v324 = vunpack.c.l.b16 %v164
    %v325 = vunpack.c.l.b16 %v165
    %v326 = vunpack.c.l.b16 %v166
    %v327 = vunpack.c.l.b16 %v167
    %v328 = vunpack.c.l.b16 %v168
    %v329 = vunpack.c.l.b16 %v169
    %v330 = vunpack.c.l.b16 %v170
    %v331 = vunpack.c.l.b16 %v171
    %v332 = vunpack.c.l.b16 %v172
    %v333 = vunpack.c.l.b16 %v173
    %v334 = vunpack.c.l.b16 %v174
    %v335 = vunpack.c.l.b16 %v175
    %v336 = vunpack.c.l.b16 %v176
    %v337 = vunpack.c.l.b16 %v177
    %v338 = vunpack.c.l.b16 %v178
    %v339 = vunpack.c.l.b16 %v179
    %v340 = vunpack.c.l.b16 %v180
    %v341 = vunpack.c.l.b16 %v181
    %v342 = vunpack.c.l.b16 %v182
    %v343 = vunpack.c.l.b16 %v183
    %v344 = vunpack.c.l.b16 %v184
    %v345 = vunpack.c.l.b16 %v185
    %v346 = vunpack.c.l.b16 %v186
    %v347 = vunpack.c.l.b16 %v187
    %v348 = vunpack.c.l.b16 %v188
    %v349 = vpack.c.b16 %v318, %v317
    %v350 = vpack.c.b16 %v320, %v319
    %v351 = vpack.c.b16 %v322, %v321
    %v352 = vpack.c.b16 %v324, %v323
    %v353 = vpack.c.b16 %v326, %v325
    %v354 = vpack.c.b16 %v328, %v327
    %v355 = vpack.c.b16 %v330, %v329
    %v356 = vpack.c.b16 %v332, %v331
    %v357 = vpack.c.b16 %v334, %v333
    %v358 = vpack.c.b16 %v336, %v335
    %v359 = vpack.c.b16 %v338, %v337
    %v360 = vpack.c.b16 %v340, %v339
    %v361 = vpack.c.b16 %v342, %v341
    %v362 = vpack.c.b16 %v344, %v343
    %v363 = vpack.c.b16 %v346, %v345
    %v364 = vpack.c.b16 %v348, %v347
    %381 = vmatprep.subr.bf16.mxu0 0
    %382 = vmatpush1.bf16.msra.mxu0 %v356
    %383 = vmatprep.subr.bf16.mxu0 0
    %384 = vmatpush1.bf16.msra.mxu0 %v355
    %385 = vmatprep.subr.bf16.mxu0 0
    %386 = vmatpush1.bf16.msra.mxu0 %v354
    %387 = vmatprep.subr.bf16.mxu0 0
    %388 = vmatpush1.bf16.msra.mxu0 %v353
    %389 = vmatprep.subr.bf16.mxu0 0
    %390 = vmatpush1.bf16.msra.mxu0 %v352
    %391 = vmatprep.subr.bf16.mxu0 0
    %392 = vmatpush1.bf16.msra.mxu0 %v351
    %393 = vmatprep.subr.bf16.mxu0 0
    %394 = vmatpush1.bf16.msra.mxu0 %v350
    %395 = vmatprep.subr.bf16.mxu0 0
    %396 = vmatpush1.bf16.msra.mxu0 %v349
    %397 = vmatprep.subr.bf16.mxu0 0
    %398 = vmatpush2.bf16.msra.mxu0 %v364
    %399 = vmatprep.subr.bf16.mxu0 0
    %400 = vmatpush2.bf16.msra.mxu0 %v363
    %401 = vmatprep.subr.bf16.mxu0 0
    %402 = vmatpush2.bf16.msra.mxu0 %v362
    %403 = vmatprep.subr.bf16.mxu0 0
    %404 = vmatpush2.bf16.msra.mxu0 %v361
    %405 = vmatprep.subr.bf16.mxu0 0
    %406 = vmatpush2.bf16.msra.mxu0 %v360
    %407 = vmatprep.subr.bf16.mxu0 0
    %408 = vmatpush2.bf16.msra.mxu0 %v359
    %409 = vmatprep.subr.bf16.mxu0 0
    %410 = vmatpush2.bf16.msra.mxu0 %v358
    %411 = vmatprep.subr.bf16.mxu0 0
    %412 = vmatpush2.bf16.msra.mxu0 %v357
    %413 = vmatprep.mubr.bf16.mxu0 %v254
    %414 = vmatmul.mubr.bf16.gmra.mxu0 %v253
    %v415 = vpop.f32.mrf.mxu0
    %v416 = vadd.f32 0.0, %v415
    %v417 = vpop.f32.mrf.mxu0
    %v418 = vpop.f32.mrf.mxu0
    %v419 = vadd.f32 0.0, %v418
    %v420 = vpop.f32.mrf.mxu0
    %421 = vmatprep.mubr.bf16.mxu0 %v256
    %422 = vmatmul.mubr.bf16.gmra.mxu0 %v255
    %v423 = vpop.f32.mrf.mxu0
    %v424 = vadd.f32 0.0, %v423
    %v425 = vpop.f32.mrf.mxu0
    %v426 = vpop.f32.mrf.mxu0
    %v427 = vadd.f32 0.0, %v426
    %v428 = vpop.f32.mrf.mxu0
    %429 = vmatprep.mubr.bf16.mxu0 %v258
    %430 = vmatmul.mubr.bf16.gmra.mxu0 %v257
    %v431 = vpop.f32.mrf.mxu0
    %v432 = vadd.f32 0.0, %v431
    %v433 = vpop.f32.mrf.mxu0
    %v434 = vpop.f32.mrf.mxu0
    %v435 = vadd.f32 0.0, %v434
    %v436 = vpop.f32.mrf.mxu0
    %437 = vmatprep.mubr.bf16.mxu0 %v260
    %438 = vmatmul.mubr.bf16.gmra.mxu0 %v259
    %v439 = vpop.f32.mrf.mxu0
    %v440 = vadd.f32 0.0, %v439
    %v441 = vpop.f32.mrf.mxu0
    %v442 = vpop.f32.mrf.mxu0
    %v443 = vadd.f32 0.0, %v442
    %v444 = vpop.f32.mrf.mxu0
    %445 = vmatprep.mubr.bf16.mxu0 %v262
    %446 = vmatmul.mubr.bf16.gmra.mxu0 %v261
    %v447 = vpop.f32.mrf.mxu0
    %v448 = vadd.f32 0.0, %v447
    %v449 = vpop.f32.mrf.mxu0
    %v450 = vpop.f32.mrf.mxu0
    %v451 = vadd.f32 0.0, %v450
    %v452 = vpop.f32.mrf.mxu0
    %453 = vmatprep.mubr.bf16.mxu0 %v264
    %454 = vmatmul.mubr.bf16.gmra.mxu0 %v263
    %v455 = vpop.f32.mrf.mxu0
    %v456 = vadd.f32 0.0, %v455
    %v457 = vpop.f32.mrf.mxu0
    %v458 = vpop.f32.mrf.mxu0
    %v459 = vadd.f32 0.0, %v458
    %v460 = vpop.f32.mrf.mxu0
    %461 = vmatprep.mubr.bf16.mxu0 %v266
    %462 = vmatmul.mubr.bf16.gmra.mxu0 %v265
    %v463 = vpop.f32.mrf.mxu0
    %v464 = vadd.f32 0.0, %v463
    %v465 = vpop.f32.mrf.mxu0
    %v466 = vpop.f32.mrf.mxu0
    %v467 = vadd.f32 0.0, %v466
    %v468 = vpop.f32.mrf.mxu0
    %469 = vmatprep.mubr.bf16.mxu0 %v268
    %470 = vmatmul.mubr.bf16.gmra.mxu0 %v267
    %v471 = vpop.f32.mrf.mxu0
    %v472 = vadd.f32 0.0, %v471
    %v473 = vpop.f32.mrf.mxu0
    %v474 = vpop.f32.mrf.mxu0
    %v475 = vadd.f32 0.0, %v474
    %v476 = vpop.f32.mrf.mxu0
    %477 = vdwg.mxu0
    %v478 = vpack.c.bf16 %v419, %v416
    %v479 = vpack.c.bf16 %v427, %v424
    %v480 = vpack.c.bf16 %v435, %v432
    %v481 = vpack.c.bf16 %v443, %v440
    %v482 = vpack.c.bf16 %v451, %v448
    %v483 = vpack.c.bf16 %v459, %v456
    %v484 = vpack.c.bf16 %v467, %v464
    %v485 = vpack.c.bf16 %v475, %v472
    %v486 = vld [vmem:[#allocation7] sm:$0xff]
    %v487 = vld [vmem:[#allocation7 + $0x8] sm:$0xff]
    %v488 = vld [vmem:[#allocation7 + $0x10] sm:$0xff]
    %v489 = vld [vmem:[#allocation7 + $0x18] sm:$0xff]
    %v490 = vld [vmem:[#allocation7 + $0x20] sm:$0xff]
    %v491 = vld [vmem:[#allocation7 + $0x28] sm:$0xff]
    %v492 = vld [vmem:[#allocation7 + $0x30] sm:$0xff]
    %v493 = vld [vmem:[#allocation7 + $0x38] sm:$0xff]
    %v494 = vld [vmem:[#allocation7 + $0x40] sm:$0xff]
    %v495 = vld [vmem:[#allocation7 + $0x48] sm:$0xff]
    %v496 = vld [vmem:[#allocation7 + $0x50] sm:$0xff]
    %v497 = vld [vmem:[#allocation7 + $0x58] sm:$0xff]
    %v498 = vld [vmem:[#allocation7 + $0x60] sm:$0xff]
    %v499 = vld [vmem:[#allocation7 + $0x68] sm:$0xff]
    %v500 = vld [vmem:[#allocation7 + $0x70] sm:$0xff]
    %v501 = vld [vmem:[#allocation7 + $0x78] sm:$0xff]
    %v502 = vld [vmem:[#allocation7 + $0x80] sm:$0xff]
    %v503 = vld [vmem:[#allocation7 + $0x88] sm:$0xff]
    %v504 = vld [vmem:[#allocation7 + $0x90] sm:$0xff]
    %v505 = vld [vmem:[#allocation7 + $0x98] sm:$0xff]
    %v506 = vld [vmem:[#allocation7 + $0xa0] sm:$0xff]
    %v507 = vld [vmem:[#allocation7 + $0xa8] sm:$0xff]
    %v508 = vld [vmem:[#allocation7 + $0xb0] sm:$0xff]
    %v509 = vld [vmem:[#allocation7 + $0xb8] sm:$0xff]
    %v510 = vld [vmem:[#allocation7 + $0xc0] sm:$0xff]
    %v511 = vld [vmem:[#allocation7 + $0xc8] sm:$0xff]
    %v512 = vld [vmem:[#allocation7 + $0xd0] sm:$0xff]
    %v513 = vld [vmem:[#allocation7 + $0xd8] sm:$0xff]
    %v514 = vld [vmem:[#allocation7 + $0xe0] sm:$0xff]
    %v515 = vld [vmem:[#allocation7 + $0xe8] sm:$0xff]
    %v516 = vld [vmem:[#allocation7 + $0xf0] sm:$0xff]
    %v517 = vld [vmem:[#allocation7 + $0xf8] sm:$0xff]
    %v518 = vld [vmem:[#allocation7 + $0x100] sm:$0xff]
    %v519 = vld [vmem:[#allocation7 + $0x108] sm:$0xff]
    %v520 = vld [vmem:[#allocation7 + $0x110] sm:$0xff]
    %v521 = vld [vmem:[#allocation7 + $0x118] sm:$0xff]
    %v522 = vld [vmem:[#allocation7 + $0x120] sm:$0xff]
    %v523 = vld [vmem:[#allocation7 + $0x128] sm:$0xff]
    %v524 = vld [vmem:[#allocation7 + $0x130] sm:$0xff]
    %v525 = vld [vmem:[#allocation7 + $0x138] sm:$0xff]
    %v526 = vld [vmem:[#allocation7 + $0x140] sm:$0xff]
    %v527 = vld [vmem:[#allocation7 + $0x148] sm:$0xff]
    %v528 = vld [vmem:[#allocation7 + $0x150] sm:$0xff]
    %v529 = vld [vmem:[#allocation7 + $0x158] sm:$0xff]
    %v530 = vld [vmem:[#allocation7 + $0x160] sm:$0xff]
    %v531 = vld [vmem:[#allocation7 + $0x168] sm:$0xff]
    %v532 = vld [vmem:[#allocation7 + $0x170] sm:$0xff]
    %v533 = vld [vmem:[#allocation7 + $0x178] sm:$0xff]
    %v534 = vld [vmem:[#allocation7 + $0x180] sm:$0xff]
    %v535 = vld [vmem:[#allocation7 + $0x188] sm:$0xff]
    %v536 = vld [vmem:[#allocation7 + $0x190] sm:$0xff]
    %v537 = vld [vmem:[#allocation7 + $0x198] sm:$0xff]
    %v538 = vld [vmem:[#allocation7 + $0x1a0] sm:$0xff]
    %v539 = vld [vmem:[#allocation7 + $0x1a8] sm:$0xff]
    %v540 = vld [vmem:[#allocation7 + $0x1b0] sm:$0xff]
    %v541 = vld [vmem:[#allocation7 + $0x1b8] sm:$0xff]
    %v542 = vld [vmem:[#allocation7 + $0x1c0] sm:$0xff]
    %v543 = vld [vmem:[#allocation7 + $0x1c8] sm:$0xff]
    %v544 = vld [vmem:[#allocation7 + $0x1d0] sm:$0xff]
    %v545 = vld [vmem:[#allocation7 + $0x1d8] sm:$0xff]
    %v546 = vld [vmem:[#allocation7 + $0x1e0] sm:$0xff]
    %v547 = vld [vmem:[#allocation7 + $0x1e8] sm:$0xff]
    %v548 = vld [vmem:[#allocation7 + $0x1f0] sm:$0xff]
    %v549 = vld [vmem:[#allocation7 + $0x1f8] sm:$0xff]
    %v550 = vld [vmem:[#allocation8] sm:$0xff]
    %v552 = vlaneseq
    %v553 = vshrl.u32 %v552, 7
    %v554 = vsub.s32 0, %v553
    %v555 = vrot.slane %v550, %v554
    %v556 = vlaneseq
    %v557 = vshrl.u32 %v556, 7
    %v558 = vsub.s32 1, %v557
    %v559 = vrot.slane %v550, %v558
    %v560 = vlaneseq
    %v561 = vshrl.u32 %v560, 7
    %v562 = vsub.s32 2, %v561
    %v563 = vrot.slane %v550, %v562
    %v564 = vlaneseq
    %v565 = vshrl.u32 %v564, 7
    %v566 = vsub.s32 3, %v565
    %v567 = vrot.slane %v550, %v566
    %v568 = vlaneseq
    %v569 = vshrl.u32 %v568, 7
    %v570 = vsub.s32 4, %v569
    %v571 = vrot.slane %v550, %v570
    %v572 = vlaneseq
    %v573 = vshrl.u32 %v572, 7
    %v574 = vsub.s32 5, %v573
    %v575 = vrot.slane %v550, %v574
    %v576 = vlaneseq
    %v577 = vshrl.u32 %v576, 7
    %v578 = vsub.s32 6, %v577
    %v579 = vrot.slane %v550, %v578
    %v580 = vlaneseq
    %v581 = vshrl.u32 %v580, 7
    %v582 = vsub.s32 7, %v581
    %v583 = vrot.slane %v550, %v582
    %v656 = vunpack.c.l.b16 %v486
    %v657 = vunpack.c.h.b16 %v486
    %v658 = vunpack.c.l.b16 %v487
    %v659 = vunpack.c.h.b16 %v487
    %v660 = vunpack.c.l.b16 %v488
    %v661 = vunpack.c.h.b16 %v488
    %v662 = vunpack.c.l.b16 %v489
    %v663 = vunpack.c.h.b16 %v489
    %v664 = vunpack.c.l.b16 %v490
    %v665 = vunpack.c.h.b16 %v490
    %v666 = vunpack.c.l.b16 %v491
    %v667 = vunpack.c.h.b16 %v491
    %v668 = vunpack.c.l.b16 %v492
    %v669 = vunpack.c.h.b16 %v492
    %v670 = vunpack.c.l.b16 %v493
    %v671 = vunpack.c.h.b16 %v493
    %v672 = vunpack.c.l.b16 %v494
    %v673 = vunpack.c.h.b16 %v494
    %v674 = vunpack.c.l.b16 %v495
    %v675 = vunpack.c.h.b16 %v495
    %v676 = vunpack.c.l.b16 %v496
    %v677 = vunpack.c.h.b16 %v496
    %v678 = vunpack.c.l.b16 %v497
    %v679 = vunpack.c.h.b16 %v497
    %v680 = vunpack.c.l.b16 %v498
    %v681 = vunpack.c.h.b16 %v498
    %v682 = vunpack.c.l.b16 %v499
    %v683 = vunpack.c.h.b16 %v499
    %v684 = vunpack.c.l.b16 %v500
    %v685 = vunpack.c.h.b16 %v500
    %v686 = vunpack.c.l.b16 %v501
    %v687 = vunpack.c.h.b16 %v501
    %v688 = vunpack.c.l.b16 %v502
    %v689 = vunpack.c.h.b16 %v502
    %v690 = vunpack.c.l.b16 %v503
    %v691 = vunpack.c.h.b16 %v503
    %v692 = vunpack.c.l.b16 %v504
    %v693 = vunpack.c.h.b16 %v504
    %v694 = vunpack.c.l.b16 %v505
    %v695 = vunpack.c.h.b16 %v505
    %v696 = vunpack.c.l.b16 %v506
    %v697 = vunpack.c.h.b16 %v506
    %v698 = vunpack.c.l.b16 %v507
    %v699 = vunpack.c.h.b16 %v507
    %v700 = vunpack.c.l.b16 %v508
    %v701 = vunpack.c.h.b16 %v508
    %v702 = vunpack.c.l.b16 %v509
    %v703 = vunpack.c.h.b16 %v509
    %v704 = vunpack.c.l.b16 %v510
    %v705 = vunpack.c.h.b16 %v510
    %v706 = vunpack.c.l.b16 %v511
    %v707 = vunpack.c.h.b16 %v511
    %v708 = vunpack.c.l.b16 %v512
    %v709 = vunpack.c.h.b16 %v512
    %v710 = vunpack.c.l.b16 %v513
    %v711 = vunpack.c.h.b16 %v513
    %v712 = vunpack.c.l.b16 %v514
    %v713 = vunpack.c.h.b16 %v514
    %v714 = vunpack.c.l.b16 %v515
    %v715 = vunpack.c.h.b16 %v515
    %v716 = vunpack.c.l.b16 %v516
    %v717 = vunpack.c.h.b16 %v516
    %v718 = vunpack.c.l.b16 %v517
    %v719 = vunpack.c.h.b16 %v517
    %v720 = vunpack.c.l.b16 %v518
    %v721 = vunpack.c.h.b16 %v518
    %v722 = vunpack.c.l.b16 %v519
    %v723 = vunpack.c.h.b16 %v519
    %v724 = vunpack.c.l.b16 %v520
    %v725 = vunpack.c.h.b16 %v520
    %v726 = vunpack.c.l.b16 %v521
    %v727 = vunpack.c.h.b16 %v521
    %v728 = vunpack.c.l.b16 %v522
    %v729 = vunpack.c.h.b16 %v522
    %v730 = vunpack.c.l.b16 %v523
    %v731 = vunpack.c.h.b16 %v523
    %v732 = vunpack.c.l.b16 %v524
    %v733 = vunpack.c.h.b16 %v524
    %v734 = vunpack.c.l.b16 %v525
    %v735 = vunpack.c.h.b16 %v525
    %v736 = vunpack.c.l.b16 %v526
    %v737 = vunpack.c.h.b16 %v526
    %v738 = vunpack.c.l.b16 %v527
    %v739 = vunpack.c.h.b16 %v527
    %v740 = vunpack.c.l.b16 %v528
    %v741 = vunpack.c.h.b16 %v528
    %v742 = vunpack.c.l.b16 %v529
    %v743 = vunpack.c.h.b16 %v529
    %v744 = vunpack.c.l.b16 %v530
    %v745 = vunpack.c.h.b16 %v530
    %v746 = vunpack.c.l.b16 %v531
    %v747 = vunpack.c.h.b16 %v531
    %v748 = vunpack.c.l.b16 %v532
    %v749 = vunpack.c.h.b16 %v532
    %v750 = vunpack.c.l.b16 %v533
    %v751 = vunpack.c.h.b16 %v533
    %v752 = vunpack.c.l.b16 %v534
    %v753 = vunpack.c.h.b16 %v534
    %v754 = vunpack.c.l.b16 %v535
    %v755 = vunpack.c.h.b16 %v535
    %v756 = vunpack.c.l.b16 %v536
    %v757 = vunpack.c.h.b16 %v536
    %v758 = vunpack.c.l.b16 %v537
    %v759 = vunpack.c.h.b16 %v537
    %v760 = vunpack.c.l.b16 %v538
    %v761 = vunpack.c.h.b16 %v538
    %v762 = vunpack.c.l.b16 %v539
    %v763 = vunpack.c.h.b16 %v539
    %v764 = vunpack.c.l.b16 %v540
    %v765 = vunpack.c.h.b16 %v540
    %v766 = vunpack.c.l.b16 %v541
    %v767 = vunpack.c.h.b16 %v541
    %v768 = vunpack.c.l.b16 %v542
    %v769 = vunpack.c.h.b16 %v542
    %v770 = vunpack.c.l.b16 %v543
    %v771 = vunpack.c.h.b16 %v543
    %v772 = vunpack.c.l.b16 %v544
    %v773 = vunpack.c.h.b16 %v544
    %v774 = vunpack.c.l.b16 %v545
    %v775 = vunpack.c.h.b16 %v545
    %v776 = vunpack.c.l.b16 %v546
    %v777 = vunpack.c.h.b16 %v546
    %v778 = vunpack.c.l.b16 %v547
    %v779 = vunpack.c.h.b16 %v547
    %v780 = vunpack.c.l.b16 %v548
    %v781 = vunpack.c.h.b16 %v548
    %v782 = vunpack.c.l.b16 %v549
    %v783 = vunpack.c.h.b16 %v549
    %v784 = vpack.c.b16 %v664, %v656
    %v785 = vpack.c.b16 %v665, %v657
    %v786 = vpack.c.b16 %v666, %v658
    %v787 = vpack.c.b16 %v667, %v659
    %v788 = vpack.c.b16 %v668, %v660
    %v789 = vpack.c.b16 %v669, %v661
    %v790 = vpack.c.b16 %v670, %v662
    %v791 = vpack.c.b16 %v671, %v663
    %v792 = vpack.c.b16 %v680, %v672
    %v793 = vpack.c.b16 %v681, %v673
    %v794 = vpack.c.b16 %v682, %v674
    %v795 = vpack.c.b16 %v683, %v675
    %v796 = vpack.c.b16 %v684, %v676
    %v797 = vpack.c.b16 %v685, %v677
    %v798 = vpack.c.b16 %v686, %v678
    %v799 = vpack.c.b16 %v687, %v679
    %v800 = vpack.c.b16 %v696, %v688
    %v801 = vpack.c.b16 %v697, %v689
    %v802 = vpack.c.b16 %v698, %v690
    %v803 = vpack.c.b16 %v699, %v691
    %v804 = vpack.c.b16 %v700, %v692
    %v805 = vpack.c.b16 %v701, %v693
    %v806 = vpack.c.b16 %v702, %v694
    %v807 = vpack.c.b16 %v703, %v695
    %v808 = vpack.c.b16 %v712, %v704
    %v809 = vpack.c.b16 %v713, %v705
    %v810 = vpack.c.b16 %v714, %v706
    %v811 = vpack.c.b16 %v715, %v707
    %v812 = vpack.c.b16 %v716, %v708
    %v813 = vpack.c.b16 %v717, %v709
    %v814 = vpack.c.b16 %v718, %v710
    %v815 = vpack.c.b16 %v719, %v711
    %v816 = vpack.c.b16 %v728, %v720
    %v817 = vpack.c.b16 %v729, %v721
    %v818 = vpack.c.b16 %v730, %v722
    %v819 = vpack.c.b16 %v731, %v723
    %v820 = vpack.c.b16 %v732, %v724
    %v821 = vpack.c.b16 %v733, %v725
    %v822 = vpack.c.b16 %v734, %v726
    %v823 = vpack.c.b16 %v735, %v727
    %v824 = vpack.c.b16 %v744, %v736
    %v825 = vpack.c.b16 %v745, %v737
    %v826 = vpack.c.b16 %v746, %v738
    %v827 = vpack.c.b16 %v747, %v739
    %v828 = vpack.c.b16 %v748, %v740
    %v829 = vpack.c.b16 %v749, %v741
    %v830 = vpack.c.b16 %v750, %v742
    %v831 = vpack.c.b16 %v751, %v743
    %v832 = vpack.c.b16 %v760, %v752
    %v833 = vpack.c.b16 %v761, %v753
    %v834 = vpack.c.b16 %v762, %v754
    %v835 = vpack.c.b16 %v763, %v755
    %v836 = vpack.c.b16 %v764, %v756
    %v837 = vpack.c.b16 %v765, %v757
    %v838 = vpack.c.b16 %v766, %v758
    %v839 = vpack.c.b16 %v767, %v759
    %v840 = vpack.c.b16 %v776, %v768
    %v841 = vpack.c.b16 %v777, %v769
    %v842 = vpack.c.b16 %v778, %v770
    %v843 = vpack.c.b16 %v779, %v771
    %v844 = vpack.c.b16 %v780, %v772
    %v845 = vpack.c.b16 %v781, %v773
    %v846 = vpack.c.b16 %v782, %v774
    %v847 = vpack.c.b16 %v783, %v775
    %912 = vmatprep.subr.bf16.mxu0 %v841
    %913 = vmatpush1.bf16.msra.mxu0 %v840
    %914 = vmatprep.subr.bf16.mxu0 %v833
    %915 = vmatpush1.bf16.msra.mxu0 %v832
    %916 = vmatprep.subr.bf16.mxu0 %v825
    %917 = vmatpush1.bf16.msra.mxu0 %v824
    %918 = vmatprep.subr.bf16.mxu0 %v817
    %919 = vmatpush1.bf16.msra.mxu0 %v816
    %920 = vmatprep.subr.bf16.mxu0 %v809
    %921 = vmatpush1.bf16.msra.mxu0 %v808
    %922 = vmatprep.subr.bf16.mxu0 %v801
    %923 = vmatpush1.bf16.msra.mxu0 %v800
    %924 = vmatprep.subr.bf16.mxu0 %v793
    %925 = vmatpush1.bf16.msra.mxu0 %v792
    %926 = vmatprep.subr.bf16.mxu0 %v785
    %927 = vmatpush1.bf16.msra.mxu0 %v784
    %928 = vmatprep.subr.bf16.mxu0 0
    %929 = vmatpush2.bf16.msra.mxu0 0
    %930 = vmatprep.subr.bf16.mxu0 0
    %931 = vmatpush2.bf16.msra.mxu0 0
    %932 = vmatprep.subr.bf16.mxu0 0
    %933 = vmatpush2.bf16.msra.mxu0 0
    %934 = vmatprep.subr.bf16.mxu0 0
    %935 = vmatpush2.bf16.msra.mxu0 0
    %936 = vmatprep.subr.bf16.mxu0 0
    %937 = vmatpush2.bf16.msra.mxu0 0
    %938 = vmatprep.subr.bf16.mxu0 0
    %939 = vmatpush2.bf16.msra.mxu0 0
    %940 = vmatprep.subr.bf16.mxu0 0
    %941 = vmatpush2.bf16.msra.mxu0 0
    %942 = vmatprep.subr.bf16.mxu0 0
    %943 = vmatpush2.bf16.msra.mxu0 0
    %944 = vmatprep.mubr.bf16.mxu0 0
    %945 = vmatmul.mubr.bf16.gmra.mxu0 %v478
    %v946 = vpop.f32.mrf.mxu0
    %v947 = vadd.f32 %v555, %v946
    %v948 = vpop.f32.mrf.mxu0
    %v949 = vadd.f32 %v559, %v948
    %v950 = vpop.f32.mrf.mxu0
    %v951 = vadd.f32 %v555, %v950
    %v952 = vpop.f32.mrf.mxu0
    %v953 = vadd.f32 %v559, %v952
    %954 = vmatprep.mubr.bf16.mxu0 0
    %955 = vmatmul.mubr.bf16.gmra.mxu0 %v479
    %v956 = vpop.f32.mrf.mxu0
    %v957 = vadd.f32 %v555, %v956
    %v958 = vpop.f32.mrf.mxu0
    %v959 = vadd.f32 %v559, %v958
    %v960 = vpop.f32.mrf.mxu0
    %v961 = vadd.f32 %v555, %v960
    %v962 = vpop.f32.mrf.mxu0
    %v963 = vadd.f32 %v559, %v962
    %964 = vmatprep.mubr.bf16.mxu0 0
    %965 = vmatmul.mubr.bf16.gmra.mxu0 %v480
    %v966 = vpop.f32.mrf.mxu0
    %v967 = vadd.f32 %v555, %v966
    %v968 = vpop.f32.mrf.mxu0
    %v969 = vadd.f32 %v559, %v968
    %v970 = vpop.f32.mrf.mxu0
    %v971 = vadd.f32 %v555, %v970
    %v972 = vpop.f32.mrf.mxu0
    %v973 = vadd.f32 %v559, %v972
    %974 = vmatprep.mubr.bf16.mxu0 0
    %975 = vmatmul.mubr.bf16.gmra.mxu0 %v481
    %v976 = vpop.f32.mrf.mxu0
    %v977 = vadd.f32 %v555, %v976
    %v978 = vpop.f32.mrf.mxu0
    %v979 = vadd.f32 %v559, %v978
    %v980 = vpop.f32.mrf.mxu0
    %v981 = vadd.f32 %v555, %v980
    %v982 = vpop.f32.mrf.mxu0
    %v983 = vadd.f32 %v559, %v982
    %984 = vmatprep.mubr.bf16.mxu0 0
    %985 = vmatmul.mubr.bf16.gmra.mxu0 %v482
    %v986 = vpop.f32.mrf.mxu0
    %v987 = vadd.f32 %v555, %v986
    %v988 = vpop.f32.mrf.mxu0
    %v989 = vadd.f32 %v559, %v988
    %v990 = vpop.f32.mrf.mxu0
    %v991 = vadd.f32 %v555, %v990
    %v992 = vpop.f32.mrf.mxu0
    %v993 = vadd.f32 %v559, %v992
    %994 = vmatprep.mubr.bf16.mxu0 0
    %995 = vmatmul.mubr.bf16.gmra.mxu0 %v483
    %v996 = vpop.f32.mrf.mxu0
    %v997 = vadd.f32 %v555, %v996
    %v998 = vpop.f32.mrf.mxu0
    %v999 = vadd.f32 %v559, %v998
    %v1000 = vpop.f32.mrf.mxu0
    %v1001 = vadd.f32 %v555, %v1000
    %v1002 = vpop.f32.mrf.mxu0
    %v1003 = vadd.f32 %v559, %v1002
    %1004 = vmatprep.mubr.bf16.mxu0 0
    %1005 = vmatmul.mubr.bf16.gmra.mxu0 %v484
    %v1006 = vpop.f32.mrf.mxu0
    %v1007 = vadd.f32 %v555, %v1006
    %v1008 = vpop.f32.mrf.mxu0
    %v1009 = vadd.f32 %v559, %v1008
    %v1010 = vpop.f32.mrf.mxu0
    %v1011 = vadd.f32 %v555, %v1010
    %v1012 = vpop.f32.mrf.mxu0
    %v1013 = vadd.f32 %v559, %v1012
    %1014 = vmatprep.mubr.bf16.mxu0 0
    %1015 = vmatmul.mubr.bf16.gmra.mxu0 %v485
    %v1016 = vpop.f32.mrf.mxu0
    %v1017 = vadd.f32 %v555, %v1016
    %v1018 = vpop.f32.mrf.mxu0
    %v1019 = vadd.f32 %v559, %v1018
    %v1020 = vpop.f32.mrf.mxu0
    %v1021 = vadd.f32 %v555, %v1020
    %v1022 = vpop.f32.mrf.mxu0
    %v1023 = vadd.f32 %v559, %v1022
    %1024 = vdwg.mxu0
    %1025 = vmatprep.subr.bf16.mxu0 %v843
    %1026 = vmatpush1.bf16.msra.mxu0 %v842
    %1027 = vmatprep.subr.bf16.mxu0 %v835
    %1028 = vmatpush1.bf16.msra.mxu0 %v834
    %1029 = vmatprep.subr.bf16.mxu0 %v827
    %1030 = vmatpush1.bf16.msra.mxu0 %v826
    %1031 = vmatprep.subr.bf16.mxu0 %v819
    %1032 = vmatpush1.bf16.msra.mxu0 %v818
    %1033 = vmatprep.subr.bf16.mxu0 %v811
    %1034 = vmatpush1.bf16.msra.mxu0 %v810
    %1035 = vmatprep.subr.bf16.mxu0 %v803
    %1036 = vmatpush1.bf16.msra.mxu0 %v802
    %1037 = vmatprep.subr.bf16.mxu0 %v795
    %1038 = vmatpush1.bf16.msra.mxu0 %v794
    %1039 = vmatprep.subr.bf16.mxu0 %v787
    %1040 = vmatpush1.bf16.msra.mxu0 %v786
    %1041 = vmatprep.subr.bf16.mxu0 0
    %1042 = vmatpush2.bf16.msra.mxu0 0
    %1043 = vmatprep.subr.bf16.mxu0 0
    %1044 = vmatpush2.bf16.msra.mxu0 0
    %1045 = vmatprep.subr.bf16.mxu0 0
    %1046 = vmatpush2.bf16.msra.mxu0 0
    %1047 = vmatprep.subr.bf16.mxu0 0
    %1048 = vmatpush2.bf16.msra.mxu0 0
    %1049 = vmatprep.subr.bf16.mxu0 0
    %1050 = vmatpush2.bf16.msra.mxu0 0
    %1051 = vmatprep.subr.bf16.mxu0 0
    %1052 = vmatpush2.bf16.msra.mxu0 0
    %1053 = vmatprep.subr.bf16.mxu0 0
    %1054 = vmatpush2.bf16.msra.mxu0 0
    %1055 = vmatprep.subr.bf16.mxu0 0
    %1056 = vmatpush2.bf16.msra.mxu0 0
    %1057 = vmatprep.mubr.bf16.mxu0 0
    %1058 = vmatmul.mubr.bf16.gmra.mxu0 %v478
    %v1059 = vpop.f32.mrf.mxu0
    %v1060 = vadd.f32 %v563, %v1059
    %v1061 = vpop.f32.mrf.mxu0
    %v1062 = vadd.f32 %v567, %v1061
    %v1063 = vpop.f32.mrf.mxu0
    %v1064 = vadd.f32 %v563, %v1063
    %v1065 = vpop.f32.mrf.mxu0
    %v1066 = vadd.f32 %v567, %v1065
    %1067 = vmatprep.mubr.bf16.mxu0 0
    %1068 = vmatmul.mubr.bf16.gmra.mxu0 %v479
    %v1069 = vpop.f32.mrf.mxu0
    %v1070 = vadd.f32 %v563, %v1069
    %v1071 = vpop.f32.mrf.mxu0
    %v1072 = vadd.f32 %v567, %v1071
    %v1073 = vpop.f32.mrf.mxu0
    %v1074 = vadd.f32 %v563, %v1073
    %v1075 = vpop.f32.mrf.mxu0
    %v1076 = vadd.f32 %v567, %v1075
    %1077 = vmatprep.mubr.bf16.mxu0 0
    %1078 = vmatmul.mubr.bf16.gmra.mxu0 %v480
    %v1079 = vpop.f32.mrf.mxu0
    %v1080 = vadd.f32 %v563, %v1079
    %v1081 = vpop.f32.mrf.mxu0
    %v1082 = vadd.f32 %v567, %v1081
    %v1083 = vpop.f32.mrf.mxu0
    %v1084 = vadd.f32 %v563, %v1083
    %v1085 = vpop.f32.mrf.mxu0
    %v1086 = vadd.f32 %v567, %v1085
    %1087 = vmatprep.mubr.bf16.mxu0 0
    %1088 = vmatmul.mubr.bf16.gmra.mxu0 %v481
    %v1089 = vpop.f32.mrf.mxu0
    %v1090 = vadd.f32 %v563, %v1089
    %v1091 = vpop.f32.mrf.mxu0
    %v1092 = vadd.f32 %v567, %v1091
    %v1093 = vpop.f32.mrf.mxu0
    %v1094 = vadd.f32 %v563, %v1093
    %v1095 = vpop.f32.mrf.mxu0
    %v1096 = vadd.f32 %v567, %v1095
    %1097 = vmatprep.mubr.bf16.mxu0 0
    %1098 = vmatmul.mubr.bf16.gmra.mxu0 %v482
    %v1099 = vpop.f32.mrf.mxu0
    %v1100 = vadd.f32 %v563, %v1099
    %v1101 = vpop.f32.mrf.mxu0
    %v1102 = vadd.f32 %v567, %v1101
    %v1103 = vpop.f32.mrf.mxu0
    %v1104 = vadd.f32 %v563, %v1103
    %v1105 = vpop.f32.mrf.mxu0
    %v1106 = vadd.f32 %v567, %v1105
    %1107 = vmatprep.mubr.bf16.mxu0 0
    %1108 = vmatmul.mubr.bf16.gmra.mxu0 %v483
    %v1109 = vpop.f32.mrf.mxu0
    %v1110 = vadd.f32 %v563, %v1109
    %v1111 = vpop.f32.mrf.mxu0
    %v1112 = vadd.f32 %v567, %v1111
    %v1113 = vpop.f32.mrf.mxu0
    %v1114 = vadd.f32 %v563, %v1113
    %v1115 = vpop.f32.mrf.mxu0
    %v1116 = vadd.f32 %v567, %v1115
    %1117 = vmatprep.mubr.bf16.mxu0 0
    %1118 = vmatmul.mubr.bf16.gmra.mxu0 %v484
    %v1119 = vpop.f32.mrf.mxu0
    %v1120 = vadd.f32 %v563, %v1119
    %v1121 = vpop.f32.mrf.mxu0
    %v1122 = vadd.f32 %v567, %v1121
    %v1123 = vpop.f32.mrf.mxu0
    %v1124 = vadd.f32 %v563, %v1123
    %v1125 = vpop.f32.mrf.mxu0
    %v1126 = vadd.f32 %v567, %v1125
    %1127 = vmatprep.mubr.bf16.mxu0 0
    %1128 = vmatmul.mubr.bf16.gmra.mxu0 %v485
    %v1129 = vpop.f32.mrf.mxu0
    %v1130 = vadd.f32 %v563, %v1129
    %v1131 = vpop.f32.mrf.mxu0
    %v1132 = vadd.f32 %v567, %v1131
    %v1133 = vpop.f32.mrf.mxu0
    %v1134 = vadd.f32 %v563, %v1133
    %v1135 = vpop.f32.mrf.mxu0
    %v1136 = vadd.f32 %v567, %v1135
    %1137 = vdwg.mxu0
    %1138 = vmatprep.subr.bf16.mxu0 %v845
    %1139 = vmatpush1.bf16.msra.mxu0 %v844
    %1140 = vmatprep.subr.bf16.mxu0 %v837
    %1141 = vmatpush1.bf16.msra.mxu0 %v836
    %1142 = vmatprep.subr.bf16.mxu0 %v829
    %1143 = vmatpush1.bf16.msra.mxu0 %v828
    %1144 = vmatprep.subr.bf16.mxu0 %v821
    %1145 = vmatpush1.bf16.msra.mxu0 %v820
    %1146 = vmatprep.subr.bf16.mxu0 %v813
    %1147 = vmatpush1.bf16.msra.mxu0 %v812
    %1148 = vmatprep.subr.bf16.mxu0 %v805
    %1149 = vmatpush1.bf16.msra.mxu0 %v804
    %1150 = vmatprep.subr.bf16.mxu0 %v797
    %1151 = vmatpush1.bf16.msra.mxu0 %v796
    %1152 = vmatprep.subr.bf16.mxu0 %v789
    %1153 = vmatpush1.bf16.msra.mxu0 %v788
    %1154 = vmatprep.subr.bf16.mxu0 0
    %1155 = vmatpush2.bf16.msra.mxu0 0
    %1156 = vmatprep.subr.bf16.mxu0 0
    %1157 = vmatpush2.bf16.msra.mxu0 0
    %1158 = vmatprep.subr.bf16.mxu0 0
    %1159 = vmatpush2.bf16.msra.mxu0 0
    %1160 = vmatprep.subr.bf16.mxu0 0
    %1161 = vmatpush2.bf16.msra.mxu0 0
    %1162 = vmatprep.subr.bf16.mxu0 0
    %1163 = vmatpush2.bf16.msra.mxu0 0
    %1164 = vmatprep.subr.bf16.mxu0 0
    %1165 = vmatpush2.bf16.msra.mxu0 0
    %1166 = vmatprep.subr.bf16.mxu0 0
    %1167 = vmatpush2.bf16.msra.mxu0 0
    %1168 = vmatprep.subr.bf16.mxu0 0
    %1169 = vmatpush2.bf16.msra.mxu0 0
    %1170 = vmatprep.mubr.bf16.mxu0 0
    %1171 = vmatmul.mubr.bf16.gmra.mxu0 %v478
    %v1172 = vpop.f32.mrf.mxu0
    %v1173 = vadd.f32 %v571, %v1172
    %v1174 = vpop.f32.mrf.mxu0
    %v1175 = vadd.f32 %v575, %v1174
    %v1176 = vpop.f32.mrf.mxu0
    %v1177 = vadd.f32 %v571, %v1176
    %v1178 = vpop.f32.mrf.mxu0
    %v1179 = vadd.f32 %v575, %v1178
    %1180 = vmatprep.mubr.bf16.mxu0 0
    %1181 = vmatmul.mubr.bf16.gmra.mxu0 %v479
    %v1182 = vpop.f32.mrf.mxu0
    %v1183 = vadd.f32 %v571, %v1182
    %v1184 = vpop.f32.mrf.mxu0
    %v1185 = vadd.f32 %v575, %v1184
    %v1186 = vpop.f32.mrf.mxu0
    %v1187 = vadd.f32 %v571, %v1186
    %v1188 = vpop.f32.mrf.mxu0
    %v1189 = vadd.f32 %v575, %v1188
    %1190 = vmatprep.mubr.bf16.mxu0 0
    %1191 = vmatmul.mubr.bf16.gmra.mxu0 %v480
    %v1192 = vpop.f32.mrf.mxu0
    %v1193 = vadd.f32 %v571, %v1192
    %v1194 = vpop.f32.mrf.mxu0
    %v1195 = vadd.f32 %v575, %v1194
    %v1196 = vpop.f32.mrf.mxu0
    %v1197 = vadd.f32 %v571, %v1196
    %v1198 = vpop.f32.mrf.mxu0
    %v1199 = vadd.f32 %v575, %v1198
    %1200 = vmatprep.mubr.bf16.mxu0 0
    %1201 = vmatmul.mubr.bf16.gmra.mxu0 %v481
    %v1202 = vpop.f32.mrf.mxu0
    %v1203 = vadd.f32 %v571, %v1202
    %v1204 = vpop.f32.mrf.mxu0
    %v1205 = vadd.f32 %v575, %v1204
    %v1206 = vpop.f32.mrf.mxu0
    %v1207 = vadd.f32 %v571, %v1206
    %v1208 = vpop.f32.mrf.mxu0
    %v1209 = vadd.f32 %v575, %v1208
    %1210 = vmatprep.mubr.bf16.mxu0 0
    %1211 = vmatmul.mubr.bf16.gmra.mxu0 %v482
    %v1212 = vpop.f32.mrf.mxu0
    %v1213 = vadd.f32 %v571, %v1212
    %v1214 = vpop.f32.mrf.mxu0
    %v1215 = vadd.f32 %v575, %v1214
    %v1216 = vpop.f32.mrf.mxu0
    %v1217 = vadd.f32 %v571, %v1216
    %v1218 = vpop.f32.mrf.mxu0
    %v1219 = vadd.f32 %v575, %v1218
    %1220 = vmatprep.mubr.bf16.mxu0 0
    %1221 = vmatmul.mubr.bf16.gmra.mxu0 %v483
    %v1222 = vpop.f32.mrf.mxu0
    %v1223 = vadd.f32 %v571, %v1222
    %v1224 = vpop.f32.mrf.mxu0
    %v1225 = vadd.f32 %v575, %v1224
    %v1226 = vpop.f32.mrf.mxu0
    %v1227 = vadd.f32 %v571, %v1226
    %v1228 = vpop.f32.mrf.mxu0
    %v1229 = vadd.f32 %v575, %v1228
    %1230 = vmatprep.mubr.bf16.mxu0 0
    %1231 = vmatmul.mubr.bf16.gmra.mxu0 %v484
    %v1232 = vpop.f32.mrf.mxu0
    %v1233 = vadd.f32 %v571, %v1232
    %v1234 = vpop.f32.mrf.mxu0
    %v1235 = vadd.f32 %v575, %v1234
    %v1236 = vpop.f32.mrf.mxu0
    %v1237 = vadd.f32 %v571, %v1236
    %v1238 = vpop.f32.mrf.mxu0
    %v1239 = vadd.f32 %v575, %v1238
    %1240 = vmatprep.mubr.bf16.mxu0 0
    %1241 = vmatmul.mubr.bf16.gmra.mxu0 %v485
    %v1242 = vpop.f32.mrf.mxu0
    %v1243 = vadd.f32 %v571, %v1242
    %v1244 = vpop.f32.mrf.mxu0
    %v1245 = vadd.f32 %v575, %v1244
    %v1246 = vpop.f32.mrf.mxu0
    %v1247 = vadd.f32 %v571, %v1246
    %v1248 = vpop.f32.mrf.mxu0
    %v1249 = vadd.f32 %v575, %v1248
    %1250 = vdwg.mxu0
    %1251 = vmatprep.subr.bf16.mxu0 %v847
    %1252 = vmatpush1.bf16.msra.mxu0 %v846
    %1253 = vmatprep.subr.bf16.mxu0 %v839
    %1254 = vmatpush1.bf16.msra.mxu0 %v838
    %1255 = vmatprep.subr.bf16.mxu0 %v831
    %1256 = vmatpush1.bf16.msra.mxu0 %v830
    %1257 = vmatprep.subr.bf16.mxu0 %v823
    %1258 = vmatpush1.bf16.msra.mxu0 %v822
    %1259 = vmatprep.subr.bf16.mxu0 %v815
    %1260 = vmatpush1.bf16.msra.mxu0 %v814
    %1261 = vmatprep.subr.bf16.mxu0 %v807
    %1262 = vmatpush1.bf16.msra.mxu0 %v806
    %1263 = vmatprep.subr.bf16.mxu0 %v799
    %1264 = vmatpush1.bf16.msra.mxu0 %v798
    %1265 = vmatprep.subr.bf16.mxu0 %v791
    %1266 = vmatpush1.bf16.msra.mxu0 %v790
    %1267 = vmatprep.subr.bf16.mxu0 0
    %1268 = vmatpush2.bf16.msra.mxu0 0
    %1269 = vmatprep.subr.bf16.mxu0 0
    %1270 = vmatpush2.bf16.msra.mxu0 0
    %1271 = vmatprep.subr.bf16.mxu0 0
    %1272 = vmatpush2.bf16.msra.mxu0 0
    %1273 = vmatprep.subr.bf16.mxu0 0
    %1274 = vmatpush2.bf16.msra.mxu0 0
    %1275 = vmatprep.subr.bf16.mxu0 0
    %1276 = vmatpush2.bf16.msra.mxu0 0
    %1277 = vmatprep.subr.bf16.mxu0 0
    %1278 = vmatpush2.bf16.msra.mxu0 0
    %1279 = vmatprep.subr.bf16.mxu0 0
    %1280 = vmatpush2.bf16.msra.mxu0 0
    %1281 = vmatprep.subr.bf16.mxu0 0
    %1282 = vmatpush2.bf16.msra.mxu0 0
    %1283 = vmatprep.mubr.bf16.mxu0 0
    %1284 = vmatmul.mubr.bf16.gmra.mxu0 %v478
    %v1285 = vpop.f32.mrf.mxu0
    %v1286 = vadd.f32 %v579, %v1285
    %v1287 = vpop.f32.mrf.mxu0
    %v1288 = vadd.f32 %v583, %v1287
    %v1289 = vpop.f32.mrf.mxu0
    %v1290 = vadd.f32 %v579, %v1289
    %v1291 = vpop.f32.mrf.mxu0
    %v1292 = vadd.f32 %v583, %v1291
    %1293 = vmatprep.mubr.bf16.mxu0 0
    %1294 = vmatmul.mubr.bf16.gmra.mxu0 %v479
    %v1295 = vpop.f32.mrf.mxu0
    %v1296 = vadd.f32 %v579, %v1295
    %v1297 = vpop.f32.mrf.mxu0
    %v1298 = vadd.f32 %v583, %v1297
    %v1299 = vpop.f32.mrf.mxu0
    %v1300 = vadd.f32 %v579, %v1299
    %v1301 = vpop.f32.mrf.mxu0
    %v1302 = vadd.f32 %v583, %v1301
    %1303 = vmatprep.mubr.bf16.mxu0 0
    %1304 = vmatmul.mubr.bf16.gmra.mxu0 %v480
    %v1305 = vpop.f32.mrf.mxu0
    %v1306 = vadd.f32 %v579, %v1305
    %v1307 = vpop.f32.mrf.mxu0
    %v1308 = vadd.f32 %v583, %v1307
    %v1309 = vpop.f32.mrf.mxu0
    %v1310 = vadd.f32 %v579, %v1309
    %v1311 = vpop.f32.mrf.mxu0
    %v1312 = vadd.f32 %v583, %v1311
    %1313 = vmatprep.mubr.bf16.mxu0 0
    %1314 = vmatmul.mubr.bf16.gmra.mxu0 %v481
    %v1315 = vpop.f32.mrf.mxu0
    %v1316 = vadd.f32 %v579, %v1315
    %v1317 = vpop.f32.mrf.mxu0
    %v1318 = vadd.f32 %v583, %v1317
    %v1319 = vpop.f32.mrf.mxu0
    %v1320 = vadd.f32 %v579, %v1319
    %v1321 = vpop.f32.mrf.mxu0
    %v1322 = vadd.f32 %v583, %v1321
    %1323 = vmatprep.mubr.bf16.mxu0 0
    %1324 = vmatmul.mubr.bf16.gmra.mxu0 %v482
    %v1325 = vpop.f32.mrf.mxu0
    %v1326 = vadd.f32 %v579, %v1325
    %v1327 = vpop.f32.mrf.mxu0
    %v1328 = vadd.f32 %v583, %v1327
    %v1329 = vpop.f32.mrf.mxu0
    %v1330 = vadd.f32 %v579, %v1329
    %v1331 = vpop.f32.mrf.mxu0
    %v1332 = vadd.f32 %v583, %v1331
    %1333 = vmatprep.mubr.bf16.mxu0 0
    %1334 = vmatmul.mubr.bf16.gmra.mxu0 %v483
    %v1335 = vpop.f32.mrf.mxu0
    %v1336 = vadd.f32 %v579, %v1335
    %v1337 = vpop.f32.mrf.mxu0
    %v1338 = vadd.f32 %v583, %v1337
    %v1339 = vpop.f32.mrf.mxu0
    %v1340 = vadd.f32 %v579, %v1339
    %v1341 = vpop.f32.mrf.mxu0
    %v1342 = vadd.f32 %v583, %v1341
    %1343 = vmatprep.mubr.bf16.mxu0 0
    %1344 = vmatmul.mubr.bf16.gmra.mxu0 %v484
    %v1345 = vpop.f32.mrf.mxu0
    %v1346 = vadd.f32 %v579, %v1345
    %v1347 = vpop.f32.mrf.mxu0
    %v1348 = vadd.f32 %v583, %v1347
    %v1349 = vpop.f32.mrf.mxu0
    %v1350 = vadd.f32 %v579, %v1349
    %v1351 = vpop.f32.mrf.mxu0
    %v1352 = vadd.f32 %v583, %v1351
    %1353 = vmatprep.mubr.bf16.mxu0 0
    %1354 = vmatmul.mubr.bf16.gmra.mxu0 %v485
    %v1355 = vpop.f32.mrf.mxu0
    %v1356 = vadd.f32 %v579, %v1355
    %v1357 = vpop.f32.mrf.mxu0
    %v1358 = vadd.f32 %v583, %v1357
    %v1359 = vpop.f32.mrf.mxu0
    %v1360 = vadd.f32 %v579, %v1359
    %v1361 = vpop.f32.mrf.mxu0
    %v1362 = vadd.f32 %v583, %v1361
    %1363 = vdwg.mxu0
    %v1364 = vmax.f32 %v947, 0.0
    %v1365 = vmax.f32 %v949, 0.0
    %v1366 = vmax.f32 %v1060, 0.0
    %v1367 = vmax.f32 %v1062, 0.0
    %v1368 = vmax.f32 %v1173, 0.0
    %v1369 = vmax.f32 %v1175, 0.0
    %v1370 = vmax.f32 %v1286, 0.0
    %v1371 = vmax.f32 %v1288, 0.0
    %v1372 = vmax.f32 %v951, 0.0
    %v1373 = vmax.f32 %v953, 0.0
    %v1374 = vmax.f32 %v1064, 0.0
    %v1375 = vmax.f32 %v1066, 0.0
    %v1376 = vmax.f32 %v1177, 0.0
    %v1377 = vmax.f32 %v1179, 0.0
    %v1378 = vmax.f32 %v1290, 0.0
    %v1379 = vmax.f32 %v1292, 0.0
    %v1380 = vmax.f32 %v957, 0.0
    %v1381 = vmax.f32 %v959, 0.0
    %v1382 = vmax.f32 %v1070, 0.0
    %v1383 = vmax.f32 %v1072, 0.0
    %v1384 = vmax.f32 %v1183, 0.0
    %v1385 = vmax.f32 %v1185, 0.0
    %v1386 = vmax.f32 %v1296, 0.0
    %v1387 = vmax.f32 %v1298, 0.0
    %v1388 = vmax.f32 %v961, 0.0
    %v1389 = vmax.f32 %v963, 0.0
    %v1390 = vmax.f32 %v1074, 0.0
    %v1391 = vmax.f32 %v1076, 0.0
    %v1392 = vmax.f32 %v1187, 0.0
    %v1393 = vmax.f32 %v1189, 0.0
    %v1394 = vmax.f32 %v1300, 0.0
    %v1395 = vmax.f32 %v1302, 0.0
    %v1396 = vmax.f32 %v967, 0.0
    %v1397 = vmax.f32 %v969, 0.0
    %v1398 = vmax.f32 %v1080, 0.0
    %v1399 = vmax.f32 %v1082, 0.0
    %v1400 = vmax.f32 %v1193, 0.0
    %v1401 = vmax.f32 %v1195, 0.0
    %v1402 = vmax.f32 %v1306, 0.0
    %v1403 = vmax.f32 %v1308, 0.0
    %v1404 = vmax.f32 %v971, 0.0
    %v1405 = vmax.f32 %v973, 0.0
    %v1406 = vmax.f32 %v1084, 0.0
    %v1407 = vmax.f32 %v1086, 0.0
    %v1408 = vmax.f32 %v1197, 0.0
    %v1409 = vmax.f32 %v1199, 0.0
    %v1410 = vmax.f32 %v1310, 0.0
    %v1411 = vmax.f32 %v1312, 0.0
    %v1412 = vmax.f32 %v977, 0.0
    %v1413 = vmax.f32 %v979, 0.0
    %v1414 = vmax.f32 %v1090, 0.0
    %v1415 = vmax.f32 %v1092, 0.0
    %v1416 = vmax.f32 %v1203, 0.0
    %v1417 = vmax.f32 %v1205, 0.0
    %v1418 = vmax.f32 %v1316, 0.0
    %v1419 = vmax.f32 %v1318, 0.0
    %v1420 = vmax.f32 %v981, 0.0
    %v1421 = vmax.f32 %v983, 0.0
    %v1422 = vmax.f32 %v1094, 0.0
    %v1423 = vmax.f32 %v1096, 0.0
    %v1424 = vmax.f32 %v1207, 0.0
    %v1425 = vmax.f32 %v1209, 0.0
    %v1426 = vmax.f32 %v1320, 0.0
    %v1427 = vmax.f32 %v1322, 0.0
    %v1428 = vmax.f32 %v987, 0.0
    %v1429 = vmax.f32 %v989, 0.0
    %v1430 = vmax.f32 %v1100, 0.0
    %v1431 = vmax.f32 %v1102, 0.0
    %v1432 = vmax.f32 %v1213, 0.0
    %v1433 = vmax.f32 %v1215, 0.0
    %v1434 = vmax.f32 %v1326, 0.0
    %v1435 = vmax.f32 %v1328, 0.0
    %v1436 = vmax.f32 %v991, 0.0
    %v1437 = vmax.f32 %v993, 0.0
    %v1438 = vmax.f32 %v1104, 0.0
    %v1439 = vmax.f32 %v1106, 0.0
    %v1440 = vmax.f32 %v1217, 0.0
    %v1441 = vmax.f32 %v1219, 0.0
    %v1442 = vmax.f32 %v1330, 0.0
    %v1443 = vmax.f32 %v1332, 0.0
    %v1444 = vmax.f32 %v997, 0.0
    %v1445 = vmax.f32 %v999, 0.0
    %v1446 = vmax.f32 %v1110, 0.0
    %v1447 = vmax.f32 %v1112, 0.0
    %v1448 = vmax.f32 %v1223, 0.0
    %v1449 = vmax.f32 %v1225, 0.0
    %v1450 = vmax.f32 %v1336, 0.0
    %v1451 = vmax.f32 %v1338, 0.0
    %v1452 = vmax.f32 %v1001, 0.0
    %v1453 = vmax.f32 %v1003, 0.0
    %v1454 = vmax.f32 %v1114, 0.0
    %v1455 = vmax.f32 %v1116, 0.0
    %v1456 = vmax.f32 %v1227, 0.0
    %v1457 = vmax.f32 %v1229, 0.0
    %v1458 = vmax.f32 %v1340, 0.0
    %v1459 = vmax.f32 %v1342, 0.0
    %v1460 = vmax.f32 %v1007, 0.0
    %v1461 = vmax.f32 %v1009, 0.0
    %v1462 = vmax.f32 %v1120, 0.0
    %v1463 = vmax.f32 %v1122, 0.0
    %v1464 = vmax.f32 %v1233, 0.0
    %v1465 = vmax.f32 %v1235, 0.0
    %v1466 = vmax.f32 %v1346, 0.0
    %v1467 = vmax.f32 %v1348, 0.0
    %v1468 = vmax.f32 %v1011, 0.0
    %v1469 = vmax.f32 %v1013, 0.0
    %v1470 = vmax.f32 %v1124, 0.0
    %v1471 = vmax.f32 %v1126, 0.0
    %v1472 = vmax.f32 %v1237, 0.0
    %v1473 = vmax.f32 %v1239, 0.0
    %v1474 = vmax.f32 %v1350, 0.0
    %v1475 = vmax.f32 %v1352, 0.0
    %v1476 = vmax.f32 %v1017, 0.0
    %v1477 = vmax.f32 %v1019, 0.0
    %v1478 = vmax.f32 %v1130, 0.0
    %v1479 = vmax.f32 %v1132, 0.0
    %v1480 = vmax.f32 %v1243, 0.0
    %v1481 = vmax.f32 %v1245, 0.0
    %v1482 = vmax.f32 %v1356, 0.0
    %v1483 = vmax.f32 %v1358, 0.0
    %v1484 = vmax.f32 %v1021, 0.0
    %v1485 = vmax.f32 %v1023, 0.0
    %v1486 = vmax.f32 %v1134, 0.0
    %v1487 = vmax.f32 %v1136, 0.0
    %v1488 = vmax.f32 %v1247, 0.0
    %v1489 = vmax.f32 %v1249, 0.0
    %v1490 = vmax.f32 %v1360, 0.0
    %v1491 = vmax.f32 %v1362, 0.0
    %v1492 = vpack.c.bf16 %v1372, %v1364
    %v1493 = vpack.c.bf16 %v1404, %v1396
    %v1494 = vpack.c.bf16 %v1436, %v1428
    %v1495 = vpack.c.bf16 %v1468, %v1460
    %v1496 = vpack.c.bf16 %v1388, %v1380
    %v1497 = vpack.c.bf16 %v1420, %v1412
    %v1498 = vpack.c.bf16 %v1452, %v1444
    %v1499 = vpack.c.bf16 %v1484, %v1476
    %v1500 = vpack.c.bf16 %v1373, %v1365
    %v1501 = vpack.c.bf16 %v1405, %v1397
    %v1502 = vpack.c.bf16 %v1437, %v1429
    %v1503 = vpack.c.bf16 %v1469, %v1461
    %v1504 = vpack.c.bf16 %v1389, %v1381
    %v1505 = vpack.c.bf16 %v1421, %v1413
    %v1506 = vpack.c.bf16 %v1453, %v1445
    %v1507 = vpack.c.bf16 %v1485, %v1477
    %v1508 = vpack.c.bf16 %v1374, %v1366
    %v1509 = vpack.c.bf16 %v1406, %v1398
    %v1510 = vpack.c.bf16 %v1438, %v1430
    %v1511 = vpack.c.bf16 %v1470, %v1462
    %v1512 = vpack.c.bf16 %v1390, %v1382
    %v1513 = vpack.c.bf16 %v1422, %v1414
    %v1514 = vpack.c.bf16 %v1454, %v1446
    %v1515 = vpack.c.bf16 %v1486, %v1478
    %v1516 = vpack.c.bf16 %v1375, %v1367
    %v1517 = vpack.c.bf16 %v1407, %v1399
    %v1518 = vpack.c.bf16 %v1439, %v1431
    %v1519 = vpack.c.bf16 %v1471, %v1463
    %v1520 = vpack.c.bf16 %v1391, %v1383
    %v1521 = vpack.c.bf16 %v1423, %v1415
    %v1522 = vpack.c.bf16 %v1455, %v1447
    %v1523 = vpack.c.bf16 %v1487, %v1479
    %v1524 = vpack.c.bf16 %v1376, %v1368
    %v1525 = vpack.c.bf16 %v1408, %v1400
    %v1526 = vpack.c.bf16 %v1440, %v1432
    %v1527 = vpack.c.bf16 %v1472, %v1464
    %v1528 = vpack.c.bf16 %v1392, %v1384
    %v1529 = vpack.c.bf16 %v1424, %v1416
    %v1530 = vpack.c.bf16 %v1456, %v1448
    %v1531 = vpack.c.bf16 %v1488, %v1480
    %v1532 = vpack.c.bf16 %v1377, %v1369
    %v1533 = vpack.c.bf16 %v1409, %v1401
    %v1534 = vpack.c.bf16 %v1441, %v1433
    %v1535 = vpack.c.bf16 %v1473, %v1465
    %v1536 = vpack.c.bf16 %v1393, %v1385
    %v1537 = vpack.c.bf16 %v1425, %v1417
    %v1538 = vpack.c.bf16 %v1457, %v1449
    %v1539 = vpack.c.bf16 %v1489, %v1481
    %v1540 = vpack.c.bf16 %v1378, %v1370
    %v1541 = vpack.c.bf16 %v1410, %v1402
    %v1542 = vpack.c.bf16 %v1442, %v1434
    %v1543 = vpack.c.bf16 %v1474, %v1466
    %v1544 = vpack.c.bf16 %v1394, %v1386
    %v1545 = vpack.c.bf16 %v1426, %v1418
    %v1546 = vpack.c.bf16 %v1458, %v1450
    %v1547 = vpack.c.bf16 %v1490, %v1482
    %v1548 = vpack.c.bf16 %v1379, %v1371
    %v1549 = vpack.c.bf16 %v1411, %v1403
    %v1550 = vpack.c.bf16 %v1443, %v1435
    %v1551 = vpack.c.bf16 %v1475, %v1467
    %v1552 = vpack.c.bf16 %v1395, %v1387
    %v1553 = vpack.c.bf16 %v1427, %v1419
    %v1554 = vpack.c.bf16 %v1459, %v1451
    %v1555 = vpack.c.bf16 %v1491, %v1483
    %v1556 = vld [vmem:[#allocation10] sm:$0xff]
    %v1557 = vld [vmem:[#allocation10 + $0x8] sm:$0xff]
    %v1558 = vld [vmem:[#allocation10 + $0x10] sm:$0xff]
    %v1559 = vld [vmem:[#allocation10 + $0x18] sm:$0xff]
    %v1560 = vld [vmem:[#allocation10 + $0x20] sm:$0xff]
    %v1561 = vld [vmem:[#allocation10 + $0x28] sm:$0xff]
    %v1562 = vld [vmem:[#allocation10 + $0x30] sm:$0xff]
    %v1563 = vld [vmem:[#allocation10 + $0x38] sm:$0xff]
    %v1564 = vld [vmem:[#allocation10 + $0x40] sm:$0xff]
    %v1565 = vld [vmem:[#allocation10 + $0x48] sm:$0xff]
    %v1566 = vld [vmem:[#allocation10 + $0x50] sm:$0xff]
    %v1567 = vld [vmem:[#allocation10 + $0x58] sm:$0xff]
    %v1568 = vld [vmem:[#allocation10 + $0x60] sm:$0xff]
    %v1569 = vld [vmem:[#allocation10 + $0x68] sm:$0xff]
    %v1570 = vld [vmem:[#allocation10 + $0x70] sm:$0xff]
    %v1571 = vld [vmem:[#allocation10 + $0x78] sm:$0xff]
    %v1572 = vld [vmem:[#allocation10 + $0x80] sm:$0xff]
    %v1573 = vld [vmem:[#allocation10 + $0x88] sm:$0xff]
    %v1574 = vld [vmem:[#allocation10 + $0x90] sm:$0xff]
    %v1575 = vld [vmem:[#allocation10 + $0x98] sm:$0xff]
    %v1576 = vld [vmem:[#allocation10 + $0xa0] sm:$0xff]
    %v1577 = vld [vmem:[#allocation10 + $0xa8] sm:$0xff]
    %v1578 = vld [vmem:[#allocation10 + $0xb0] sm:$0xff]
    %v1579 = vld [vmem:[#allocation10 + $0xb8] sm:$0xff]
    %v1580 = vld [vmem:[#allocation10 + $0xc0] sm:$0xff]
    %v1581 = vld [vmem:[#allocation10 + $0xc8] sm:$0xff]
    %v1582 = vld [vmem:[#allocation10 + $0xd0] sm:$0xff]
    %v1583 = vld [vmem:[#allocation10 + $0xd8] sm:$0xff]
    %v1584 = vld [vmem:[#allocation10 + $0xe0] sm:$0xff]
    %v1585 = vld [vmem:[#allocation10 + $0xe8] sm:$0xff]
    %v1586 = vld [vmem:[#allocation10 + $0xf0] sm:$0xff]
    %v1587 = vld [vmem:[#allocation10 + $0xf8] sm:$0xff]
    %v1588 = vld [vmem:[#allocation10 + $0x100] sm:$0xff]
    %v1589 = vld [vmem:[#allocation10 + $0x108] sm:$0xff]
    %v1590 = vld [vmem:[#allocation10 + $0x110] sm:$0xff]
    %v1591 = vld [vmem:[#allocation10 + $0x118] sm:$0xff]
    %v1592 = vld [vmem:[#allocation10 + $0x120] sm:$0xff]
    %v1593 = vld [vmem:[#allocation10 + $0x128] sm:$0xff]
    %v1594 = vld [vmem:[#allocation10 + $0x130] sm:$0xff]
    %v1595 = vld [vmem:[#allocation10 + $0x138] sm:$0xff]
    %v1596 = vld [vmem:[#allocation10 + $0x140] sm:$0xff]
    %v1597 = vld [vmem:[#allocation10 + $0x148] sm:$0xff]
    %v1598 = vld [vmem:[#allocation10 + $0x150] sm:$0xff]
    %v1599 = vld [vmem:[#allocation10 + $0x158] sm:$0xff]
    %v1600 = vld [vmem:[#allocation10 + $0x160] sm:$0xff]
    %v1601 = vld [vmem:[#allocation10 + $0x168] sm:$0xff]
    %v1602 = vld [vmem:[#allocation10 + $0x170] sm:$0xff]
    %v1603 = vld [vmem:[#allocation10 + $0x178] sm:$0xff]
    %v1604 = vld [vmem:[#allocation10 + $0x180] sm:$0xff]
    %v1605 = vld [vmem:[#allocation10 + $0x188] sm:$0xff]
    %v1606 = vld [vmem:[#allocation10 + $0x190] sm:$0xff]
    %v1607 = vld [vmem:[#allocation10 + $0x198] sm:$0xff]
    %v1608 = vld [vmem:[#allocation10 + $0x1a0] sm:$0xff]
    %v1609 = vld [vmem:[#allocation10 + $0x1a8] sm:$0xff]
    %v1610 = vld [vmem:[#allocation10 + $0x1b0] sm:$0xff]
    %v1611 = vld [vmem:[#allocation10 + $0x1b8] sm:$0xff]
    %v1612 = vld [vmem:[#allocation10 + $0x1c0] sm:$0xff]
    %v1613 = vld [vmem:[#allocation10 + $0x1c8] sm:$0xff]
    %v1614 = vld [vmem:[#allocation10 + $0x1d0] sm:$0xff]
    %v1615 = vld [vmem:[#allocation10 + $0x1d8] sm:$0xff]
    %v1616 = vld [vmem:[#allocation10 + $0x1e0] sm:$0xff]
    %v1617 = vld [vmem:[#allocation10 + $0x1e8] sm:$0xff]
    %v1618 = vld [vmem:[#allocation10 + $0x1f0] sm:$0xff]
    %v1619 = vld [vmem:[#allocation10 + $0x1f8] sm:$0xff]
    %v1620 = vld [vmem:[#allocation10 + $0x200] sm:$0xff]
    %v1621 = vld [vmem:[#allocation10 + $0x208] sm:$0xff]
    %v1622 = vld [vmem:[#allocation10 + $0x210] sm:$0xff]
    %v1623 = vld [vmem:[#allocation10 + $0x218] sm:$0xff]
    %v1624 = vld [vmem:[#allocation10 + $0x220] sm:$0xff]
    %v1625 = vld [vmem:[#allocation10 + $0x228] sm:$0xff]
    %v1626 = vld [vmem:[#allocation10 + $0x230] sm:$0xff]
    %v1627 = vld [vmem:[#allocation10 + $0x238] sm:$0xff]
    %v1628 = vld [vmem:[#allocation10 + $0x240] sm:$0xff]
    %v1629 = vld [vmem:[#allocation10 + $0x248] sm:$0xff]
    %v1630 = vld [vmem:[#allocation10 + $0x250] sm:$0xff]
    %v1631 = vld [vmem:[#allocation10 + $0x258] sm:$0xff]
    %v1632 = vld [vmem:[#allocation10 + $0x260] sm:$0xff]
    %v1633 = vld [vmem:[#allocation10 + $0x268] sm:$0xff]
    %v1634 = vld [vmem:[#allocation10 + $0x270] sm:$0xff]
    %v1635 = vld [vmem:[#allocation10 + $0x278] sm:$0xff]
    %v1636 = vld [vmem:[#allocation10 + $0x280] sm:$0xff]
    %v1637 = vld [vmem:[#allocation10 + $0x288] sm:$0xff]
    %v1638 = vld [vmem:[#allocation10 + $0x290] sm:$0xff]
    %v1639 = vld [vmem:[#allocation10 + $0x298] sm:$0xff]
    %v1640 = vld [vmem:[#allocation10 + $0x2a0] sm:$0xff]
    %v1641 = vld [vmem:[#allocation10 + $0x2a8] sm:$0xff]
    %v1642 = vld [vmem:[#allocation10 + $0x2b0] sm:$0xff]
    %v1643 = vld [vmem:[#allocation10 + $0x2b8] sm:$0xff]
    %v1644 = vld [vmem:[#allocation10 + $0x2c0] sm:$0xff]
    %v1645 = vld [vmem:[#allocation10 + $0x2c8] sm:$0xff]
    %v1646 = vld [vmem:[#allocation10 + $0x2d0] sm:$0xff]
    %v1647 = vld [vmem:[#allocation10 + $0x2d8] sm:$0xff]
    %v1648 = vld [vmem:[#allocation10 + $0x2e0] sm:$0xff]
    %v1649 = vld [vmem:[#allocation10 + $0x2e8] sm:$0xff]
    %v1650 = vld [vmem:[#allocation10 + $0x2f0] sm:$0xff]
    %v1651 = vld [vmem:[#allocation10 + $0x2f8] sm:$0xff]
    %v1652 = vld [vmem:[#allocation10 + $0x300] sm:$0xff]
    %v1653 = vld [vmem:[#allocation10 + $0x308] sm:$0xff]
    %v1654 = vld [vmem:[#allocation10 + $0x310] sm:$0xff]
    %v1655 = vld [vmem:[#allocation10 + $0x318] sm:$0xff]
    %v1656 = vld [vmem:[#allocation10 + $0x320] sm:$0xff]
    %v1657 = vld [vmem:[#allocation10 + $0x328] sm:$0xff]
    %v1658 = vld [vmem:[#allocation10 + $0x330] sm:$0xff]
    %v1659 = vld [vmem:[#allocation10 + $0x338] sm:$0xff]
    %v1660 = vld [vmem:[#allocation10 + $0x340] sm:$0xff]
    %v1661 = vld [vmem:[#allocation10 + $0x348] sm:$0xff]
    %v1662 = vld [vmem:[#allocation10 + $0x350] sm:$0xff]
    %v1663 = vld [vmem:[#allocation10 + $0x358] sm:$0xff]
    %v1664 = vld [vmem:[#allocation10 + $0x360] sm:$0xff]
    %v1665 = vld [vmem:[#allocation10 + $0x368] sm:$0xff]
    %v1666 = vld [vmem:[#allocation10 + $0x370] sm:$0xff]
    %v1667 = vld [vmem:[#allocation10 + $0x378] sm:$0xff]
    %v1668 = vld [vmem:[#allocation10 + $0x380] sm:$0xff]
    %v1669 = vld [vmem:[#allocation10 + $0x388] sm:$0xff]
    %v1670 = vld [vmem:[#allocation10 + $0x390] sm:$0xff]
    %v1671 = vld [vmem:[#allocation10 + $0x398] sm:$0xff]
    %v1672 = vld [vmem:[#allocation10 + $0x3a0] sm:$0xff]
    %v1673 = vld [vmem:[#allocation10 + $0x3a8] sm:$0xff]
    %v1674 = vld [vmem:[#allocation10 + $0x3b0] sm:$0xff]
    %v1675 = vld [vmem:[#allocation10 + $0x3b8] sm:$0xff]
    %v1676 = vld [vmem:[#allocation10 + $0x3c0] sm:$0xff]
    %v1677 = vld [vmem:[#allocation10 + $0x3c8] sm:$0xff]
    %v1678 = vld [vmem:[#allocation10 + $0x3d0] sm:$0xff]
    %v1679 = vld [vmem:[#allocation10 + $0x3d8] sm:$0xff]
    %v1680 = vld [vmem:[#allocation10 + $0x3e0] sm:$0xff]
    %v1681 = vld [vmem:[#allocation10 + $0x3e8] sm:$0xff]
    %v1682 = vld [vmem:[#allocation10 + $0x3f0] sm:$0xff]
    %v1683 = vld [vmem:[#allocation10 + $0x3f8] sm:$0xff]
    %v1684 = vld [vmem:[#allocation10 + $0x400] sm:$0xff]
    %v1685 = vld [vmem:[#allocation10 + $0x408] sm:$0xff]
    %v1686 = vld [vmem:[#allocation10 + $0x410] sm:$0xff]
    %v1687 = vld [vmem:[#allocation10 + $0x418] sm:$0xff]
    %v1688 = vld [vmem:[#allocation10 + $0x420] sm:$0xff]
    %v1689 = vld [vmem:[#allocation10 + $0x428] sm:$0xff]
    %v1690 = vld [vmem:[#allocation10 + $0x430] sm:$0xff]
    %v1691 = vld [vmem:[#allocation10 + $0x438] sm:$0xff]
    %v1692 = vld [vmem:[#allocation10 + $0x440] sm:$0xff]
    %v1693 = vld [vmem:[#allocation10 + $0x448] sm:$0xff]
    %v1694 = vld [vmem:[#allocation10 + $0x450] sm:$0xff]
    %v1695 = vld [vmem:[#allocation10 + $0x458] sm:$0xff]
    %v1696 = vld [vmem:[#allocation10 + $0x460] sm:$0xff]
    %v1697 = vld [vmem:[#allocation10 + $0x468] sm:$0xff]
    %v1698 = vld [vmem:[#allocation10 + $0x470] sm:$0xff]
    %v1699 = vld [vmem:[#allocation10 + $0x478] sm:$0xff]
    %v1700 = vld [vmem:[#allocation10 + $0x480] sm:$0xff]
    %v1701 = vld [vmem:[#allocation10 + $0x488] sm:$0xff]
    %v1702 = vld [vmem:[#allocation10 + $0x490] sm:$0xff]
    %v1703 = vld [vmem:[#allocation10 + $0x498] sm:$0xff]
    %v1704 = vld [vmem:[#allocation10 + $0x4a0] sm:$0xff]
    %v1705 = vld [vmem:[#allocation10 + $0x4a8] sm:$0xff]
    %v1706 = vld [vmem:[#allocation10 + $0x4b0] sm:$0xff]
    %v1707 = vld [vmem:[#allocation10 + $0x4b8] sm:$0xff]
    %v1708 = vld [vmem:[#allocation10 + $0x4c0] sm:$0xff]
    %v1709 = vld [vmem:[#allocation10 + $0x4c8] sm:$0xff]
    %v1710 = vld [vmem:[#allocation10 + $0x4d0] sm:$0xff]
    %v1711 = vld [vmem:[#allocation10 + $0x4d8] sm:$0xff]
    %v1712 = vld [vmem:[#allocation10 + $0x4e0] sm:$0xff]
    %v1713 = vld [vmem:[#allocation10 + $0x4e8] sm:$0xff]
    %v1714 = vld [vmem:[#allocation10 + $0x4f0] sm:$0xff]
    %v1715 = vld [vmem:[#allocation10 + $0x4f8] sm:$0xff]
    %v1716 = vld [vmem:[#allocation10 + $0x500] sm:$0xff]
    %v1717 = vld [vmem:[#allocation10 + $0x508] sm:$0xff]
    %v1718 = vld [vmem:[#allocation10 + $0x510] sm:$0xff]
    %v1719 = vld [vmem:[#allocation10 + $0x518] sm:$0xff]
    %v1720 = vld [vmem:[#allocation10 + $0x520] sm:$0xff]
    %v1721 = vld [vmem:[#allocation10 + $0x528] sm:$0xff]
    %v1722 = vld [vmem:[#allocation10 + $0x530] sm:$0xff]
    %v1723 = vld [vmem:[#allocation10 + $0x538] sm:$0xff]
    %v1724 = vld [vmem:[#allocation10 + $0x540] sm:$0xff]
    %v1725 = vld [vmem:[#allocation10 + $0x548] sm:$0xff]
    %v1726 = vld [vmem:[#allocation10 + $0x550] sm:$0xff]
    %v1727 = vld [vmem:[#allocation10 + $0x558] sm:$0xff]
    %v1728 = vld [vmem:[#allocation10 + $0x560] sm:$0xff]
    %v1729 = vld [vmem:[#allocation10 + $0x568] sm:$0xff]
    %v1730 = vld [vmem:[#allocation10 + $0x570] sm:$0xff]
    %v1731 = vld [vmem:[#allocation10 + $0x578] sm:$0xff]
    %v1732 = vld [vmem:[#allocation10 + $0x580] sm:$0xff]
    %v1733 = vld [vmem:[#allocation10 + $0x588] sm:$0xff]
    %v1734 = vld [vmem:[#allocation10 + $0x590] sm:$0xff]
    %v1735 = vld [vmem:[#allocation10 + $0x598] sm:$0xff]
    %v1736 = vld [vmem:[#allocation10 + $0x5a0] sm:$0xff]
    %v1737 = vld [vmem:[#allocation10 + $0x5a8] sm:$0xff]
    %v1738 = vld [vmem:[#allocation10 + $0x5b0] sm:$0xff]
    %v1739 = vld [vmem:[#allocation10 + $0x5b8] sm:$0xff]
    %v1740 = vld [vmem:[#allocation10 + $0x5c0] sm:$0xff]
    %v1741 = vld [vmem:[#allocation10 + $0x5c8] sm:$0xff]
    %v1742 = vld [vmem:[#allocation10 + $0x5d0] sm:$0xff]
    %v1743 = vld [vmem:[#allocation10 + $0x5d8] sm:$0xff]
    %v1744 = vld [vmem:[#allocation10 + $0x5e0] sm:$0xff]
    %v1745 = vld [vmem:[#allocation10 + $0x5e8] sm:$0xff]
    %v1746 = vld [vmem:[#allocation10 + $0x5f0] sm:$0xff]
    %v1747 = vld [vmem:[#allocation10 + $0x5f8] sm:$0xff]
    %v1748 = vld [vmem:[%s5] sm:$0x3f]
    %v1750 = vlaneseq
    %v1751 = vshrl.u32 %v1750, 7
    %v1752 = vsub.s32 0, %v1751
    %v1753 = vrot.slane %v1748, %v1752
    %v1754 = vlaneseq
    %v1755 = vshrl.u32 %v1754, 7
    %v1756 = vsub.s32 1, %v1755
    %v1757 = vrot.slane %v1748, %v1756
    %v1758 = vlaneseq
    %v1759 = vshrl.u32 %v1758, 7
    %v1760 = vsub.s32 2, %v1759
    %v1761 = vrot.slane %v1748, %v1760
    %v1762 = vlaneseq
    %v1763 = vshrl.u32 %v1762, 7
    %v1764 = vsub.s32 3, %v1763
    %v1765 = vrot.slane %v1748, %v1764
    %v1766 = vlaneseq
    %v1767 = vshrl.u32 %v1766, 7
    %v1768 = vsub.s32 4, %v1767
    %v1769 = vrot.slane %v1748, %v1768
    %v1770 = vlaneseq
    %v1771 = vshrl.u32 %v1770, 7
    %v1772 = vsub.s32 5, %v1771
    %v1773 = vrot.slane %v1748, %v1772
    %v1972 = vunpack.c.l.b16 %v1556
    %v1973 = vunpack.c.h.b16 %v1556
    %v1974 = vunpack.c.l.b16 %v1557
    %v1975 = vunpack.c.h.b16 %v1557
    %v1976 = vunpack.c.l.b16 %v1558
    %v1977 = vunpack.c.h.b16 %v1558
    %v1978 = vunpack.c.l.b16 %v1559
    %v1979 = vunpack.c.h.b16 %v1559
    %v1980 = vunpack.c.l.b16 %v1560
    %v1981 = vunpack.c.h.b16 %v1560
    %v1982 = vunpack.c.l.b16 %v1561
    %v1983 = vunpack.c.h.b16 %v1561
    %v1984 = vunpack.c.l.b16 %v1562
    %v1985 = vunpack.c.h.b16 %v1562
    %v1986 = vunpack.c.l.b16 %v1563
    %v1987 = vunpack.c.h.b16 %v1563
    %v1988 = vunpack.c.l.b16 %v1564
    %v1989 = vunpack.c.h.b16 %v1564
    %v1990 = vunpack.c.l.b16 %v1565
    %v1991 = vunpack.c.h.b16 %v1565
    %v1992 = vunpack.c.l.b16 %v1566
    %v1993 = vunpack.c.h.b16 %v1566
    %v1994 = vunpack.c.l.b16 %v1567
    %v1995 = vunpack.c.h.b16 %v1567
    %v1996 = vunpack.c.l.b16 %v1568
    %v1997 = vunpack.c.h.b16 %v1568
    %v1998 = vunpack.c.l.b16 %v1569
    %v1999 = vunpack.c.h.b16 %v1569
    %v2000 = vunpack.c.l.b16 %v1570
    %v2001 = vunpack.c.h.b16 %v1570
    %v2002 = vunpack.c.l.b16 %v1571
    %v2003 = vunpack.c.h.b16 %v1571
    %v2004 = vunpack.c.l.b16 %v1572
    %v2005 = vunpack.c.h.b16 %v1572
    %v2006 = vunpack.c.l.b16 %v1573
    %v2007 = vunpack.c.h.b16 %v1573
    %v2008 = vunpack.c.l.b16 %v1574
    %v2009 = vunpack.c.h.b16 %v1574
    %v2010 = vunpack.c.l.b16 %v1575
    %v2011 = vunpack.c.h.b16 %v1575
    %v2012 = vunpack.c.l.b16 %v1576
    %v2013 = vunpack.c.h.b16 %v1576
    %v2014 = vunpack.c.l.b16 %v1577
    %v2015 = vunpack.c.h.b16 %v1577
    %v2016 = vunpack.c.l.b16 %v1578
    %v2017 = vunpack.c.h.b16 %v1578
    %v2018 = vunpack.c.l.b16 %v1579
    %v2019 = vunpack.c.h.b16 %v1579
    %v2020 = vunpack.c.l.b16 %v1580
    %v2021 = vunpack.c.h.b16 %v1580
    %v2022 = vunpack.c.l.b16 %v1581
    %v2023 = vunpack.c.h.b16 %v1581
    %v2024 = vunpack.c.l.b16 %v1582
    %v2025 = vunpack.c.h.b16 %v1582
    %v2026 = vunpack.c.l.b16 %v1583
    %v2027 = vunpack.c.h.b16 %v1583
    %v2028 = vunpack.c.l.b16 %v1584
    %v2029 = vunpack.c.h.b16 %v1584
    %v2030 = vunpack.c.l.b16 %v1585
    %v2031 = vunpack.c.h.b16 %v1585
    %v2032 = vunpack.c.l.b16 %v1586
    %v2033 = vunpack.c.h.b16 %v1586
    %v2034 = vunpack.c.l.b16 %v1587
    %v2035 = vunpack.c.h.b16 %v1587
    %v2036 = vunpack.c.l.b16 %v1588
    %v2037 = vunpack.c.h.b16 %v1588
    %v2038 = vunpack.c.l.b16 %v1589
    %v2039 = vunpack.c.h.b16 %v1589
    %v2040 = vunpack.c.l.b16 %v1590
    %v2041 = vunpack.c.h.b16 %v1590
    %v2042 = vunpack.c.l.b16 %v1591
    %v2043 = vunpack.c.h.b16 %v1591
    %v2044 = vunpack.c.l.b16 %v1592
    %v2045 = vunpack.c.h.b16 %v1592
    %v2046 = vunpack.c.l.b16 %v1593
    %v2047 = vunpack.c.h.b16 %v1593
    %v2048 = vunpack.c.l.b16 %v1594
    %v2049 = vunpack.c.h.b16 %v1594
    %v2050 = vunpack.c.l.b16 %v1595
    %v2051 = vunpack.c.h.b16 %v1595
    %v2052 = vunpack.c.l.b16 %v1596
    %v2053 = vunpack.c.h.b16 %v1596
    %v2054 = vunpack.c.l.b16 %v1597
    %v2055 = vunpack.c.h.b16 %v1597
    %v2056 = vunpack.c.l.b16 %v1598
    %v2057 = vunpack.c.h.b16 %v1598
    %v2058 = vunpack.c.l.b16 %v1599
    %v2059 = vunpack.c.h.b16 %v1599
    %v2060 = vunpack.c.l.b16 %v1600
    %v2061 = vunpack.c.h.b16 %v1600
    %v2062 = vunpack.c.l.b16 %v1601
    %v2063 = vunpack.c.h.b16 %v1601
    %v2064 = vunpack.c.l.b16 %v1602
    %v2065 = vunpack.c.h.b16 %v1602
    %v2066 = vunpack.c.l.b16 %v1603
    %v2067 = vunpack.c.h.b16 %v1603
    %v2068 = vunpack.c.l.b16 %v1604
    %v2069 = vunpack.c.h.b16 %v1604
    %v2070 = vunpack.c.l.b16 %v1605
    %v2071 = vunpack.c.h.b16 %v1605
    %v2072 = vunpack.c.l.b16 %v1606
    %v2073 = vunpack.c.h.b16 %v1606
    %v2074 = vunpack.c.l.b16 %v1607
    %v2075 = vunpack.c.h.b16 %v1607
    %v2076 = vunpack.c.l.b16 %v1608
    %v2077 = vunpack.c.h.b16 %v1608
    %v2078 = vunpack.c.l.b16 %v1609
    %v2079 = vunpack.c.h.b16 %v1609
    %v2080 = vunpack.c.l.b16 %v1610
    %v2081 = vunpack.c.h.b16 %v1610
    %v2082 = vunpack.c.l.b16 %v1611
    %v2083 = vunpack.c.h.b16 %v1611
    %v2084 = vunpack.c.l.b16 %v1612
    %v2085 = vunpack.c.h.b16 %v1612
    %v2086 = vunpack.c.l.b16 %v1613
    %v2087 = vunpack.c.h.b16 %v1613
    %v2088 = vunpack.c.l.b16 %v1614
    %v2089 = vunpack.c.h.b16 %v1614
    %v2090 = vunpack.c.l.b16 %v1615
    %v2091 = vunpack.c.h.b16 %v1615
    %v2092 = vunpack.c.l.b16 %v1616
    %v2093 = vunpack.c.h.b16 %v1616
    %v2094 = vunpack.c.l.b16 %v1617
    %v2095 = vunpack.c.h.b16 %v1617
    %v2096 = vunpack.c.l.b16 %v1618
    %v2097 = vunpack.c.h.b16 %v1618
    %v2098 = vunpack.c.l.b16 %v1619
    %v2099 = vunpack.c.h.b16 %v1619
    %v2100 = vunpack.c.l.b16 %v1620
    %v2101 = vunpack.c.h.b16 %v1620
    %v2102 = vunpack.c.l.b16 %v1621
    %v2103 = vunpack.c.h.b16 %v1621
    %v2104 = vunpack.c.l.b16 %v1622
    %v2105 = vunpack.c.h.b16 %v1622
    %v2106 = vunpack.c.l.b16 %v1623
    %v2107 = vunpack.c.h.b16 %v1623
    %v2108 = vunpack.c.l.b16 %v1624
    %v2109 = vunpack.c.h.b16 %v1624
    %v2110 = vunpack.c.l.b16 %v1625
    %v2111 = vunpack.c.h.b16 %v1625
    %v2112 = vunpack.c.l.b16 %v1626
    %v2113 = vunpack.c.h.b16 %v1626
    %v2114 = vunpack.c.l.b16 %v1627
    %v2115 = vunpack.c.h.b16 %v1627
    %v2116 = vunpack.c.l.b16 %v1628
    %v2117 = vunpack.c.h.b16 %v1628
    %v2118 = vunpack.c.l.b16 %v1629
    %v2119 = vunpack.c.h.b16 %v1629
    %v2120 = vunpack.c.l.b16 %v1630
    %v2121 = vunpack.c.h.b16 %v1630
    %v2122 = vunpack.c.l.b16 %v1631
    %v2123 = vunpack.c.h.b16 %v1631
    %v2124 = vunpack.c.l.b16 %v1632
    %v2125 = vunpack.c.h.b16 %v1632
    %v2126 = vunpack.c.l.b16 %v1633
    %v2127 = vunpack.c.h.b16 %v1633
    %v2128 = vunpack.c.l.b16 %v1634
    %v2129 = vunpack.c.h.b16 %v1634
    %v2130 = vunpack.c.l.b16 %v1635
    %v2131 = vunpack.c.h.b16 %v1635
    %v2132 = vunpack.c.l.b16 %v1636
    %v2133 = vunpack.c.h.b16 %v1636
    %v2134 = vunpack.c.l.b16 %v1637
    %v2135 = vunpack.c.h.b16 %v1637
    %v2136 = vunpack.c.l.b16 %v1638
    %v2137 = vunpack.c.h.b16 %v1638
    %v2138 = vunpack.c.l.b16 %v1639
    %v2139 = vunpack.c.h.b16 %v1639
    %v2140 = vunpack.c.l.b16 %v1640
    %v2141 = vunpack.c.h.b16 %v1640
    %v2142 = vunpack.c.l.b16 %v1641
    %v2143 = vunpack.c.h.b16 %v1641
    %v2144 = vunpack.c.l.b16 %v1642
    %v2145 = vunpack.c.h.b16 %v1642
    %v2146 = vunpack.c.l.b16 %v1643
    %v2147 = vunpack.c.h.b16 %v1643
    %v2148 = vunpack.c.l.b16 %v1644
    %v2149 = vunpack.c.h.b16 %v1644
    %v2150 = vunpack.c.l.b16 %v1645
    %v2151 = vunpack.c.h.b16 %v1645
    %v2152 = vunpack.c.l.b16 %v1646
    %v2153 = vunpack.c.h.b16 %v1646
    %v2154 = vunpack.c.l.b16 %v1647
    %v2155 = vunpack.c.h.b16 %v1647
    %v2156 = vunpack.c.l.b16 %v1648
    %v2157 = vunpack.c.h.b16 %v1648
    %v2158 = vunpack.c.l.b16 %v1649
    %v2159 = vunpack.c.h.b16 %v1649
    %v2160 = vunpack.c.l.b16 %v1650
    %v2161 = vunpack.c.h.b16 %v1650
    %v2162 = vunpack.c.l.b16 %v1651
    %v2163 = vunpack.c.h.b16 %v1651
    %v2164 = vunpack.c.l.b16 %v1652
    %v2165 = vunpack.c.h.b16 %v1652
    %v2166 = vunpack.c.l.b16 %v1653
    %v2167 = vunpack.c.h.b16 %v1653
    %v2168 = vunpack.c.l.b16 %v1654
    %v2169 = vunpack.c.h.b16 %v1654
    %v2170 = vunpack.c.l.b16 %v1655
    %v2171 = vunpack.c.h.b16 %v1655
    %v2172 = vunpack.c.l.b16 %v1656
    %v2173 = vunpack.c.h.b16 %v1656
    %v2174 = vunpack.c.l.b16 %v1657
    %v2175 = vunpack.c.h.b16 %v1657
    %v2176 = vunpack.c.l.b16 %v1658
    %v2177 = vunpack.c.h.b16 %v1658
    %v2178 = vunpack.c.l.b16 %v1659
    %v2179 = vunpack.c.h.b16 %v1659
    %v2180 = vunpack.c.l.b16 %v1660
    %v2181 = vunpack.c.h.b16 %v1660
    %v2182 = vunpack.c.l.b16 %v1661
    %v2183 = vunpack.c.h.b16 %v1661
    %v2184 = vunpack.c.l.b16 %v1662
    %v2185 = vunpack.c.h.b16 %v1662
    %v2186 = vunpack.c.l.b16 %v1663
    %v2187 = vunpack.c.h.b16 %v1663
    %v2188 = vunpack.c.l.b16 %v1664
    %v2189 = vunpack.c.h.b16 %v1664
    %v2190 = vunpack.c.l.b16 %v1665
    %v2191 = vunpack.c.h.b16 %v1665
    %v2192 = vunpack.c.l.b16 %v1666
    %v2193 = vunpack.c.h.b16 %v1666
    %v2194 = vunpack.c.l.b16 %v1667
    %v2195 = vunpack.c.h.b16 %v1667
    %v2196 = vunpack.c.l.b16 %v1668
    %v2197 = vunpack.c.h.b16 %v1668
    %v2198 = vunpack.c.l.b16 %v1669
    %v2199 = vunpack.c.h.b16 %v1669
    %v2200 = vunpack.c.l.b16 %v1670
    %v2201 = vunpack.c.h.b16 %v1670
    %v2202 = vunpack.c.l.b16 %v1671
    %v2203 = vunpack.c.h.b16 %v1671
    %v2204 = vunpack.c.l.b16 %v1672
    %v2205 = vunpack.c.h.b16 %v1672
    %v2206 = vunpack.c.l.b16 %v1673
    %v2207 = vunpack.c.h.b16 %v1673
    %v2208 = vunpack.c.l.b16 %v1674
    %v2209 = vunpack.c.h.b16 %v1674
    %v2210 = vunpack.c.l.b16 %v1675
    %v2211 = vunpack.c.h.b16 %v1675
    %v2212 = vunpack.c.l.b16 %v1676
    %v2213 = vunpack.c.h.b16 %v1676
    %v2214 = vunpack.c.l.b16 %v1677
    %v2215 = vunpack.c.h.b16 %v1677
    %v2216 = vunpack.c.l.b16 %v1678
    %v2217 = vunpack.c.h.b16 %v1678
    %v2218 = vunpack.c.l.b16 %v1679
    %v2219 = vunpack.c.h.b16 %v1679
    %v2220 = vunpack.c.l.b16 %v1680
    %v2221 = vunpack.c.h.b16 %v1680
    %v2222 = vunpack.c.l.b16 %v1681
    %v2223 = vunpack.c.h.b16 %v1681
    %v2224 = vunpack.c.l.b16 %v1682
    %v2225 = vunpack.c.h.b16 %v1682
    %v2226 = vunpack.c.l.b16 %v1683
    %v2227 = vunpack.c.h.b16 %v1683
    %v2228 = vunpack.c.l.b16 %v1684
    %v2229 = vunpack.c.h.b16 %v1684
    %v2230 = vunpack.c.l.b16 %v1685
    %v2231 = vunpack.c.h.b16 %v1685
    %v2232 = vunpack.c.l.b16 %v1686
    %v2233 = vunpack.c.h.b16 %v1686
    %v2234 = vunpack.c.l.b16 %v1687
    %v2235 = vunpack.c.h.b16 %v1687
    %v2236 = vunpack.c.l.b16 %v1688
    %v2237 = vunpack.c.h.b16 %v1688
    %v2238 = vunpack.c.l.b16 %v1689
    %v2239 = vunpack.c.h.b16 %v1689
    %v2240 = vunpack.c.l.b16 %v1690
    %v2241 = vunpack.c.h.b16 %v1690
    %v2242 = vunpack.c.l.b16 %v1691
    %v2243 = vunpack.c.h.b16 %v1691
    %v2244 = vunpack.c.l.b16 %v1692
    %v2245 = vunpack.c.h.b16 %v1692
    %v2246 = vunpack.c.l.b16 %v1693
    %v2247 = vunpack.c.h.b16 %v1693
    %v2248 = vunpack.c.l.b16 %v1694
    %v2249 = vunpack.c.h.b16 %v1694
    %v2250 = vunpack.c.l.b16 %v1695
    %v2251 = vunpack.c.h.b16 %v1695
    %v2252 = vunpack.c.l.b16 %v1696
    %v2253 = vunpack.c.h.b16 %v1696
    %v2254 = vunpack.c.l.b16 %v1697
    %v2255 = vunpack.c.h.b16 %v1697
    %v2256 = vunpack.c.l.b16 %v1698
    %v2257 = vunpack.c.h.b16 %v1698
    %v2258 = vunpack.c.l.b16 %v1699
    %v2259 = vunpack.c.h.b16 %v1699
    %v2260 = vunpack.c.l.b16 %v1700
    %v2261 = vunpack.c.h.b16 %v1700
    %v2262 = vunpack.c.l.b16 %v1701
    %v2263 = vunpack.c.h.b16 %v1701
    %v2264 = vunpack.c.l.b16 %v1702
    %v2265 = vunpack.c.h.b16 %v1702
    %v2266 = vunpack.c.l.b16 %v1703
    %v2267 = vunpack.c.h.b16 %v1703
    %v2268 = vunpack.c.l.b16 %v1704
    %v2269 = vunpack.c.h.b16 %v1704
    %v2270 = vunpack.c.l.b16 %v1705
    %v2271 = vunpack.c.h.b16 %v1705
    %v2272 = vunpack.c.l.b16 %v1706
    %v2273 = vunpack.c.h.b16 %v1706
    %v2274 = vunpack.c.l.b16 %v1707
    %v2275 = vunpack.c.h.b16 %v1707
    %v2276 = vunpack.c.l.b16 %v1708
    %v2277 = vunpack.c.h.b16 %v1708
    %v2278 = vunpack.c.l.b16 %v1709
    %v2279 = vunpack.c.h.b16 %v1709
    %v2280 = vunpack.c.l.b16 %v1710
    %v2281 = vunpack.c.h.b16 %v1710
    %v2282 = vunpack.c.l.b16 %v1711
    %v2283 = vunpack.c.h.b16 %v1711
    %v2284 = vunpack.c.l.b16 %v1712
    %v2285 = vunpack.c.h.b16 %v1712
    %v2286 = vunpack.c.l.b16 %v1713
    %v2287 = vunpack.c.h.b16 %v1713
    %v2288 = vunpack.c.l.b16 %v1714
    %v2289 = vunpack.c.h.b16 %v1714
    %v2290 = vunpack.c.l.b16 %v1715
    %v2291 = vunpack.c.h.b16 %v1715
    %v2292 = vunpack.c.l.b16 %v1716
    %v2293 = vunpack.c.h.b16 %v1716
    %v2294 = vunpack.c.l.b16 %v1717
    %v2295 = vunpack.c.h.b16 %v1717
    %v2296 = vunpack.c.l.b16 %v1718
    %v2297 = vunpack.c.h.b16 %v1718
    %v2298 = vunpack.c.l.b16 %v1719
    %v2299 = vunpack.c.h.b16 %v1719
    %v2300 = vunpack.c.l.b16 %v1720
    %v2301 = vunpack.c.h.b16 %v1720
    %v2302 = vunpack.c.l.b16 %v1721
    %v2303 = vunpack.c.h.b16 %v1721
    %v2304 = vunpack.c.l.b16 %v1722
    %v2305 = vunpack.c.h.b16 %v1722
    %v2306 = vunpack.c.l.b16 %v1723
    %v2307 = vunpack.c.h.b16 %v1723
    %v2308 = vunpack.c.l.b16 %v1724
    %v2309 = vunpack.c.h.b16 %v1724
    %v2310 = vunpack.c.l.b16 %v1725
    %v2311 = vunpack.c.h.b16 %v1725
    %v2312 = vunpack.c.l.b16 %v1726
    %v2313 = vunpack.c.h.b16 %v1726
    %v2314 = vunpack.c.l.b16 %v1727
    %v2315 = vunpack.c.h.b16 %v1727
    %v2316 = vunpack.c.l.b16 %v1728
    %v2317 = vunpack.c.h.b16 %v1728
    %v2318 = vunpack.c.l.b16 %v1729
    %v2319 = vunpack.c.h.b16 %v1729
    %v2320 = vunpack.c.l.b16 %v1730
    %v2321 = vunpack.c.h.b16 %v1730
    %v2322 = vunpack.c.l.b16 %v1731
    %v2323 = vunpack.c.h.b16 %v1731
    %v2324 = vunpack.c.l.b16 %v1732
    %v2325 = vunpack.c.h.b16 %v1732
    %v2326 = vunpack.c.l.b16 %v1733
    %v2327 = vunpack.c.h.b16 %v1733
    %v2328 = vunpack.c.l.b16 %v1734
    %v2329 = vunpack.c.h.b16 %v1734
    %v2330 = vunpack.c.l.b16 %v1735
    %v2331 = vunpack.c.h.b16 %v1735
    %v2332 = vunpack.c.l.b16 %v1736
    %v2333 = vunpack.c.h.b16 %v1736
    %v2334 = vunpack.c.l.b16 %v1737
    %v2335 = vunpack.c.h.b16 %v1737
    %v2336 = vunpack.c.l.b16 %v1738
    %v2337 = vunpack.c.h.b16 %v1738
    %v2338 = vunpack.c.l.b16 %v1739
    %v2339 = vunpack.c.h.b16 %v1739
    %v2340 = vunpack.c.l.b16 %v1740
    %v2341 = vunpack.c.h.b16 %v1740
    %v2342 = vunpack.c.l.b16 %v1741
    %v2343 = vunpack.c.h.b16 %v1741
    %v2344 = vunpack.c.l.b16 %v1742
    %v2345 = vunpack.c.h.b16 %v1742
    %v2346 = vunpack.c.l.b16 %v1743
    %v2347 = vunpack.c.h.b16 %v1743
    %v2348 = vunpack.c.l.b16 %v1744
    %v2349 = vunpack.c.h.b16 %v1744
    %v2350 = vunpack.c.l.b16 %v1745
    %v2351 = vunpack.c.h.b16 %v1745
    %v2352 = vunpack.c.l.b16 %v1746
    %v2353 = vunpack.c.h.b16 %v1746
    %v2354 = vunpack.c.l.b16 %v1747
    %v2355 = vunpack.c.h.b16 %v1747
    %v2356 = vpack.c.b16 %v1978, %v1972
    %v2357 = vpack.c.b16 %v1979, %v1973
    %v2358 = vpack.c.b16 %v1980, %v1974
    %v2359 = vpack.c.b16 %v1981, %v1975
    %v2360 = vpack.c.b16 %v1982, %v1976
    %v2361 = vpack.c.b16 %v1983, %v1977
    %v2362 = vpack.c.b16 %v1990, %v1984
    %v2363 = vpack.c.b16 %v1991, %v1985
    %v2364 = vpack.c.b16 %v1992, %v1986
    %v2365 = vpack.c.b16 %v1993, %v1987
    %v2366 = vpack.c.b16 %v1994, %v1988
    %v2367 = vpack.c.b16 %v1995, %v1989
    %v2368 = vpack.c.b16 %v2002, %v1996
    %v2369 = vpack.c.b16 %v2003, %v1997
    %v2370 = vpack.c.b16 %v2004, %v1998
    %v2371 = vpack.c.b16 %v2005, %v1999
    %v2372 = vpack.c.b16 %v2006, %v2000
    %v2373 = vpack.c.b16 %v2007, %v2001
    %v2374 = vpack.c.b16 %v2014, %v2008
    %v2375 = vpack.c.b16 %v2015, %v2009
    %v2376 = vpack.c.b16 %v2016, %v2010
    %v2377 = vpack.c.b16 %v2017, %v2011
    %v2378 = vpack.c.b16 %v2018, %v2012
    %v2379 = vpack.c.b16 %v2019, %v2013
    %v2380 = vpack.c.b16 %v2026, %v2020
    %v2381 = vpack.c.b16 %v2027, %v2021
    %v2382 = vpack.c.b16 %v2028, %v2022
    %v2383 = vpack.c.b16 %v2029, %v2023
    %v2384 = vpack.c.b16 %v2030, %v2024
    %v2385 = vpack.c.b16 %v2031, %v2025
    %v2386 = vpack.c.b16 %v2038, %v2032
    %v2387 = vpack.c.b16 %v2039, %v2033
    %v2388 = vpack.c.b16 %v2040, %v2034
    %v2389 = vpack.c.b16 %v2041, %v2035
    %v2390 = vpack.c.b16 %v2042, %v2036
    %v2391 = vpack.c.b16 %v2043, %v2037
    %v2392 = vpack.c.b16 %v2050, %v2044
    %v2393 = vpack.c.b16 %v2051, %v2045
    %v2394 = vpack.c.b16 %v2052, %v2046
    %v2395 = vpack.c.b16 %v2053, %v2047
    %v2396 = vpack.c.b16 %v2054, %v2048
    %v2397 = vpack.c.b16 %v2055, %v2049
    %v2398 = vpack.c.b16 %v2062, %v2056
    %v2399 = vpack.c.b16 %v2063, %v2057
    %v2400 = vpack.c.b16 %v2064, %v2058
    %v2401 = vpack.c.b16 %v2065, %v2059
    %v2402 = vpack.c.b16 %v2066, %v2060
    %v2403 = vpack.c.b16 %v2067, %v2061
    %v2404 = vpack.c.b16 %v2074, %v2068
    %v2405 = vpack.c.b16 %v2075, %v2069
    %v2406 = vpack.c.b16 %v2076, %v2070
    %v2407 = vpack.c.b16 %v2077, %v2071
    %v2408 = vpack.c.b16 %v2078, %v2072
    %v2409 = vpack.c.b16 %v2079, %v2073
    %v2410 = vpack.c.b16 %v2086, %v2080
    %v2411 = vpack.c.b16 %v2087, %v2081
    %v2412 = vpack.c.b16 %v2088, %v2082
    %v2413 = vpack.c.b16 %v2089, %v2083
    %v2414 = vpack.c.b16 %v2090, %v2084
    %v2415 = vpack.c.b16 %v2091, %v2085
    %v2416 = vpack.c.b16 %v2098, %v2092
    %v2417 = vpack.c.b16 %v2099, %v2093
    %v2418 = vpack.c.b16 %v2100, %v2094
    %v2419 = vpack.c.b16 %v2101, %v2095
    %v2420 = vpack.c.b16 %v2102, %v2096
    %v2421 = vpack.c.b16 %v2103, %v2097
    %v2422 = vpack.c.b16 %v2110, %v2104
    %v2423 = vpack.c.b16 %v2111, %v2105
    %v2424 = vpack.c.b16 %v2112, %v2106
    %v2425 = vpack.c.b16 %v2113, %v2107
    %v2426 = vpack.c.b16 %v2114, %v2108
    %v2427 = vpack.c.b16 %v2115, %v2109
    %v2428 = vpack.c.b16 %v2122, %v2116
    %v2429 = vpack.c.b16 %v2123, %v2117
    %v2430 = vpack.c.b16 %v2124, %v2118
    %v2431 = vpack.c.b16 %v2125, %v2119
    %v2432 = vpack.c.b16 %v2126, %v2120
    %v2433 = vpack.c.b16 %v2127, %v2121
    %v2434 = vpack.c.b16 %v2134, %v2128
    %v2435 = vpack.c.b16 %v2135, %v2129
    %v2436 = vpack.c.b16 %v2136, %v2130
    %v2437 = vpack.c.b16 %v2137, %v2131
    %v2438 = vpack.c.b16 %v2138, %v2132
    %v2439 = vpack.c.b16 %v2139, %v2133
    %v2440 = vpack.c.b16 %v2146, %v2140
    %v2441 = vpack.c.b16 %v2147, %v2141
    %v2442 = vpack.c.b16 %v2148, %v2142
    %v2443 = vpack.c.b16 %v2149, %v2143
    %v2444 = vpack.c.b16 %v2150, %v2144
    %v2445 = vpack.c.b16 %v2151, %v2145
    %v2446 = vpack.c.b16 %v2158, %v2152
    %v2447 = vpack.c.b16 %v2159, %v2153
    %v2448 = vpack.c.b16 %v2160, %v2154
    %v2449 = vpack.c.b16 %v2161, %v2155
    %v2450 = vpack.c.b16 %v2162, %v2156
    %v2451 = vpack.c.b16 %v2163, %v2157
    %v2452 = vpack.c.b16 %v2170, %v2164
    %v2453 = vpack.c.b16 %v2171, %v2165
    %v2454 = vpack.c.b16 %v2172, %v2166
    %v2455 = vpack.c.b16 %v2173, %v2167
    %v2456 = vpack.c.b16 %v2174, %v2168
    %v2457 = vpack.c.b16 %v2175, %v2169
    %v2458 = vpack.c.b16 %v2182, %v2176
    %v2459 = vpack.c.b16 %v2183, %v2177
    %v2460 = vpack.c.b16 %v2184, %v2178
    %v2461 = vpack.c.b16 %v2185, %v2179
    %v2462 = vpack.c.b16 %v2186, %v2180
    %v2463 = vpack.c.b16 %v2187, %v2181
    %v2464 = vpack.c.b16 %v2194, %v2188
    %v2465 = vpack.c.b16 %v2195, %v2189
    %v2466 = vpack.c.b16 %v2196, %v2190
    %v2467 = vpack.c.b16 %v2197, %v2191
    %v2468 = vpack.c.b16 %v2198, %v2192
    %v2469 = vpack.c.b16 %v2199, %v2193
    %v2470 = vpack.c.b16 %v2206, %v2200
    %v2471 = vpack.c.b16 %v2207, %v2201
    %v2472 = vpack.c.b16 %v2208, %v2202
    %v2473 = vpack.c.b16 %v2209, %v2203
    %v2474 = vpack.c.b16 %v2210, %v2204
    %v2475 = vpack.c.b16 %v2211, %v2205
    %v2476 = vpack.c.b16 %v2218, %v2212
    %v2477 = vpack.c.b16 %v2219, %v2213
    %v2478 = vpack.c.b16 %v2220, %v2214
    %v2479 = vpack.c.b16 %v2221, %v2215
    %v2480 = vpack.c.b16 %v2222, %v2216
    %v2481 = vpack.c.b16 %v2223, %v2217
    %v2482 = vpack.c.b16 %v2230, %v2224
    %v2483 = vpack.c.b16 %v2231, %v2225
    %v2484 = vpack.c.b16 %v2232, %v2226
    %v2485 = vpack.c.b16 %v2233, %v2227
    %v2486 = vpack.c.b16 %v2234, %v2228
    %v2487 = vpack.c.b16 %v2235, %v2229
    %v2488 = vpack.c.b16 %v2242, %v2236
    %v2489 = vpack.c.b16 %v2243, %v2237
    %v2490 = vpack.c.b16 %v2244, %v2238
    %v2491 = vpack.c.b16 %v2245, %v2239
    %v2492 = vpack.c.b16 %v2246, %v2240
    %v2493 = vpack.c.b16 %v2247, %v2241
    %v2494 = vpack.c.b16 %v2254, %v2248
    %v2495 = vpack.c.b16 %v2255, %v2249
    %v2496 = vpack.c.b16 %v2256, %v2250
    %v2497 = vpack.c.b16 %v2257, %v2251
    %v2498 = vpack.c.b16 %v2258, %v2252
    %v2499 = vpack.c.b16 %v2259, %v2253
    %v2500 = vpack.c.b16 %v2266, %v2260
    %v2501 = vpack.c.b16 %v2267, %v2261
    %v2502 = vpack.c.b16 %v2268, %v2262
    %v2503 = vpack.c.b16 %v2269, %v2263
    %v2504 = vpack.c.b16 %v2270, %v2264
    %v2505 = vpack.c.b16 %v2271, %v2265
    %v2506 = vpack.c.b16 %v2278, %v2272
    %v2507 = vpack.c.b16 %v2279, %v2273
    %v2508 = vpack.c.b16 %v2280, %v2274
    %v2509 = vpack.c.b16 %v2281, %v2275
    %v2510 = vpack.c.b16 %v2282, %v2276
    %v2511 = vpack.c.b16 %v2283, %v2277
    %v2512 = vpack.c.b16 %v2290, %v2284
    %v2513 = vpack.c.b16 %v2291, %v2285
    %v2514 = vpack.c.b16 %v2292, %v2286
    %v2515 = vpack.c.b16 %v2293, %v2287
    %v2516 = vpack.c.b16 %v2294, %v2288
    %v2517 = vpack.c.b16 %v2295, %v2289
    %v2518 = vpack.c.b16 %v2302, %v2296
    %v2519 = vpack.c.b16 %v2303, %v2297
    %v2520 = vpack.c.b16 %v2304, %v2298
    %v2521 = vpack.c.b16 %v2305, %v2299
    %v2522 = vpack.c.b16 %v2306, %v2300
    %v2523 = vpack.c.b16 %v2307, %v2301
    %v2524 = vpack.c.b16 %v2314, %v2308
    %v2525 = vpack.c.b16 %v2315, %v2309
    %v2526 = vpack.c.b16 %v2316, %v2310
    %v2527 = vpack.c.b16 %v2317, %v2311
    %v2528 = vpack.c.b16 %v2318, %v2312
    %v2529 = vpack.c.b16 %v2319, %v2313
    %v2530 = vpack.c.b16 %v2326, %v2320
    %v2531 = vpack.c.b16 %v2327, %v2321
    %v2532 = vpack.c.b16 %v2328, %v2322
    %v2533 = vpack.c.b16 %v2329, %v2323
    %v2534 = vpack.c.b16 %v2330, %v2324
    %v2535 = vpack.c.b16 %v2331, %v2325
    %v2536 = vpack.c.b16 %v2338, %v2332
    %v2537 = vpack.c.b16 %v2339, %v2333
    %v2538 = vpack.c.b16 %v2340, %v2334
    %v2539 = vpack.c.b16 %v2341, %v2335
    %v2540 = vpack.c.b16 %v2342, %v2336
    %v2541 = vpack.c.b16 %v2343, %v2337
    %v2542 = vpack.c.b16 %v2350, %v2344
    %v2543 = vpack.c.b16 %v2351, %v2345
    %v2544 = vpack.c.b16 %v2352, %v2346
    %v2545 = vpack.c.b16 %v2353, %v2347
    %v2546 = vpack.c.b16 %v2354, %v2348
    %v2547 = vpack.c.b16 %v2355, %v2349
    %2740 = vmatprep.subr.bf16.mxu0 %v2399
    %2741 = vmatpush1.bf16.msra.mxu0 %v2398
    %2742 = vmatprep.subr.bf16.mxu0 %v2393
    %2743 = vmatpush1.bf16.msra.mxu0 %v2392
    %2744 = vmatprep.subr.bf16.mxu0 %v2387
    %2745 = vmatpush1.bf16.msra.mxu0 %v2386
    %2746 = vmatprep.subr.bf16.mxu0 %v2381
    %2747 = vmatpush1.bf16.msra.mxu0 %v2380
    %2748 = vmatprep.subr.bf16.mxu0 %v2375
    %2749 = vmatpush1.bf16.msra.mxu0 %v2374
    %2750 = vmatprep.subr.bf16.mxu0 %v2369
    %2751 = vmatpush1.bf16.msra.mxu0 %v2368
    %2752 = vmatprep.subr.bf16.mxu0 %v2363
    %2753 = vmatpush1.bf16.msra.mxu0 %v2362
    %2754 = vmatprep.subr.bf16.mxu0 %v2357
    %2755 = vmatpush1.bf16.msra.mxu0 %v2356
    %2756 = vmatprep.subr.bf16.mxu0 %v2447
    %2757 = vmatpush2.bf16.msra.mxu0 %v2446
    %2758 = vmatprep.subr.bf16.mxu0 %v2441
    %2759 = vmatpush2.bf16.msra.mxu0 %v2440
    %2760 = vmatprep.subr.bf16.mxu0 %v2435
    %2761 = vmatpush2.bf16.msra.mxu0 %v2434
    %2762 = vmatprep.subr.bf16.mxu0 %v2429
    %2763 = vmatpush2.bf16.msra.mxu0 %v2428
    %2764 = vmatprep.subr.bf16.mxu0 %v2423
    %2765 = vmatpush2.bf16.msra.mxu0 %v2422
    %2766 = vmatprep.subr.bf16.mxu0 %v2417
    %2767 = vmatpush2.bf16.msra.mxu0 %v2416
    %2768 = vmatprep.subr.bf16.mxu0 %v2411
    %2769 = vmatpush2.bf16.msra.mxu0 %v2410
    %2770 = vmatprep.subr.bf16.mxu0 %v2405
    %2771 = vmatpush2.bf16.msra.mxu0 %v2404
    %2772 = vmatprep.mubr.bf16.mxu0 %v1493
    %2773 = vmatmul.mubr.bf16.gmra.mxu0 %v1492
    %v2774 = vpop.f32.mrf.mxu0
    %v2775 = vadd.f32 %v1753, %v2774
    %v2776 = vpop.f32.mrf.mxu0
    %v2777 = vadd.f32 %v1757, %v2776
    %v2778 = vpop.f32.mrf.mxu0
    %v2779 = vadd.f32 %v1753, %v2778
    %v2780 = vpop.f32.mrf.mxu0
    %v2781 = vadd.f32 %v1757, %v2780
    %2782 = vmatprep.mubr.bf16.mxu0 %v1497
    %2783 = vmatmul.mubr.bf16.gmra.mxu0 %v1496
    %v2784 = vpop.f32.mrf.mxu0
    %v2785 = vadd.f32 %v1753, %v2784
    %v2786 = vpop.f32.mrf.mxu0
    %v2787 = vadd.f32 %v1757, %v2786
    %v2788 = vpop.f32.mrf.mxu0
    %v2789 = vadd.f32 %v1753, %v2788
    %v2790 = vpop.f32.mrf.mxu0
    %v2791 = vadd.f32 %v1757, %v2790
    %2792 = vmatprep.mubr.bf16.mxu0 %v1501
    %2793 = vmatmul.mubr.bf16.gmra.mxu0 %v1500
    %v2794 = vpop.f32.mrf.mxu0
    %v2795 = vadd.f32 %v1753, %v2794
    %v2796 = vpop.f32.mrf.mxu0
    %v2797 = vadd.f32 %v1757, %v2796
    %v2798 = vpop.f32.mrf.mxu0
    %v2799 = vadd.f32 %v1753, %v2798
    %v2800 = vpop.f32.mrf.mxu0
    %v2801 = vadd.f32 %v1757, %v2800
    %2802 = vmatprep.mubr.bf16.mxu0 %v1505
    %2803 = vmatmul.mubr.bf16.gmra.mxu0 %v1504
    %v2804 = vpop.f32.mrf.mxu0
    %v2805 = vadd.f32 %v1753, %v2804
    %v2806 = vpop.f32.mrf.mxu0
    %v2807 = vadd.f32 %v1757, %v2806
    %v2808 = vpop.f32.mrf.mxu0
    %v2809 = vadd.f32 %v1753, %v2808
    %v2810 = vpop.f32.mrf.mxu0
    %v2811 = vadd.f32 %v1757, %v2810
    %2812 = vmatprep.mubr.bf16.mxu0 %v1509
    %2813 = vmatmul.mubr.bf16.gmra.mxu0 %v1508
    %v2814 = vpop.f32.mrf.mxu0
    %v2815 = vadd.f32 %v1753, %v2814
    %v2816 = vpop.f32.mrf.mxu0
    %v2817 = vadd.f32 %v1757, %v2816
    %v2818 = vpop.f32.mrf.mxu0
    %v2819 = vadd.f32 %v1753, %v2818
    %v2820 = vpop.f32.mrf.mxu0
    %v2821 = vadd.f32 %v1757, %v2820
    %2822 = vmatprep.mubr.bf16.mxu0 %v1513
    %2823 = vmatmul.mubr.bf16.gmra.mxu0 %v1512
    %v2824 = vpop.f32.mrf.mxu0
    %v2825 = vadd.f32 %v1753, %v2824
    %v2826 = vpop.f32.mrf.mxu0
    %v2827 = vadd.f32 %v1757, %v2826
    %v2828 = vpop.f32.mrf.mxu0
    %v2829 = vadd.f32 %v1753, %v2828
    %v2830 = vpop.f32.mrf.mxu0
    %v2831 = vadd.f32 %v1757, %v2830
    %2832 = vmatprep.mubr.bf16.mxu0 %v1517
    %2833 = vmatmul.mubr.bf16.gmra.mxu0 %v1516
    %v2834 = vpop.f32.mrf.mxu0
    %v2835 = vadd.f32 %v1753, %v2834
    %v2836 = vpop.f32.mrf.mxu0
    %v2837 = vadd.f32 %v1757, %v2836
    %v2838 = vpop.f32.mrf.mxu0
    %v2839 = vadd.f32 %v1753, %v2838
    %v2840 = vpop.f32.mrf.mxu0
    %v2841 = vadd.f32 %v1757, %v2840
    %2842 = vmatprep.mubr.bf16.mxu0 %v1521
    %2843 = vmatmul.mubr.bf16.gmra.mxu0 %v1520
    %v2844 = vpop.f32.mrf.mxu0
    %v2845 = vadd.f32 %v1753, %v2844
    %v2846 = vpop.f32.mrf.mxu0
    %v2847 = vadd.f32 %v1757, %v2846
    %v2848 = vpop.f32.mrf.mxu0
    %v2849 = vadd.f32 %v1753, %v2848
    %v2850 = vpop.f32.mrf.mxu0
    %v2851 = vadd.f32 %v1757, %v2850
    %2852 = vmatprep.mubr.bf16.mxu0 %v1525
    %2853 = vmatmul.mubr.bf16.gmra.mxu0 %v1524
    %v2854 = vpop.f32.mrf.mxu0
    %v2855 = vadd.f32 %v1753, %v2854
    %v2856 = vpop.f32.mrf.mxu0
    %v2857 = vadd.f32 %v1757, %v2856
    %v2858 = vpop.f32.mrf.mxu0
    %v2859 = vadd.f32 %v1753, %v2858
    %v2860 = vpop.f32.mrf.mxu0
    %v2861 = vadd.f32 %v1757, %v2860
    %2862 = vmatprep.mubr.bf16.mxu0 %v1529
    %2863 = vmatmul.mubr.bf16.gmra.mxu0 %v1528
    %v2864 = vpop.f32.mrf.mxu0
    %v2865 = vadd.f32 %v1753, %v2864
    %v2866 = vpop.f32.mrf.mxu0
    %v2867 = vadd.f32 %v1757, %v2866
    %v2868 = vpop.f32.mrf.mxu0
    %v2869 = vadd.f32 %v1753, %v2868
    %v2870 = vpop.f32.mrf.mxu0
    %v2871 = vadd.f32 %v1757, %v2870
    %2872 = vmatprep.mubr.bf16.mxu0 %v1533
    %2873 = vmatmul.mubr.bf16.gmra.mxu0 %v1532
    %v2874 = vpop.f32.mrf.mxu0
    %v2875 = vadd.f32 %v1753, %v2874
    %v2876 = vpop.f32.mrf.mxu0
    %v2877 = vadd.f32 %v1757, %v2876
    %v2878 = vpop.f32.mrf.mxu0
    %v2879 = vadd.f32 %v1753, %v2878
    %v2880 = vpop.f32.mrf.mxu0
    %v2881 = vadd.f32 %v1757, %v2880
    %2882 = vmatprep.mubr.bf16.mxu0 %v1537
    %2883 = vmatmul.mubr.bf16.gmra.mxu0 %v1536
    %v2884 = vpop.f32.mrf.mxu0
    %v2885 = vadd.f32 %v1753, %v2884
    %v2886 = vpop.f32.mrf.mxu0
    %v2887 = vadd.f32 %v1757, %v2886
    %v2888 = vpop.f32.mrf.mxu0
    %v2889 = vadd.f32 %v1753, %v2888
    %v2890 = vpop.f32.mrf.mxu0
    %v2891 = vadd.f32 %v1757, %v2890
    %2892 = vmatprep.mubr.bf16.mxu0 %v1541
    %2893 = vmatmul.mubr.bf16.gmra.mxu0 %v1540
    %v2894 = vpop.f32.mrf.mxu0
    %v2895 = vadd.f32 %v1753, %v2894
    %v2896 = vpop.f32.mrf.mxu0
    %v2897 = vadd.f32 %v1757, %v2896
    %v2898 = vpop.f32.mrf.mxu0
    %v2899 = vadd.f32 %v1753, %v2898
    %v2900 = vpop.f32.mrf.mxu0
    %v2901 = vadd.f32 %v1757, %v2900
    %2902 = vmatprep.mubr.bf16.mxu0 %v1545
    %2903 = vmatmul.mubr.bf16.gmra.mxu0 %v1544
    %v2904 = vpop.f32.mrf.mxu0
    %v2905 = vadd.f32 %v1753, %v2904
    %v2906 = vpop.f32.mrf.mxu0
    %v2907 = vadd.f32 %v1757, %v2906
    %v2908 = vpop.f32.mrf.mxu0
    %v2909 = vadd.f32 %v1753, %v2908
    %v2910 = vpop.f32.mrf.mxu0
    %v2911 = vadd.f32 %v1757, %v2910
    %2912 = vmatprep.mubr.bf16.mxu0 %v1549
    %2913 = vmatmul.mubr.bf16.gmra.mxu0 %v1548
    %v2914 = vpop.f32.mrf.mxu0
    %v2915 = vadd.f32 %v1753, %v2914
    %v2916 = vpop.f32.mrf.mxu0
    %v2917 = vadd.f32 %v1757, %v2916
    %v2918 = vpop.f32.mrf.mxu0
    %v2919 = vadd.f32 %v1753, %v2918
    %v2920 = vpop.f32.mrf.mxu0
    %v2921 = vadd.f32 %v1757, %v2920
    %2922 = vmatprep.mubr.bf16.mxu0 %v1553
    %2923 = vmatmul.mubr.bf16.gmra.mxu0 %v1552
    %v2924 = vpop.f32.mrf.mxu0
    %v2925 = vadd.f32 %v1753, %v2924
    %v2926 = vpop.f32.mrf.mxu0
    %v2927 = vadd.f32 %v1757, %v2926
    %v2928 = vpop.f32.mrf.mxu0
    %v2929 = vadd.f32 %v1753, %v2928
    %v2930 = vpop.f32.mrf.mxu0
    %v2931 = vadd.f32 %v1757, %v2930
    %2932 = vdwg.mxu0
    %2933 = vmatprep.subr.bf16.mxu0 %v2495
    %2934 = vmatpush1.bf16.msra.mxu0 %v2494
    %2935 = vmatprep.subr.bf16.mxu0 %v2489
    %2936 = vmatpush1.bf16.msra.mxu0 %v2488
    %2937 = vmatprep.subr.bf16.mxu0 %v2483
    %2938 = vmatpush1.bf16.msra.mxu0 %v2482
    %2939 = vmatprep.subr.bf16.mxu0 %v2477
    %2940 = vmatpush1.bf16.msra.mxu0 %v2476
    %2941 = vmatprep.subr.bf16.mxu0 %v2471
    %2942 = vmatpush1.bf16.msra.mxu0 %v2470
    %2943 = vmatprep.subr.bf16.mxu0 %v2465
    %2944 = vmatpush1.bf16.msra.mxu0 %v2464
    %2945 = vmatprep.subr.bf16.mxu0 %v2459
    %2946 = vmatpush1.bf16.msra.mxu0 %v2458
    %2947 = vmatprep.subr.bf16.mxu0 %v2453
    %2948 = vmatpush1.bf16.msra.mxu0 %v2452
    %2949 = vmatprep.subr.bf16.mxu0 %v2543
    %2950 = vmatpush2.bf16.msra.mxu0 %v2542
    %2951 = vmatprep.subr.bf16.mxu0 %v2537
    %2952 = vmatpush2.bf16.msra.mxu0 %v2536
    %2953 = vmatprep.subr.bf16.mxu0 %v2531
    %2954 = vmatpush2.bf16.msra.mxu0 %v2530
    %2955 = vmatprep.subr.bf16.mxu0 %v2525
    %2956 = vmatpush2.bf16.msra.mxu0 %v2524
    %2957 = vmatprep.subr.bf16.mxu0 %v2519
    %2958 = vmatpush2.bf16.msra.mxu0 %v2518
    %2959 = vmatprep.subr.bf16.mxu0 %v2513
    %2960 = vmatpush2.bf16.msra.mxu0 %v2512
    %2961 = vmatprep.subr.bf16.mxu0 %v2507
    %2962 = vmatpush2.bf16.msra.mxu0 %v2506
    %2963 = vmatprep.subr.bf16.mxu0 %v2501
    %2964 = vmatpush2.bf16.msra.mxu0 %v2500
    %2965 = vmatprep.mubr.bf16.mxu0 %v1495
    %2966 = vmatmul.mubr.bf16.gmra.mxu0 %v1494
    %v2967 = vpop.f32.mrf.mxu0
    %v2968 = vadd.f32 %v2775, %v2967
    %v2969 = vpop.f32.mrf.mxu0
    %v2970 = vadd.f32 %v2777, %v2969
    %v2971 = vpop.f32.mrf.mxu0
    %v2972 = vadd.f32 %v2779, %v2971
    %v2973 = vpop.f32.mrf.mxu0
    %v2974 = vadd.f32 %v2781, %v2973
    %2975 = vmatprep.mubr.bf16.mxu0 %v1499
    %2976 = vmatmul.mubr.bf16.gmra.mxu0 %v1498
    %v2977 = vpop.f32.mrf.mxu0
    %v2978 = vadd.f32 %v2785, %v2977
    %v2979 = vpop.f32.mrf.mxu0
    %v2980 = vadd.f32 %v2787, %v2979
    %v2981 = vpop.f32.mrf.mxu0
    %v2982 = vadd.f32 %v2789, %v2981
    %v2983 = vpop.f32.mrf.mxu0
    %v2984 = vadd.f32 %v2791, %v2983
    %2985 = vmatprep.mubr.bf16.mxu0 %v1503
    %2986 = vmatmul.mubr.bf16.gmra.mxu0 %v1502
    %v2987 = vpop.f32.mrf.mxu0
    %v2988 = vadd.f32 %v2795, %v2987
    %v2989 = vpop.f32.mrf.mxu0
    %v2990 = vadd.f32 %v2797, %v2989
    %v2991 = vpop.f32.mrf.mxu0
    %v2992 = vadd.f32 %v2799, %v2991
    %v2993 = vpop.f32.mrf.mxu0
    %v2994 = vadd.f32 %v2801, %v2993
    %2995 = vmatprep.mubr.bf16.mxu0 %v1507
    %2996 = vmatmul.mubr.bf16.gmra.mxu0 %v1506
    %v2997 = vpop.f32.mrf.mxu0
    %v2998 = vadd.f32 %v2805, %v2997
    %v2999 = vpop.f32.mrf.mxu0
    %v3000 = vadd.f32 %v2807, %v2999
    %v3001 = vpop.f32.mrf.mxu0
    %v3002 = vadd.f32 %v2809, %v3001
    %v3003 = vpop.f32.mrf.mxu0
    %v3004 = vadd.f32 %v2811, %v3003
    %3005 = vmatprep.mubr.bf16.mxu0 %v1511
    %3006 = vmatmul.mubr.bf16.gmra.mxu0 %v1510
    %v3007 = vpop.f32.mrf.mxu0
    %v3008 = vadd.f32 %v2815, %v3007
    %v3009 = vpop.f32.mrf.mxu0
    %v3010 = vadd.f32 %v2817, %v3009
    %v3011 = vpop.f32.mrf.mxu0
    %v3012 = vadd.f32 %v2819, %v3011
    %v3013 = vpop.f32.mrf.mxu0
    %v3014 = vadd.f32 %v2821, %v3013
    %3015 = vmatprep.mubr.bf16.mxu0 %v1515
    %3016 = vmatmul.mubr.bf16.gmra.mxu0 %v1514
    %v3017 = vpop.f32.mrf.mxu0
    %v3018 = vadd.f32 %v2825, %v3017
    %v3019 = vpop.f32.mrf.mxu0
    %v3020 = vadd.f32 %v2827, %v3019
    %v3021 = vpop.f32.mrf.mxu0
    %v3022 = vadd.f32 %v2829, %v3021
    %v3023 = vpop.f32.mrf.mxu0
    %v3024 = vadd.f32 %v2831, %v3023
    %3025 = vmatprep.mubr.bf16.mxu0 %v1519
    %3026 = vmatmul.mubr.bf16.gmra.mxu0 %v1518
    %v3027 = vpop.f32.mrf.mxu0
    %v3028 = vadd.f32 %v2835, %v3027
    %v3029 = vpop.f32.mrf.mxu0
    %v3030 = vadd.f32 %v2837, %v3029
    %v3031 = vpop.f32.mrf.mxu0
    %v3032 = vadd.f32 %v2839, %v3031
    %v3033 = vpop.f32.mrf.mxu0
    %v3034 = vadd.f32 %v2841, %v3033
    %3035 = vmatprep.mubr.bf16.mxu0 %v1523
    %3036 = vmatmul.mubr.bf16.gmra.mxu0 %v1522
    %v3037 = vpop.f32.mrf.mxu0
    %v3038 = vadd.f32 %v2845, %v3037
    %v3039 = vpop.f32.mrf.mxu0
    %v3040 = vadd.f32 %v2847, %v3039
    %v3041 = vpop.f32.mrf.mxu0
    %v3042 = vadd.f32 %v2849, %v3041
    %v3043 = vpop.f32.mrf.mxu0
    %v3044 = vadd.f32 %v2851, %v3043
    %3045 = vmatprep.mubr.bf16.mxu0 %v1527
    %3046 = vmatmul.mubr.bf16.gmra.mxu0 %v1526
    %v3047 = vpop.f32.mrf.mxu0
    %v3048 = vadd.f32 %v2855, %v3047
    %v3049 = vpop.f32.mrf.mxu0
    %v3050 = vadd.f32 %v2857, %v3049
    %v3051 = vpop.f32.mrf.mxu0
    %v3052 = vadd.f32 %v2859, %v3051
    %v3053 = vpop.f32.mrf.mxu0
    %v3054 = vadd.f32 %v2861, %v3053
    %3055 = vmatprep.mubr.bf16.mxu0 %v1531
    %3056 = vmatmul.mubr.bf16.gmra.mxu0 %v1530
    %v3057 = vpop.f32.mrf.mxu0
    %v3058 = vadd.f32 %v2865, %v3057
    %v3059 = vpop.f32.mrf.mxu0
    %v3060 = vadd.f32 %v2867, %v3059
    %v3061 = vpop.f32.mrf.mxu0
    %v3062 = vadd.f32 %v2869, %v3061
    %v3063 = vpop.f32.mrf.mxu0
    %v3064 = vadd.f32 %v2871, %v3063
    %3065 = vmatprep.mubr.bf16.mxu0 %v1535
    %3066 = vmatmul.mubr.bf16.gmra.mxu0 %v1534
    %v3067 = vpop.f32.mrf.mxu0
    %v3068 = vadd.f32 %v2875, %v3067
    %v3069 = vpop.f32.mrf.mxu0
    %v3070 = vadd.f32 %v2877, %v3069
    %v3071 = vpop.f32.mrf.mxu0
    %v3072 = vadd.f32 %v2879, %v3071
    %v3073 = vpop.f32.mrf.mxu0
    %v3074 = vadd.f32 %v2881, %v3073
    %3075 = vmatprep.mubr.bf16.mxu0 %v1539
    %3076 = vmatmul.mubr.bf16.gmra.mxu0 %v1538
    %v3077 = vpop.f32.mrf.mxu0
    %v3078 = vadd.f32 %v2885, %v3077
    %v3079 = vpop.f32.mrf.mxu0
    %v3080 = vadd.f32 %v2887, %v3079
    %v3081 = vpop.f32.mrf.mxu0
    %v3082 = vadd.f32 %v2889, %v3081
    %v3083 = vpop.f32.mrf.mxu0
    %v3084 = vadd.f32 %v2891, %v3083
    %3085 = vmatprep.mubr.bf16.mxu0 %v1543
    %3086 = vmatmul.mubr.bf16.gmra.mxu0 %v1542
    %v3087 = vpop.f32.mrf.mxu0
    %v3088 = vadd.f32 %v2895, %v3087
    %v3089 = vpop.f32.mrf.mxu0
    %v3090 = vadd.f32 %v2897, %v3089
    %v3091 = vpop.f32.mrf.mxu0
    %v3092 = vadd.f32 %v2899, %v3091
    %v3093 = vpop.f32.mrf.mxu0
    %v3094 = vadd.f32 %v2901, %v3093
    %3095 = vmatprep.mubr.bf16.mxu0 %v1547
    %3096 = vmatmul.mubr.bf16.gmra.mxu0 %v1546
    %v3097 = vpop.f32.mrf.mxu0
    %v3098 = vadd.f32 %v2905, %v3097
    %v3099 = vpop.f32.mrf.mxu0
    %v3100 = vadd.f32 %v2907, %v3099
    %v3101 = vpop.f32.mrf.mxu0
    %v3102 = vadd.f32 %v2909, %v3101
    %v3103 = vpop.f32.mrf.mxu0
    %v3104 = vadd.f32 %v2911, %v3103
    %3105 = vmatprep.mubr.bf16.mxu0 %v1551
    %3106 = vmatmul.mubr.bf16.gmra.mxu0 %v1550
    %v3107 = vpop.f32.mrf.mxu0
    %v3108 = vadd.f32 %v2915, %v3107
    %v3109 = vpop.f32.mrf.mxu0
    %v3110 = vadd.f32 %v2917, %v3109
    %v3111 = vpop.f32.mrf.mxu0
    %v3112 = vadd.f32 %v2919, %v3111
    %v3113 = vpop.f32.mrf.mxu0
    %v3114 = vadd.f32 %v2921, %v3113
    %3115 = vmatprep.mubr.bf16.mxu0 %v1555
    %3116 = vmatmul.mubr.bf16.gmra.mxu0 %v1554
    %v3117 = vpop.f32.mrf.mxu0
    %v3118 = vadd.f32 %v2925, %v3117
    %v3119 = vpop.f32.mrf.mxu0
    %v3120 = vadd.f32 %v2927, %v3119
    %v3121 = vpop.f32.mrf.mxu0
    %v3122 = vadd.f32 %v2929, %v3121
    %v3123 = vpop.f32.mrf.mxu0
    %v3124 = vadd.f32 %v2931, %v3123
    %3125 = vdwg.mxu0
    %3126 = vmatprep.subr.bf16.mxu0 %v2401
    %3127 = vmatpush1.bf16.msra.mxu0 %v2400
    %3128 = vmatprep.subr.bf16.mxu0 %v2395
    %3129 = vmatpush1.bf16.msra.mxu0 %v2394
    %3130 = vmatprep.subr.bf16.mxu0 %v2389
    %3131 = vmatpush1.bf16.msra.mxu0 %v2388
    %3132 = vmatprep.subr.bf16.mxu0 %v2383
    %3133 = vmatpush1.bf16.msra.mxu0 %v2382
    %3134 = vmatprep.subr.bf16.mxu0 %v2377
    %3135 = vmatpush1.bf16.msra.mxu0 %v2376
    %3136 = vmatprep.subr.bf16.mxu0 %v2371
    %3137 = vmatpush1.bf16.msra.mxu0 %v2370
    %3138 = vmatprep.subr.bf16.mxu0 %v2365
    %3139 = vmatpush1.bf16.msra.mxu0 %v2364
    %3140 = vmatprep.subr.bf16.mxu0 %v2359
    %3141 = vmatpush1.bf16.msra.mxu0 %v2358
    %3142 = vmatprep.subr.bf16.mxu0 %v2449
    %3143 = vmatpush2.bf16.msra.mxu0 %v2448
    %3144 = vmatprep.subr.bf16.mxu0 %v2443
    %3145 = vmatpush2.bf16.msra.mxu0 %v2442
    %3146 = vmatprep.subr.bf16.mxu0 %v2437
    %3147 = vmatpush2.bf16.msra.mxu0 %v2436
    %3148 = vmatprep.subr.bf16.mxu0 %v2431
    %3149 = vmatpush2.bf16.msra.mxu0 %v2430
    %3150 = vmatprep.subr.bf16.mxu0 %v2425
    %3151 = vmatpush2.bf16.msra.mxu0 %v2424
    %3152 = vmatprep.subr.bf16.mxu0 %v2419
    %3153 = vmatpush2.bf16.msra.mxu0 %v2418
    %3154 = vmatprep.subr.bf16.mxu0 %v2413
    %3155 = vmatpush2.bf16.msra.mxu0 %v2412
    %3156 = vmatprep.subr.bf16.mxu0 %v2407
    %3157 = vmatpush2.bf16.msra.mxu0 %v2406
    %3158 = vmatprep.mubr.bf16.mxu0 %v1493
    %3159 = vmatmul.mubr.bf16.gmra.mxu0 %v1492
    %v3160 = vpop.f32.mrf.mxu0
    %v3161 = vadd.f32 %v1761, %v3160
    %v3162 = vpop.f32.mrf.mxu0
    %v3163 = vadd.f32 %v1765, %v3162
    %v3164 = vpop.f32.mrf.mxu0
    %v3165 = vadd.f32 %v1761, %v3164
    %v3166 = vpop.f32.mrf.mxu0
    %v3167 = vadd.f32 %v1765, %v3166
    %3168 = vmatprep.mubr.bf16.mxu0 %v1497
    %3169 = vmatmul.mubr.bf16.gmra.mxu0 %v1496
    %v3170 = vpop.f32.mrf.mxu0
    %v3171 = vadd.f32 %v1761, %v3170
    %v3172 = vpop.f32.mrf.mxu0
    %v3173 = vadd.f32 %v1765, %v3172
    %v3174 = vpop.f32.mrf.mxu0
    %v3175 = vadd.f32 %v1761, %v3174
    %v3176 = vpop.f32.mrf.mxu0
    %v3177 = vadd.f32 %v1765, %v3176
    %3178 = vmatprep.mubr.bf16.mxu0 %v1501
    %3179 = vmatmul.mubr.bf16.gmra.mxu0 %v1500
    %v3180 = vpop.f32.mrf.mxu0
    %v3181 = vadd.f32 %v1761, %v3180
    %v3182 = vpop.f32.mrf.mxu0
    %v3183 = vadd.f32 %v1765, %v3182
    %v3184 = vpop.f32.mrf.mxu0
    %v3185 = vadd.f32 %v1761, %v3184
    %v3186 = vpop.f32.mrf.mxu0
    %v3187 = vadd.f32 %v1765, %v3186
    %3188 = vmatprep.mubr.bf16.mxu0 %v1505
    %3189 = vmatmul.mubr.bf16.gmra.mxu0 %v1504
    %v3190 = vpop.f32.mrf.mxu0
    %v3191 = vadd.f32 %v1761, %v3190
    %v3192 = vpop.f32.mrf.mxu0
    %v3193 = vadd.f32 %v1765, %v3192
    %v3194 = vpop.f32.mrf.mxu0
    %v3195 = vadd.f32 %v1761, %v3194
    %v3196 = vpop.f32.mrf.mxu0
    %v3197 = vadd.f32 %v1765, %v3196
    %3198 = vmatprep.mubr.bf16.mxu0 %v1509
    %3199 = vmatmul.mubr.bf16.gmra.mxu0 %v1508
    %v3200 = vpop.f32.mrf.mxu0
    %v3201 = vadd.f32 %v1761, %v3200
    %v3202 = vpop.f32.mrf.mxu0
    %v3203 = vadd.f32 %v1765, %v3202
    %v3204 = vpop.f32.mrf.mxu0
    %v3205 = vadd.f32 %v1761, %v3204
    %v3206 = vpop.f32.mrf.mxu0
    %v3207 = vadd.f32 %v1765, %v3206
    %3208 = vmatprep.mubr.bf16.mxu0 %v1513
    %3209 = vmatmul.mubr.bf16.gmra.mxu0 %v1512
    %v3210 = vpop.f32.mrf.mxu0
    %v3211 = vadd.f32 %v1761, %v3210
    %v3212 = vpop.f32.mrf.mxu0
    %v3213 = vadd.f32 %v1765, %v3212
    %v3214 = vpop.f32.mrf.mxu0
    %v3215 = vadd.f32 %v1761, %v3214
    %v3216 = vpop.f32.mrf.mxu0
    %v3217 = vadd.f32 %v1765, %v3216
    %3218 = vmatprep.mubr.bf16.mxu0 %v1517
    %3219 = vmatmul.mubr.bf16.gmra.mxu0 %v1516
    %v3220 = vpop.f32.mrf.mxu0
    %v3221 = vadd.f32 %v1761, %v3220
    %v3222 = vpop.f32.mrf.mxu0
    %v3223 = vadd.f32 %v1765, %v3222
    %v3224 = vpop.f32.mrf.mxu0
    %v3225 = vadd.f32 %v1761, %v3224
    %v3226 = vpop.f32.mrf.mxu0
    %v3227 = vadd.f32 %v1765, %v3226
    %3228 = vmatprep.mubr.bf16.mxu0 %v1521
    %3229 = vmatmul.mubr.bf16.gmra.mxu0 %v1520
    %v3230 = vpop.f32.mrf.mxu0
    %v3231 = vadd.f32 %v1761, %v3230
    %v3232 = vpop.f32.mrf.mxu0
    %v3233 = vadd.f32 %v1765, %v3232
    %v3234 = vpop.f32.mrf.mxu0
    %v3235 = vadd.f32 %v1761, %v3234
    %v3236 = vpop.f32.mrf.mxu0
    %v3237 = vadd.f32 %v1765, %v3236
    %3238 = vmatprep.mubr.bf16.mxu0 %v1525
    %3239 = vmatmul.mubr.bf16.gmra.mxu0 %v1524
    %v3240 = vpop.f32.mrf.mxu0
    %v3241 = vadd.f32 %v1761, %v3240
    %v3242 = vpop.f32.mrf.mxu0
    %v3243 = vadd.f32 %v1765, %v3242
    %v3244 = vpop.f32.mrf.mxu0
    %v3245 = vadd.f32 %v1761, %v3244
    %v3246 = vpop.f32.mrf.mxu0
    %v3247 = vadd.f32 %v1765, %v3246
    %3248 = vmatprep.mubr.bf16.mxu0 %v1529
    %3249 = vmatmul.mubr.bf16.gmra.mxu0 %v1528
    %v3250 = vpop.f32.mrf.mxu0
    %v3251 = vadd.f32 %v1761, %v3250
    %v3252 = vpop.f32.mrf.mxu0
    %v3253 = vadd.f32 %v1765, %v3252
    %v3254 = vpop.f32.mrf.mxu0
    %v3255 = vadd.f32 %v1761, %v3254
    %v3256 = vpop.f32.mrf.mxu0
    %v3257 = vadd.f32 %v1765, %v3256
    %3258 = vmatprep.mubr.bf16.mxu0 %v1533
    %3259 = vmatmul.mubr.bf16.gmra.mxu0 %v1532
    %v3260 = vpop.f32.mrf.mxu0
    %v3261 = vadd.f32 %v1761, %v3260
    %v3262 = vpop.f32.mrf.mxu0
    %v3263 = vadd.f32 %v1765, %v3262
    %v3264 = vpop.f32.mrf.mxu0
    %v3265 = vadd.f32 %v1761, %v3264
    %v3266 = vpop.f32.mrf.mxu0
    %v3267 = vadd.f32 %v1765, %v3266
    %3268 = vmatprep.mubr.bf16.mxu0 %v1537
    %3269 = vmatmul.mubr.bf16.gmra.mxu0 %v1536
    %v3270 = vpop.f32.mrf.mxu0
    %v3271 = vadd.f32 %v1761, %v3270
    %v3272 = vpop.f32.mrf.mxu0
    %v3273 = vadd.f32 %v1765, %v3272
    %v3274 = vpop.f32.mrf.mxu0
    %v3275 = vadd.f32 %v1761, %v3274
    %v3276 = vpop.f32.mrf.mxu0
    %v3277 = vadd.f32 %v1765, %v3276
    %3278 = vmatprep.mubr.bf16.mxu0 %v1541
    %3279 = vmatmul.mubr.bf16.gmra.mxu0 %v1540
    %v3280 = vpop.f32.mrf.mxu0
    %v3281 = vadd.f32 %v1761, %v3280
    %v3282 = vpop.f32.mrf.mxu0
    %v3283 = vadd.f32 %v1765, %v3282
    %v3284 = vpop.f32.mrf.mxu0
    %v3285 = vadd.f32 %v1761, %v3284
    %v3286 = vpop.f32.mrf.mxu0
    %v3287 = vadd.f32 %v1765, %v3286
    %3288 = vmatprep.mubr.bf16.mxu0 %v1545
    %3289 = vmatmul.mubr.bf16.gmra.mxu0 %v1544
    %v3290 = vpop.f32.mrf.mxu0
    %v3291 = vadd.f32 %v1761, %v3290
    %v3292 = vpop.f32.mrf.mxu0
    %v3293 = vadd.f32 %v1765, %v3292
    %v3294 = vpop.f32.mrf.mxu0
    %v3295 = vadd.f32 %v1761, %v3294
    %v3296 = vpop.f32.mrf.mxu0
    %v3297 = vadd.f32 %v1765, %v3296
    %3298 = vmatprep.mubr.bf16.mxu0 %v1549
    %3299 = vmatmul.mubr.bf16.gmra.mxu0 %v1548
    %v3300 = vpop.f32.mrf.mxu0
    %v3301 = vadd.f32 %v1761, %v3300
    %v3302 = vpop.f32.mrf.mxu0
    %v3303 = vadd.f32 %v1765, %v3302
    %v3304 = vpop.f32.mrf.mxu0
    %v3305 = vadd.f32 %v1761, %v3304
    %v3306 = vpop.f32.mrf.mxu0
    %v3307 = vadd.f32 %v1765, %v3306
    %3308 = vmatprep.mubr.bf16.mxu0 %v1553
    %3309 = vmatmul.mubr.bf16.gmra.mxu0 %v1552
    %v3310 = vpop.f32.mrf.mxu0
    %v3311 = vadd.f32 %v1761, %v3310
    %v3312 = vpop.f32.mrf.mxu0
    %v3313 = vadd.f32 %v1765, %v3312
    %v3314 = vpop.f32.mrf.mxu0
    %v3315 = vadd.f32 %v1761, %v3314
    %v3316 = vpop.f32.mrf.mxu0
    %v3317 = vadd.f32 %v1765, %v3316
    %3318 = vdwg.mxu0
    %3319 = vmatprep.subr.bf16.mxu0 %v2497
    %3320 = vmatpush1.bf16.msra.mxu0 %v2496
    %3321 = vmatprep.subr.bf16.mxu0 %v2491
    %3322 = vmatpush1.bf16.msra.mxu0 %v2490
    %3323 = vmatprep.subr.bf16.mxu0 %v2485
    %3324 = vmatpush1.bf16.msra.mxu0 %v2484
    %3325 = vmatprep.subr.bf16.mxu0 %v2479
    %3326 = vmatpush1.bf16.msra.mxu0 %v2478
    %3327 = vmatprep.subr.bf16.mxu0 %v2473
    %3328 = vmatpush1.bf16.msra.mxu0 %v2472
    %3329 = vmatprep.subr.bf16.mxu0 %v2467
    %3330 = vmatpush1.bf16.msra.mxu0 %v2466
    %3331 = vmatprep.subr.bf16.mxu0 %v2461
    %3332 = vmatpush1.bf16.msra.mxu0 %v2460
    %3333 = vmatprep.subr.bf16.mxu0 %v2455
    %3334 = vmatpush1.bf16.msra.mxu0 %v2454
    %3335 = vmatprep.subr.bf16.mxu0 %v2545
    %3336 = vmatpush2.bf16.msra.mxu0 %v2544
    %3337 = vmatprep.subr.bf16.mxu0 %v2539
    %3338 = vmatpush2.bf16.msra.mxu0 %v2538
    %3339 = vmatprep.subr.bf16.mxu0 %v2533
    %3340 = vmatpush2.bf16.msra.mxu0 %v2532
    %3341 = vmatprep.subr.bf16.mxu0 %v2527
    %3342 = vmatpush2.bf16.msra.mxu0 %v2526
    %3343 = vmatprep.subr.bf16.mxu0 %v2521
    %3344 = vmatpush2.bf16.msra.mxu0 %v2520
    %3345 = vmatprep.subr.bf16.mxu0 %v2515
    %3346 = vmatpush2.bf16.msra.mxu0 %v2514
    %3347 = vmatprep.subr.bf16.mxu0 %v2509
    %3348 = vmatpush2.bf16.msra.mxu0 %v2508
    %3349 = vmatprep.subr.bf16.mxu0 %v2503
    %3350 = vmatpush2.bf16.msra.mxu0 %v2502
    %3351 = vmatprep.mubr.bf16.mxu0 %v1495
    %3352 = vmatmul.mubr.bf16.gmra.mxu0 %v1494
    %v3353 = vpop.f32.mrf.mxu0
    %v3354 = vadd.f32 %v3161, %v3353
    %v3355 = vpop.f32.mrf.mxu0
    %v3356 = vadd.f32 %v3163, %v3355
    %v3357 = vpop.f32.mrf.mxu0
    %v3358 = vadd.f32 %v3165, %v3357
    %v3359 = vpop.f32.mrf.mxu0
    %v3360 = vadd.f32 %v3167, %v3359
    %3361 = vmatprep.mubr.bf16.mxu0 %v1499
    %3362 = vmatmul.mubr.bf16.gmra.mxu0 %v1498
    %v3363 = vpop.f32.mrf.mxu0
    %v3364 = vadd.f32 %v3171, %v3363
    %v3365 = vpop.f32.mrf.mxu0
    %v3366 = vadd.f32 %v3173, %v3365
    %v3367 = vpop.f32.mrf.mxu0
    %v3368 = vadd.f32 %v3175, %v3367
    %v3369 = vpop.f32.mrf.mxu0
    %v3370 = vadd.f32 %v3177, %v3369
    %3371 = vmatprep.mubr.bf16.mxu0 %v1503
    %3372 = vmatmul.mubr.bf16.gmra.mxu0 %v1502
    %v3373 = vpop.f32.mrf.mxu0
    %v3374 = vadd.f32 %v3181, %v3373
    %v3375 = vpop.f32.mrf.mxu0
    %v3376 = vadd.f32 %v3183, %v3375
    %v3377 = vpop.f32.mrf.mxu0
    %v3378 = vadd.f32 %v3185, %v3377
    %v3379 = vpop.f32.mrf.mxu0
    %v3380 = vadd.f32 %v3187, %v3379
    %3381 = vmatprep.mubr.bf16.mxu0 %v1507
    %3382 = vmatmul.mubr.bf16.gmra.mxu0 %v1506
    %v3383 = vpop.f32.mrf.mxu0
    %v3384 = vadd.f32 %v3191, %v3383
    %v3385 = vpop.f32.mrf.mxu0
    %v3386 = vadd.f32 %v3193, %v3385
    %v3387 = vpop.f32.mrf.mxu0
    %v3388 = vadd.f32 %v3195, %v3387
    %v3389 = vpop.f32.mrf.mxu0
    %v3390 = vadd.f32 %v3197, %v3389
    %3391 = vmatprep.mubr.bf16.mxu0 %v1511
    %3392 = vmatmul.mubr.bf16.gmra.mxu0 %v1510
    %v3393 = vpop.f32.mrf.mxu0
    %v3394 = vadd.f32 %v3201, %v3393
    %v3395 = vpop.f32.mrf.mxu0
    %v3396 = vadd.f32 %v3203, %v3395
    %v3397 = vpop.f32.mrf.mxu0
    %v3398 = vadd.f32 %v3205, %v3397
    %v3399 = vpop.f32.mrf.mxu0
    %v3400 = vadd.f32 %v3207, %v3399
    %3401 = vmatprep.mubr.bf16.mxu0 %v1515
    %3402 = vmatmul.mubr.bf16.gmra.mxu0 %v1514
    %v3403 = vpop.f32.mrf.mxu0
    %v3404 = vadd.f32 %v3211, %v3403
    %v3405 = vpop.f32.mrf.mxu0
    %v3406 = vadd.f32 %v3213, %v3405
    %v3407 = vpop.f32.mrf.mxu0
    %v3408 = vadd.f32 %v3215, %v3407
    %v3409 = vpop.f32.mrf.mxu0
    %v3410 = vadd.f32 %v3217, %v3409
    %3411 = vmatprep.mubr.bf16.mxu0 %v1519
    %3412 = vmatmul.mubr.bf16.gmra.mxu0 %v1518
    %v3413 = vpop.f32.mrf.mxu0
    %v3414 = vadd.f32 %v3221, %v3413
    %v3415 = vpop.f32.mrf.mxu0
    %v3416 = vadd.f32 %v3223, %v3415
    %v3417 = vpop.f32.mrf.mxu0
    %v3418 = vadd.f32 %v3225, %v3417
    %v3419 = vpop.f32.mrf.mxu0
    %v3420 = vadd.f32 %v3227, %v3419
    %3421 = vmatprep.mubr.bf16.mxu0 %v1523
    %3422 = vmatmul.mubr.bf16.gmra.mxu0 %v1522
    %v3423 = vpop.f32.mrf.mxu0
    %v3424 = vadd.f32 %v3231, %v3423
    %v3425 = vpop.f32.mrf.mxu0
    %v3426 = vadd.f32 %v3233, %v3425
    %v3427 = vpop.f32.mrf.mxu0
    %v3428 = vadd.f32 %v3235, %v3427
    %v3429 = vpop.f32.mrf.mxu0
    %v3430 = vadd.f32 %v3237, %v3429
    %3431 = vmatprep.mubr.bf16.mxu0 %v1527
    %3432 = vmatmul.mubr.bf16.gmra.mxu0 %v1526
    %v3433 = vpop.f32.mrf.mxu0
    %v3434 = vadd.f32 %v3241, %v3433
    %v3435 = vpop.f32.mrf.mxu0
    %v3436 = vadd.f32 %v3243, %v3435
    %v3437 = vpop.f32.mrf.mxu0
    %v3438 = vadd.f32 %v3245, %v3437
    %v3439 = vpop.f32.mrf.mxu0
    %v3440 = vadd.f32 %v3247, %v3439
    %3441 = vmatprep.mubr.bf16.mxu0 %v1531
    %3442 = vmatmul.mubr.bf16.gmra.mxu0 %v1530
    %v3443 = vpop.f32.mrf.mxu0
    %v3444 = vadd.f32 %v3251, %v3443
    %v3445 = vpop.f32.mrf.mxu0
    %v3446 = vadd.f32 %v3253, %v3445
    %v3447 = vpop.f32.mrf.mxu0
    %v3448 = vadd.f32 %v3255, %v3447
    %v3449 = vpop.f32.mrf.mxu0
    %v3450 = vadd.f32 %v3257, %v3449
    %3451 = vmatprep.mubr.bf16.mxu0 %v1535
    %3452 = vmatmul.mubr.bf16.gmra.mxu0 %v1534
    %v3453 = vpop.f32.mrf.mxu0
    %v3454 = vadd.f32 %v3261, %v3453
    %v3455 = vpop.f32.mrf.mxu0
    %v3456 = vadd.f32 %v3263, %v3455
    %v3457 = vpop.f32.mrf.mxu0
    %v3458 = vadd.f32 %v3265, %v3457
    %v3459 = vpop.f32.mrf.mxu0
    %v3460 = vadd.f32 %v3267, %v3459
    %3461 = vmatprep.mubr.bf16.mxu0 %v1539
    %3462 = vmatmul.mubr.bf16.gmra.mxu0 %v1538
    %v3463 = vpop.f32.mrf.mxu0
    %v3464 = vadd.f32 %v3271, %v3463
    %v3465 = vpop.f32.mrf.mxu0
    %v3466 = vadd.f32 %v3273, %v3465
    %v3467 = vpop.f32.mrf.mxu0
    %v3468 = vadd.f32 %v3275, %v3467
    %v3469 = vpop.f32.mrf.mxu0
    %v3470 = vadd.f32 %v3277, %v3469
    %3471 = vmatprep.mubr.bf16.mxu0 %v1543
    %3472 = vmatmul.mubr.bf16.gmra.mxu0 %v1542
    %v3473 = vpop.f32.mrf.mxu0
    %v3474 = vadd.f32 %v3281, %v3473
    %v3475 = vpop.f32.mrf.mxu0
    %v3476 = vadd.f32 %v3283, %v3475
    %v3477 = vpop.f32.mrf.mxu0
    %v3478 = vadd.f32 %v3285, %v3477
    %v3479 = vpop.f32.mrf.mxu0
    %v3480 = vadd.f32 %v3287, %v3479
    %3481 = vmatprep.mubr.bf16.mxu0 %v1547
    %3482 = vmatmul.mubr.bf16.gmra.mxu0 %v1546
    %v3483 = vpop.f32.mrf.mxu0
    %v3484 = vadd.f32 %v3291, %v3483
    %v3485 = vpop.f32.mrf.mxu0
    %v3486 = vadd.f32 %v3293, %v3485
    %v3487 = vpop.f32.mrf.mxu0
    %v3488 = vadd.f32 %v3295, %v3487
    %v3489 = vpop.f32.mrf.mxu0
    %v3490 = vadd.f32 %v3297, %v3489
    %3491 = vmatprep.mubr.bf16.mxu0 %v1551
    %3492 = vmatmul.mubr.bf16.gmra.mxu0 %v1550
    %v3493 = vpop.f32.mrf.mxu0
    %v3494 = vadd.f32 %v3301, %v3493
    %v3495 = vpop.f32.mrf.mxu0
    %v3496 = vadd.f32 %v3303, %v3495
    %v3497 = vpop.f32.mrf.mxu0
    %v3498 = vadd.f32 %v3305, %v3497
    %v3499 = vpop.f32.mrf.mxu0
    %v3500 = vadd.f32 %v3307, %v3499
    %3501 = vmatprep.mubr.bf16.mxu0 %v1555
    %3502 = vmatmul.mubr.bf16.gmra.mxu0 %v1554
    %v3503 = vpop.f32.mrf.mxu0
    %v3504 = vadd.f32 %v3311, %v3503
    %v3505 = vpop.f32.mrf.mxu0
    %v3506 = vadd.f32 %v3313, %v3505
    %v3507 = vpop.f32.mrf.mxu0
    %v3508 = vadd.f32 %v3315, %v3507
    %v3509 = vpop.f32.mrf.mxu0
    %v3510 = vadd.f32 %v3317, %v3509
    %3511 = vdwg.mxu0
    %3512 = vmatprep.subr.bf16.mxu0 %v2403
    %3513 = vmatpush1.bf16.msra.mxu0 %v2402
    %3514 = vmatprep.subr.bf16.mxu0 %v2397
    %3515 = vmatpush1.bf16.msra.mxu0 %v2396
    %3516 = vmatprep.subr.bf16.mxu0 %v2391
    %3517 = vmatpush1.bf16.msra.mxu0 %v2390
    %3518 = vmatprep.subr.bf16.mxu0 %v2385
    %3519 = vmatpush1.bf16.msra.mxu0 %v2384
    %3520 = vmatprep.subr.bf16.mxu0 %v2379
    %3521 = vmatpush1.bf16.msra.mxu0 %v2378
    %3522 = vmatprep.subr.bf16.mxu0 %v2373
    %3523 = vmatpush1.bf16.msra.mxu0 %v2372
    %3524 = vmatprep.subr.bf16.mxu0 %v2367
    %3525 = vmatpush1.bf16.msra.mxu0 %v2366
    %3526 = vmatprep.subr.bf16.mxu0 %v2361
    %3527 = vmatpush1.bf16.msra.mxu0 %v2360
    %3528 = vmatprep.subr.bf16.mxu0 %v2451
    %3529 = vmatpush2.bf16.msra.mxu0 %v2450
    %3530 = vmatprep.subr.bf16.mxu0 %v2445
    %3531 = vmatpush2.bf16.msra.mxu0 %v2444
    %3532 = vmatprep.subr.bf16.mxu0 %v2439
    %3533 = vmatpush2.bf16.msra.mxu0 %v2438
    %3534 = vmatprep.subr.bf16.mxu0 %v2433
    %3535 = vmatpush2.bf16.msra.mxu0 %v2432
    %3536 = vmatprep.subr.bf16.mxu0 %v2427
    %3537 = vmatpush2.bf16.msra.mxu0 %v2426
    %3538 = vmatprep.subr.bf16.mxu0 %v2421
    %3539 = vmatpush2.bf16.msra.mxu0 %v2420
    %3540 = vmatprep.subr.bf16.mxu0 %v2415
    %3541 = vmatpush2.bf16.msra.mxu0 %v2414
    %3542 = vmatprep.subr.bf16.mxu0 %v2409
    %3543 = vmatpush2.bf16.msra.mxu0 %v2408
    %3544 = vmatprep.mubr.bf16.mxu0 %v1493
    %3545 = vmatmul.mubr.bf16.gmra.mxu0 %v1492
    %v3546 = vpop.f32.mrf.mxu0
    %v3547 = vadd.f32 %v1769, %v3546
    %v3548 = vpop.f32.mrf.mxu0
    %v3549 = vadd.f32 %v1773, %v3548
    %v3550 = vpop.f32.mrf.mxu0
    %v3551 = vadd.f32 %v1769, %v3550
    %v3552 = vpop.f32.mrf.mxu0
    %v3553 = vadd.f32 %v1773, %v3552
    %3554 = vmatprep.mubr.bf16.mxu0 %v1497
    %3555 = vmatmul.mubr.bf16.gmra.mxu0 %v1496
    %v3556 = vpop.f32.mrf.mxu0
    %v3557 = vadd.f32 %v1769, %v3556
    %v3558 = vpop.f32.mrf.mxu0
    %v3559 = vadd.f32 %v1773, %v3558
    %v3560 = vpop.f32.mrf.mxu0
    %v3561 = vadd.f32 %v1769, %v3560
    %v3562 = vpop.f32.mrf.mxu0
    %v3563 = vadd.f32 %v1773, %v3562
    %3564 = vmatprep.mubr.bf16.mxu0 %v1501
    %3565 = vmatmul.mubr.bf16.gmra.mxu0 %v1500
    %v3566 = vpop.f32.mrf.mxu0
    %v3567 = vadd.f32 %v1769, %v3566
    %v3568 = vpop.f32.mrf.mxu0
    %v3569 = vadd.f32 %v1773, %v3568
    %v3570 = vpop.f32.mrf.mxu0
    %v3571 = vadd.f32 %v1769, %v3570
    %v3572 = vpop.f32.mrf.mxu0
    %v3573 = vadd.f32 %v1773, %v3572
    %3574 = vmatprep.mubr.bf16.mxu0 %v1505
    %3575 = vmatmul.mubr.bf16.gmra.mxu0 %v1504
    %v3576 = vpop.f32.mrf.mxu0
    %v3577 = vadd.f32 %v1769, %v3576
    %v3578 = vpop.f32.mrf.mxu0
    %v3579 = vadd.f32 %v1773, %v3578
    %v3580 = vpop.f32.mrf.mxu0
    %v3581 = vadd.f32 %v1769, %v3580
    %v3582 = vpop.f32.mrf.mxu0
    %v3583 = vadd.f32 %v1773, %v3582
    %3584 = vmatprep.mubr.bf16.mxu0 %v1509
    %3585 = vmatmul.mubr.bf16.gmra.mxu0 %v1508
    %v3586 = vpop.f32.mrf.mxu0
    %v3587 = vadd.f32 %v1769, %v3586
    %v3588 = vpop.f32.mrf.mxu0
    %v3589 = vadd.f32 %v1773, %v3588
    %v3590 = vpop.f32.mrf.mxu0
    %v3591 = vadd.f32 %v1769, %v3590
    %v3592 = vpop.f32.mrf.mxu0
    %v3593 = vadd.f32 %v1773, %v3592
    %3594 = vmatprep.mubr.bf16.mxu0 %v1513
    %3595 = vmatmul.mubr.bf16.gmra.mxu0 %v1512
    %v3596 = vpop.f32.mrf.mxu0
    %v3597 = vadd.f32 %v1769, %v3596
    %v3598 = vpop.f32.mrf.mxu0
    %v3599 = vadd.f32 %v1773, %v3598
    %v3600 = vpop.f32.mrf.mxu0
    %v3601 = vadd.f32 %v1769, %v3600
    %v3602 = vpop.f32.mrf.mxu0
    %v3603 = vadd.f32 %v1773, %v3602
    %3604 = vmatprep.mubr.bf16.mxu0 %v1517
    %3605 = vmatmul.mubr.bf16.gmra.mxu0 %v1516
    %v3606 = vpop.f32.mrf.mxu0
    %v3607 = vadd.f32 %v1769, %v3606
    %v3608 = vpop.f32.mrf.mxu0
    %v3609 = vadd.f32 %v1773, %v3608
    %v3610 = vpop.f32.mrf.mxu0
    %v3611 = vadd.f32 %v1769, %v3610
    %v3612 = vpop.f32.mrf.mxu0
    %v3613 = vadd.f32 %v1773, %v3612
    %3614 = vmatprep.mubr.bf16.mxu0 %v1521
    %3615 = vmatmul.mubr.bf16.gmra.mxu0 %v1520
    %v3616 = vpop.f32.mrf.mxu0
    %v3617 = vadd.f32 %v1769, %v3616
    %v3618 = vpop.f32.mrf.mxu0
    %v3619 = vadd.f32 %v1773, %v3618
    %v3620 = vpop.f32.mrf.mxu0
    %v3621 = vadd.f32 %v1769, %v3620
    %v3622 = vpop.f32.mrf.mxu0
    %v3623 = vadd.f32 %v1773, %v3622
    %3624 = vmatprep.mubr.bf16.mxu0 %v1525
    %3625 = vmatmul.mubr.bf16.gmra.mxu0 %v1524
    %v3626 = vpop.f32.mrf.mxu0
    %v3627 = vadd.f32 %v1769, %v3626
    %v3628 = vpop.f32.mrf.mxu0
    %v3629 = vadd.f32 %v1773, %v3628
    %v3630 = vpop.f32.mrf.mxu0
    %v3631 = vadd.f32 %v1769, %v3630
    %v3632 = vpop.f32.mrf.mxu0
    %v3633 = vadd.f32 %v1773, %v3632
    %3634 = vmatprep.mubr.bf16.mxu0 %v1529
    %3635 = vmatmul.mubr.bf16.gmra.mxu0 %v1528
    %v3636 = vpop.f32.mrf.mxu0
    %v3637 = vadd.f32 %v1769, %v3636
    %v3638 = vpop.f32.mrf.mxu0
    %v3639 = vadd.f32 %v1773, %v3638
    %v3640 = vpop.f32.mrf.mxu0
    %v3641 = vadd.f32 %v1769, %v3640
    %v3642 = vpop.f32.mrf.mxu0
    %v3643 = vadd.f32 %v1773, %v3642
    %3644 = vmatprep.mubr.bf16.mxu0 %v1533
    %3645 = vmatmul.mubr.bf16.gmra.mxu0 %v1532
    %v3646 = vpop.f32.mrf.mxu0
    %v3647 = vadd.f32 %v1769, %v3646
    %v3648 = vpop.f32.mrf.mxu0
    %v3649 = vadd.f32 %v1773, %v3648
    %v3650 = vpop.f32.mrf.mxu0
    %v3651 = vadd.f32 %v1769, %v3650
    %v3652 = vpop.f32.mrf.mxu0
    %v3653 = vadd.f32 %v1773, %v3652
    %3654 = vmatprep.mubr.bf16.mxu0 %v1537
    %3655 = vmatmul.mubr.bf16.gmra.mxu0 %v1536
    %v3656 = vpop.f32.mrf.mxu0
    %v3657 = vadd.f32 %v1769, %v3656
    %v3658 = vpop.f32.mrf.mxu0
    %v3659 = vadd.f32 %v1773, %v3658
    %v3660 = vpop.f32.mrf.mxu0
    %v3661 = vadd.f32 %v1769, %v3660
    %v3662 = vpop.f32.mrf.mxu0
    %v3663 = vadd.f32 %v1773, %v3662
    %3664 = vmatprep.mubr.bf16.mxu0 %v1541
    %3665 = vmatmul.mubr.bf16.gmra.mxu0 %v1540
    %v3666 = vpop.f32.mrf.mxu0
    %v3667 = vadd.f32 %v1769, %v3666
    %v3668 = vpop.f32.mrf.mxu0
    %v3669 = vadd.f32 %v1773, %v3668
    %v3670 = vpop.f32.mrf.mxu0
    %v3671 = vadd.f32 %v1769, %v3670
    %v3672 = vpop.f32.mrf.mxu0
    %v3673 = vadd.f32 %v1773, %v3672
    %3674 = vmatprep.mubr.bf16.mxu0 %v1545
    %3675 = vmatmul.mubr.bf16.gmra.mxu0 %v1544
    %v3676 = vpop.f32.mrf.mxu0
    %v3677 = vadd.f32 %v1769, %v3676
    %v3678 = vpop.f32.mrf.mxu0
    %v3679 = vadd.f32 %v1773, %v3678
    %v3680 = vpop.f32.mrf.mxu0
    %v3681 = vadd.f32 %v1769, %v3680
    %v3682 = vpop.f32.mrf.mxu0
    %v3683 = vadd.f32 %v1773, %v3682
    %3684 = vmatprep.mubr.bf16.mxu0 %v1549
    %3685 = vmatmul.mubr.bf16.gmra.mxu0 %v1548
    %v3686 = vpop.f32.mrf.mxu0
    %v3687 = vadd.f32 %v1769, %v3686
    %v3688 = vpop.f32.mrf.mxu0
    %v3689 = vadd.f32 %v1773, %v3688
    %v3690 = vpop.f32.mrf.mxu0
    %v3691 = vadd.f32 %v1769, %v3690
    %v3692 = vpop.f32.mrf.mxu0
    %v3693 = vadd.f32 %v1773, %v3692
    %3694 = vmatprep.mubr.bf16.mxu0 %v1553
    %3695 = vmatmul.mubr.bf16.gmra.mxu0 %v1552
    %v3696 = vpop.f32.mrf.mxu0
    %v3697 = vadd.f32 %v1769, %v3696
    %v3698 = vpop.f32.mrf.mxu0
    %v3699 = vadd.f32 %v1773, %v3698
    %v3700 = vpop.f32.mrf.mxu0
    %v3701 = vadd.f32 %v1769, %v3700
    %v3702 = vpop.f32.mrf.mxu0
    %v3703 = vadd.f32 %v1773, %v3702
    %3704 = vdwg.mxu0
    %3705 = vmatprep.subr.bf16.mxu0 %v2499
    %3706 = vmatpush1.bf16.msra.mxu0 %v2498
    %3707 = vmatprep.subr.bf16.mxu0 %v2493
    %3708 = vmatpush1.bf16.msra.mxu0 %v2492
    %3709 = vmatprep.subr.bf16.mxu0 %v2487
    %3710 = vmatpush1.bf16.msra.mxu0 %v2486
    %3711 = vmatprep.subr.bf16.mxu0 %v2481
    %3712 = vmatpush1.bf16.msra.mxu0 %v2480
    %3713 = vmatprep.subr.bf16.mxu0 %v2475
    %3714 = vmatpush1.bf16.msra.mxu0 %v2474
    %3715 = vmatprep.subr.bf16.mxu0 %v2469
    %3716 = vmatpush1.bf16.msra.mxu0 %v2468
    %3717 = vmatprep.subr.bf16.mxu0 %v2463
    %3718 = vmatpush1.bf16.msra.mxu0 %v2462
    %3719 = vmatprep.subr.bf16.mxu0 %v2457
    %3720 = vmatpush1.bf16.msra.mxu0 %v2456
    %3721 = vmatprep.subr.bf16.mxu0 %v2547
    %3722 = vmatpush2.bf16.msra.mxu0 %v2546
    %3723 = vmatprep.subr.bf16.mxu0 %v2541
    %3724 = vmatpush2.bf16.msra.mxu0 %v2540
    %3725 = vmatprep.subr.bf16.mxu0 %v2535
    %3726 = vmatpush2.bf16.msra.mxu0 %v2534
    %3727 = vmatprep.subr.bf16.mxu0 %v2529
    %3728 = vmatpush2.bf16.msra.mxu0 %v2528
    %3729 = vmatprep.subr.bf16.mxu0 %v2523
    %3730 = vmatpush2.bf16.msra.mxu0 %v2522
    %3731 = vmatprep.subr.bf16.mxu0 %v2517
    %3732 = vmatpush2.bf16.msra.mxu0 %v2516
    %3733 = vmatprep.subr.bf16.mxu0 %v2511
    %3734 = vmatpush2.bf16.msra.mxu0 %v2510
    %3735 = vmatprep.subr.bf16.mxu0 %v2505
    %3736 = vmatpush2.bf16.msra.mxu0 %v2504
    %3737 = vmatprep.mubr.bf16.mxu0 %v1495
    %3738 = vmatmul.mubr.bf16.gmra.mxu0 %v1494
    %v3739 = vpop.f32.mrf.mxu0
    %v3740 = vadd.f32 %v3547, %v3739
    %v3741 = vpop.f32.mrf.mxu0
    %v3742 = vadd.f32 %v3549, %v3741
    %v3743 = vpop.f32.mrf.mxu0
    %v3744 = vadd.f32 %v3551, %v3743
    %v3745 = vpop.f32.mrf.mxu0
    %v3746 = vadd.f32 %v3553, %v3745
    %3747 = vmatprep.mubr.bf16.mxu0 %v1499
    %3748 = vmatmul.mubr.bf16.gmra.mxu0 %v1498
    %v3749 = vpop.f32.mrf.mxu0
    %v3750 = vadd.f32 %v3557, %v3749
    %v3751 = vpop.f32.mrf.mxu0
    %v3752 = vadd.f32 %v3559, %v3751
    %v3753 = vpop.f32.mrf.mxu0
    %v3754 = vadd.f32 %v3561, %v3753
    %v3755 = vpop.f32.mrf.mxu0
    %v3756 = vadd.f32 %v3563, %v3755
    %3757 = vmatprep.mubr.bf16.mxu0 %v1503
    %3758 = vmatmul.mubr.bf16.gmra.mxu0 %v1502
    %v3759 = vpop.f32.mrf.mxu0
    %v3760 = vadd.f32 %v3567, %v3759
    %v3761 = vpop.f32.mrf.mxu0
    %v3762 = vadd.f32 %v3569, %v3761
    %v3763 = vpop.f32.mrf.mxu0
    %v3764 = vadd.f32 %v3571, %v3763
    %v3765 = vpop.f32.mrf.mxu0
    %v3766 = vadd.f32 %v3573, %v3765
    %3767 = vmatprep.mubr.bf16.mxu0 %v1507
    %3768 = vmatmul.mubr.bf16.gmra.mxu0 %v1506
    %v3769 = vpop.f32.mrf.mxu0
    %v3770 = vadd.f32 %v3577, %v3769
    %v3771 = vpop.f32.mrf.mxu0
    %v3772 = vadd.f32 %v3579, %v3771
    %v3773 = vpop.f32.mrf.mxu0
    %v3774 = vadd.f32 %v3581, %v3773
    %v3775 = vpop.f32.mrf.mxu0
    %v3776 = vadd.f32 %v3583, %v3775
    %3777 = vmatprep.mubr.bf16.mxu0 %v1511
    %3778 = vmatmul.mubr.bf16.gmra.mxu0 %v1510
    %v3779 = vpop.f32.mrf.mxu0
    %v3780 = vadd.f32 %v3587, %v3779
    %v3781 = vpop.f32.mrf.mxu0
    %v3782 = vadd.f32 %v3589, %v3781
    %v3783 = vpop.f32.mrf.mxu0
    %v3784 = vadd.f32 %v3591, %v3783
    %v3785 = vpop.f32.mrf.mxu0
    %v3786 = vadd.f32 %v3593, %v3785
    %3787 = vmatprep.mubr.bf16.mxu0 %v1515
    %3788 = vmatmul.mubr.bf16.gmra.mxu0 %v1514
    %v3789 = vpop.f32.mrf.mxu0
    %v3790 = vadd.f32 %v3597, %v3789
    %v3791 = vpop.f32.mrf.mxu0
    %v3792 = vadd.f32 %v3599, %v3791
    %v3793 = vpop.f32.mrf.mxu0
    %v3794 = vadd.f32 %v3601, %v3793
    %v3795 = vpop.f32.mrf.mxu0
    %v3796 = vadd.f32 %v3603, %v3795
    %3797 = vmatprep.mubr.bf16.mxu0 %v1519
    %3798 = vmatmul.mubr.bf16.gmra.mxu0 %v1518
    %v3799 = vpop.f32.mrf.mxu0
    %v3800 = vadd.f32 %v3607, %v3799
    %v3801 = vpop.f32.mrf.mxu0
    %v3802 = vadd.f32 %v3609, %v3801
    %v3803 = vpop.f32.mrf.mxu0
    %v3804 = vadd.f32 %v3611, %v3803
    %v3805 = vpop.f32.mrf.mxu0
    %v3806 = vadd.f32 %v3613, %v3805
    %3807 = vmatprep.mubr.bf16.mxu0 %v1523
    %3808 = vmatmul.mubr.bf16.gmra.mxu0 %v1522
    %v3809 = vpop.f32.mrf.mxu0
    %v3810 = vadd.f32 %v3617, %v3809
    %v3811 = vpop.f32.mrf.mxu0
    %v3812 = vadd.f32 %v3619, %v3811
    %v3813 = vpop.f32.mrf.mxu0
    %v3814 = vadd.f32 %v3621, %v3813
    %v3815 = vpop.f32.mrf.mxu0
    %v3816 = vadd.f32 %v3623, %v3815
    %3817 = vmatprep.mubr.bf16.mxu0 %v1527
    %3818 = vmatmul.mubr.bf16.gmra.mxu0 %v1526
    %v3819 = vpop.f32.mrf.mxu0
    %v3820 = vadd.f32 %v3627, %v3819
    %v3821 = vpop.f32.mrf.mxu0
    %v3822 = vadd.f32 %v3629, %v3821
    %v3823 = vpop.f32.mrf.mxu0
    %v3824 = vadd.f32 %v3631, %v3823
    %v3825 = vpop.f32.mrf.mxu0
    %v3826 = vadd.f32 %v3633, %v3825
    %3827 = vmatprep.mubr.bf16.mxu0 %v1531
    %3828 = vmatmul.mubr.bf16.gmra.mxu0 %v1530
    %v3829 = vpop.f32.mrf.mxu0
    %v3830 = vadd.f32 %v3637, %v3829
    %v3831 = vpop.f32.mrf.mxu0
    %v3832 = vadd.f32 %v3639, %v3831
    %v3833 = vpop.f32.mrf.mxu0
    %v3834 = vadd.f32 %v3641, %v3833
    %v3835 = vpop.f32.mrf.mxu0
    %v3836 = vadd.f32 %v3643, %v3835
    %3837 = vmatprep.mubr.bf16.mxu0 %v1535
    %3838 = vmatmul.mubr.bf16.gmra.mxu0 %v1534
    %v3839 = vpop.f32.mrf.mxu0
    %v3840 = vadd.f32 %v3647, %v3839
    %v3841 = vpop.f32.mrf.mxu0
    %v3842 = vadd.f32 %v3649, %v3841
    %v3843 = vpop.f32.mrf.mxu0
    %v3844 = vadd.f32 %v3651, %v3843
    %v3845 = vpop.f32.mrf.mxu0
    %v3846 = vadd.f32 %v3653, %v3845
    %3847 = vmatprep.mubr.bf16.mxu0 %v1539
    %3848 = vmatmul.mubr.bf16.gmra.mxu0 %v1538
    %v3849 = vpop.f32.mrf.mxu0
    %v3850 = vadd.f32 %v3657, %v3849
    %v3851 = vpop.f32.mrf.mxu0
    %v3852 = vadd.f32 %v3659, %v3851
    %v3853 = vpop.f32.mrf.mxu0
    %v3854 = vadd.f32 %v3661, %v3853
    %v3855 = vpop.f32.mrf.mxu0
    %v3856 = vadd.f32 %v3663, %v3855
    %3857 = vmatprep.mubr.bf16.mxu0 %v1543
    %3858 = vmatmul.mubr.bf16.gmra.mxu0 %v1542
    %v3859 = vpop.f32.mrf.mxu0
    %v3860 = vadd.f32 %v3667, %v3859
    %v3861 = vpop.f32.mrf.mxu0
    %v3862 = vadd.f32 %v3669, %v3861
    %v3863 = vpop.f32.mrf.mxu0
    %v3864 = vadd.f32 %v3671, %v3863
    %v3865 = vpop.f32.mrf.mxu0
    %v3866 = vadd.f32 %v3673, %v3865
    %3867 = vmatprep.mubr.bf16.mxu0 %v1547
    %3868 = vmatmul.mubr.bf16.gmra.mxu0 %v1546
    %v3869 = vpop.f32.mrf.mxu0
    %v3870 = vadd.f32 %v3677, %v3869
    %v3871 = vpop.f32.mrf.mxu0
    %v3872 = vadd.f32 %v3679, %v3871
    %v3873 = vpop.f32.mrf.mxu0
    %v3874 = vadd.f32 %v3681, %v3873
    %v3875 = vpop.f32.mrf.mxu0
    %v3876 = vadd.f32 %v3683, %v3875
    %3877 = vmatprep.mubr.bf16.mxu0 %v1551
    %3878 = vmatmul.mubr.bf16.gmra.mxu0 %v1550
    %v3879 = vpop.f32.mrf.mxu0
    %v3880 = vadd.f32 %v3687, %v3879
    %v3881 = vpop.f32.mrf.mxu0
    %v3882 = vadd.f32 %v3689, %v3881
    %v3883 = vpop.f32.mrf.mxu0
    %v3884 = vadd.f32 %v3691, %v3883
    %v3885 = vpop.f32.mrf.mxu0
    %v3886 = vadd.f32 %v3693, %v3885
    %3887 = vmatprep.mubr.bf16.mxu0 %v1555
    %3888 = vmatmul.mubr.bf16.gmra.mxu0 %v1554
    %v3889 = vpop.f32.mrf.mxu0
    %v3890 = vadd.f32 %v3697, %v3889
    %v3891 = vpop.f32.mrf.mxu0
    %v3892 = vadd.f32 %v3699, %v3891
    %v3893 = vpop.f32.mrf.mxu0
    %v3894 = vadd.f32 %v3701, %v3893
    %v3895 = vpop.f32.mrf.mxu0
    %v3896 = vadd.f32 %v3703, %v3895
    %3897 = vdwg.mxu0
    %v3898 = vmax.f32 %v2968, 0.0
    %v3899 = vmax.f32 %v2970, 0.0
    %v3900 = vmax.f32 %v3354, 0.0
    %v3901 = vmax.f32 %v3356, 0.0
    %v3902 = vmax.f32 %v3740, 0.0
    %v3903 = vmax.f32 %v3742, 0.0
    %v3904 = vmax.f32 %v2972, 0.0
    %v3905 = vmax.f32 %v2974, 0.0
    %v3906 = vmax.f32 %v3358, 0.0
    %v3907 = vmax.f32 %v3360, 0.0
    %v3908 = vmax.f32 %v3744, 0.0
    %v3909 = vmax.f32 %v3746, 0.0
    %v3910 = vmax.f32 %v2978, 0.0
    %v3911 = vmax.f32 %v2980, 0.0
    %v3912 = vmax.f32 %v3364, 0.0
    %v3913 = vmax.f32 %v3366, 0.0
    %v3914 = vmax.f32 %v3750, 0.0
    %v3915 = vmax.f32 %v3752, 0.0
    %v3916 = vmax.f32 %v2982, 0.0
    %v3917 = vmax.f32 %v2984, 0.0
    %v3918 = vmax.f32 %v3368, 0.0
    %v3919 = vmax.f32 %v3370, 0.0
    %v3920 = vmax.f32 %v3754, 0.0
    %v3921 = vmax.f32 %v3756, 0.0
    %v3922 = vmax.f32 %v2988, 0.0
    %v3923 = vmax.f32 %v2990, 0.0
    %v3924 = vmax.f32 %v3374, 0.0
    %v3925 = vmax.f32 %v3376, 0.0
    %v3926 = vmax.f32 %v3760, 0.0
    %v3927 = vmax.f32 %v3762, 0.0
    %v3928 = vmax.f32 %v2992, 0.0
    %v3929 = vmax.f32 %v2994, 0.0
    %v3930 = vmax.f32 %v3378, 0.0
    %v3931 = vmax.f32 %v3380, 0.0
    %v3932 = vmax.f32 %v3764, 0.0
    %v3933 = vmax.f32 %v3766, 0.0
    %v3934 = vmax.f32 %v2998, 0.0
    %v3935 = vmax.f32 %v3000, 0.0
    %v3936 = vmax.f32 %v3384, 0.0
    %v3937 = vmax.f32 %v3386, 0.0
    %v3938 = vmax.f32 %v3770, 0.0
    %v3939 = vmax.f32 %v3772, 0.0
    %v3940 = vmax.f32 %v3002, 0.0
    %v3941 = vmax.f32 %v3004, 0.0
    %v3942 = vmax.f32 %v3388, 0.0
    %v3943 = vmax.f32 %v3390, 0.0
    %v3944 = vmax.f32 %v3774, 0.0
    %v3945 = vmax.f32 %v3776, 0.0
    %v3946 = vmax.f32 %v3008, 0.0
    %v3947 = vmax.f32 %v3010, 0.0
    %v3948 = vmax.f32 %v3394, 0.0
    %v3949 = vmax.f32 %v3396, 0.0
    %v3950 = vmax.f32 %v3780, 0.0
    %v3951 = vmax.f32 %v3782, 0.0
    %v3952 = vmax.f32 %v3012, 0.0
    %v3953 = vmax.f32 %v3014, 0.0
    %v3954 = vmax.f32 %v3398, 0.0
    %v3955 = vmax.f32 %v3400, 0.0
    %v3956 = vmax.f32 %v3784, 0.0
    %v3957 = vmax.f32 %v3786, 0.0
    %v3958 = vmax.f32 %v3018, 0.0
    %v3959 = vmax.f32 %v3020, 0.0
    %v3960 = vmax.f32 %v3404, 0.0
    %v3961 = vmax.f32 %v3406, 0.0
    %v3962 = vmax.f32 %v3790, 0.0
    %v3963 = vmax.f32 %v3792, 0.0
    %v3964 = vmax.f32 %v3022, 0.0
    %v3965 = vmax.f32 %v3024, 0.0
    %v3966 = vmax.f32 %v3408, 0.0
    %v3967 = vmax.f32 %v3410, 0.0
    %v3968 = vmax.f32 %v3794, 0.0
    %v3969 = vmax.f32 %v3796, 0.0
    %v3970 = vmax.f32 %v3028, 0.0
    %v3971 = vmax.f32 %v3030, 0.0
    %v3972 = vmax.f32 %v3414, 0.0
    %v3973 = vmax.f32 %v3416, 0.0
    %v3974 = vmax.f32 %v3800, 0.0
    %v3975 = vmax.f32 %v3802, 0.0
    %v3976 = vmax.f32 %v3032, 0.0
    %v3977 = vmax.f32 %v3034, 0.0
    %v3978 = vmax.f32 %v3418, 0.0
    %v3979 = vmax.f32 %v3420, 0.0
    %v3980 = vmax.f32 %v3804, 0.0
    %v3981 = vmax.f32 %v3806, 0.0
    %v3982 = vmax.f32 %v3038, 0.0
    %v3983 = vmax.f32 %v3040, 0.0
    %v3984 = vmax.f32 %v3424, 0.0
    %v3985 = vmax.f32 %v3426, 0.0
    %v3986 = vmax.f32 %v3810, 0.0
    %v3987 = vmax.f32 %v3812, 0.0
    %v3988 = vmax.f32 %v3042, 0.0
    %v3989 = vmax.f32 %v3044, 0.0
    %v3990 = vmax.f32 %v3428, 0.0
    %v3991 = vmax.f32 %v3430, 0.0
    %v3992 = vmax.f32 %v3814, 0.0
    %v3993 = vmax.f32 %v3816, 0.0
    %v3994 = vmax.f32 %v3048, 0.0
    %v3995 = vmax.f32 %v3050, 0.0
    %v3996 = vmax.f32 %v3434, 0.0
    %v3997 = vmax.f32 %v3436, 0.0
    %v3998 = vmax.f32 %v3820, 0.0
    %v3999 = vmax.f32 %v3822, 0.0
    %v4000 = vmax.f32 %v3052, 0.0
    %v4001 = vmax.f32 %v3054, 0.0
    %v4002 = vmax.f32 %v3438, 0.0
    %v4003 = vmax.f32 %v3440, 0.0
    %v4004 = vmax.f32 %v3824, 0.0
    %v4005 = vmax.f32 %v3826, 0.0
    %v4006 = vmax.f32 %v3058, 0.0
    %v4007 = vmax.f32 %v3060, 0.0
    %v4008 = vmax.f32 %v3444, 0.0
    %v4009 = vmax.f32 %v3446, 0.0
    %v4010 = vmax.f32 %v3830, 0.0
    %v4011 = vmax.f32 %v3832, 0.0
    %v4012 = vmax.f32 %v3062, 0.0
    %v4013 = vmax.f32 %v3064, 0.0
    %v4014 = vmax.f32 %v3448, 0.0
    %v4015 = vmax.f32 %v3450, 0.0
    %v4016 = vmax.f32 %v3834, 0.0
    %v4017 = vmax.f32 %v3836, 0.0
    %v4018 = vmax.f32 %v3068, 0.0
    %v4019 = vmax.f32 %v3070, 0.0
    %v4020 = vmax.f32 %v3454, 0.0
    %v4021 = vmax.f32 %v3456, 0.0
    %v4022 = vmax.f32 %v3840, 0.0
    %v4023 = vmax.f32 %v3842, 0.0
    %v4024 = vmax.f32 %v3072, 0.0
    %v4025 = vmax.f32 %v3074, 0.0
    %v4026 = vmax.f32 %v3458, 0.0
    %v4027 = vmax.f32 %v3460, 0.0
    %v4028 = vmax.f32 %v3844, 0.0
    %v4029 = vmax.f32 %v3846, 0.0
    %v4030 = vmax.f32 %v3078, 0.0
    %v4031 = vmax.f32 %v3080, 0.0
    %v4032 = vmax.f32 %v3464, 0.0
    %v4033 = vmax.f32 %v3466, 0.0
    %v4034 = vmax.f32 %v3850, 0.0
    %v4035 = vmax.f32 %v3852, 0.0
    %v4036 = vmax.f32 %v3082, 0.0
    %v4037 = vmax.f32 %v3084, 0.0
    %v4038 = vmax.f32 %v3468, 0.0
    %v4039 = vmax.f32 %v3470, 0.0
    %v4040 = vmax.f32 %v3854, 0.0
    %v4041 = vmax.f32 %v3856, 0.0
    %v4042 = vmax.f32 %v3088, 0.0
    %v4043 = vmax.f32 %v3090, 0.0
    %v4044 = vmax.f32 %v3474, 0.0
    %v4045 = vmax.f32 %v3476, 0.0
    %v4046 = vmax.f32 %v3860, 0.0
    %v4047 = vmax.f32 %v3862, 0.0
    %v4048 = vmax.f32 %v3092, 0.0
    %v4049 = vmax.f32 %v3094, 0.0
    %v4050 = vmax.f32 %v3478, 0.0
    %v4051 = vmax.f32 %v3480, 0.0
    %v4052 = vmax.f32 %v3864, 0.0
    %v4053 = vmax.f32 %v3866, 0.0
    %v4054 = vmax.f32 %v3098, 0.0
    %v4055 = vmax.f32 %v3100, 0.0
    %v4056 = vmax.f32 %v3484, 0.0
    %v4057 = vmax.f32 %v3486, 0.0
    %v4058 = vmax.f32 %v3870, 0.0
    %v4059 = vmax.f32 %v3872, 0.0
    %v4060 = vmax.f32 %v3102, 0.0
    %v4061 = vmax.f32 %v3104, 0.0
    %v4062 = vmax.f32 %v3488, 0.0
    %v4063 = vmax.f32 %v3490, 0.0
    %v4064 = vmax.f32 %v3874, 0.0
    %v4065 = vmax.f32 %v3876, 0.0
    %v4066 = vmax.f32 %v3108, 0.0
    %v4067 = vmax.f32 %v3110, 0.0
    %v4068 = vmax.f32 %v3494, 0.0
    %v4069 = vmax.f32 %v3496, 0.0
    %v4070 = vmax.f32 %v3880, 0.0
    %v4071 = vmax.f32 %v3882, 0.0
    %v4072 = vmax.f32 %v3112, 0.0
    %v4073 = vmax.f32 %v3114, 0.0
    %v4074 = vmax.f32 %v3498, 0.0
    %v4075 = vmax.f32 %v3500, 0.0
    %v4076 = vmax.f32 %v3884, 0.0
    %v4077 = vmax.f32 %v3886, 0.0
    %v4078 = vmax.f32 %v3118, 0.0
    %v4079 = vmax.f32 %v3120, 0.0
    %v4080 = vmax.f32 %v3504, 0.0
    %v4081 = vmax.f32 %v3506, 0.0
    %v4082 = vmax.f32 %v3890, 0.0
    %v4083 = vmax.f32 %v3892, 0.0
    %v4084 = vmax.f32 %v3122, 0.0
    %v4085 = vmax.f32 %v3124, 0.0
    %v4086 = vmax.f32 %v3508, 0.0
    %v4087 = vmax.f32 %v3510, 0.0
    %v4088 = vmax.f32 %v3894, 0.0
    %v4089 = vmax.f32 %v3896, 0.0
    %v4090 = vld [vmem:[#allocation11] sm:$0xff]
    %v4091 = vld [vmem:[#allocation11 + $0x8] sm:$0xff]
    %4092 = vmatprep.subr.mxu0 %v3989
    %4093 = vmatpush1.msra.mxu0 %v3988
    %4094 = vmatprep.subr.mxu0 %v3983
    %4095 = vmatpush1.msra.mxu0 %v3982
    %4096 = vmatprep.subr.mxu0 %v3977
    %4097 = vmatpush1.msra.mxu0 %v3976
    %4098 = vmatprep.subr.mxu0 %v3971
    %4099 = vmatpush1.msra.mxu0 %v3970
    %4100 = vmatprep.subr.mxu0 %v3965
    %4101 = vmatpush1.msra.mxu0 %v3964
    %4102 = vmatprep.subr.mxu0 %v3959
    %4103 = vmatpush1.msra.mxu0 %v3958
    %4104 = vmatprep.subr.mxu0 %v3953
    %4105 = vmatpush1.msra.mxu0 %v3952
    %4106 = vmatprep.subr.mxu0 %v3947
    %4107 = vmatpush1.msra.mxu0 %v3946
    %4108 = vmatprep.subr.mxu0 %v3941
    %4109 = vmatpush1.msra.mxu0 %v3940
    %4110 = vmatprep.subr.mxu0 %v3935
    %4111 = vmatpush1.msra.mxu0 %v3934
    %4112 = vmatprep.subr.mxu0 %v3929
    %4113 = vmatpush1.msra.mxu0 %v3928
    %4114 = vmatprep.subr.mxu0 %v3923
    %4115 = vmatpush1.msra.mxu0 %v3922
    %4116 = vmatprep.subr.mxu0 %v3917
    %4117 = vmatpush1.msra.mxu0 %v3916
    %4118 = vmatprep.subr.mxu0 %v3911
    %4119 = vmatpush1.msra.mxu0 %v3910
    %4120 = vmatprep.subr.mxu0 %v3905
    %4121 = vmatpush1.msra.mxu0 %v3904
    %4122 = vmatprep.subr.mxu0 %v3899
    %4123 = vmatpush1.msra.mxu0 %v3898
    %4124 = vmatprep.subr.mxu0 %v4085
    %4125 = vmatpush2.msra.mxu0 %v4084
    %4126 = vmatprep.subr.mxu0 %v4079
    %4127 = vmatpush2.msra.mxu0 %v4078
    %4128 = vmatprep.subr.mxu0 %v4073
    %4129 = vmatpush2.msra.mxu0 %v4072
    %4130 = vmatprep.subr.mxu0 %v4067
    %4131 = vmatpush2.msra.mxu0 %v4066
    %4132 = vmatprep.subr.mxu0 %v4061
    %4133 = vmatpush2.msra.mxu0 %v4060
    %4134 = vmatprep.subr.mxu0 %v4055
    %4135 = vmatpush2.msra.mxu0 %v4054
    %4136 = vmatprep.subr.mxu0 %v4049
    %4137 = vmatpush2.msra.mxu0 %v4048
    %4138 = vmatprep.subr.mxu0 %v4043
    %4139 = vmatpush2.msra.mxu0 %v4042
    %4140 = vmatprep.subr.mxu0 %v4037
    %4141 = vmatpush2.msra.mxu0 %v4036
    %4142 = vmatprep.subr.mxu0 %v4031
    %4143 = vmatpush2.msra.mxu0 %v4030
    %4144 = vmatprep.subr.mxu0 %v4025
    %4145 = vmatpush2.msra.mxu0 %v4024
    %4146 = vmatprep.subr.mxu0 %v4019
    %4147 = vmatpush2.msra.mxu0 %v4018
    %4148 = vmatprep.subr.mxu0 %v4013
    %4149 = vmatpush2.msra.mxu0 %v4012
    %4150 = vmatprep.subr.mxu0 %v4007
    %4151 = vmatpush2.msra.mxu0 %v4006
    %4152 = vmatprep.subr.mxu0 %v4001
    %4153 = vmatpush2.msra.mxu0 %v4000
    %4154 = vmatprep.subr.mxu0 %v3995
    %4155 = vmatpush2.msra.mxu0 %v3994
    %4156 = vmatprep.mubr.f32.mxu0 %v4091
    %4157 = vmatmul.mubr.f32.gmra.mxu0 %v4090
    %v4158 = vpop.f32.mrf.mxu0
    %v4159 = vadd.f32 0.0, %v4158
    %v4160 = vpop.f32.mrf.mxu0
    %v4161 = vadd.f32 0.0, %v4160
    %4162 = vdwg.mxu0
    %4163 = vmatprep.subr.mxu0 %v3991
    %4164 = vmatpush1.msra.mxu0 %v3990
    %4165 = vmatprep.subr.mxu0 %v3985
    %4166 = vmatpush1.msra.mxu0 %v3984
    %4167 = vmatprep.subr.mxu0 %v3979
    %4168 = vmatpush1.msra.mxu0 %v3978
    %4169 = vmatprep.subr.mxu0 %v3973
    %4170 = vmatpush1.msra.mxu0 %v3972
    %4171 = vmatprep.subr.mxu0 %v3967
    %4172 = vmatpush1.msra.mxu0 %v3966
    %4173 = vmatprep.subr.mxu0 %v3961
    %4174 = vmatpush1.msra.mxu0 %v3960
    %4175 = vmatprep.subr.mxu0 %v3955
    %4176 = vmatpush1.msra.mxu0 %v3954
    %4177 = vmatprep.subr.mxu0 %v3949
    %4178 = vmatpush1.msra.mxu0 %v3948
    %4179 = vmatprep.subr.mxu0 %v3943
    %4180 = vmatpush1.msra.mxu0 %v3942
    %4181 = vmatprep.subr.mxu0 %v3937
    %4182 = vmatpush1.msra.mxu0 %v3936
    %4183 = vmatprep.subr.mxu0 %v3931
    %4184 = vmatpush1.msra.mxu0 %v3930
    %4185 = vmatprep.subr.mxu0 %v3925
    %4186 = vmatpush1.msra.mxu0 %v3924
    %4187 = vmatprep.subr.mxu0 %v3919
    %4188 = vmatpush1.msra.mxu0 %v3918
    %4189 = vmatprep.subr.mxu0 %v3913
    %4190 = vmatpush1.msra.mxu0 %v3912
    %4191 = vmatprep.subr.mxu0 %v3907
    %4192 = vmatpush1.msra.mxu0 %v3906
    %4193 = vmatprep.subr.mxu0 %v3901
    %4194 = vmatpush1.msra.mxu0 %v3900
    %4195 = vmatprep.subr.mxu0 %v4087
    %4196 = vmatpush2.msra.mxu0 %v4086
    %4197 = vmatprep.subr.mxu0 %v4081
    %4198 = vmatpush2.msra.mxu0 %v4080
    %4199 = vmatprep.subr.mxu0 %v4075
    %4200 = vmatpush2.msra.mxu0 %v4074
    %4201 = vmatprep.subr.mxu0 %v4069
    %4202 = vmatpush2.msra.mxu0 %v4068
    %4203 = vmatprep.subr.mxu0 %v4063
    %4204 = vmatpush2.msra.mxu0 %v4062
    %4205 = vmatprep.subr.mxu0 %v4057
    %4206 = vmatpush2.msra.mxu0 %v4056
    %4207 = vmatprep.subr.mxu0 %v4051
    %4208 = vmatpush2.msra.mxu0 %v4050
    %4209 = vmatprep.subr.mxu0 %v4045
    %4210 = vmatpush2.msra.mxu0 %v4044
    %4211 = vmatprep.subr.mxu0 %v4039
    %4212 = vmatpush2.msra.mxu0 %v4038
    %4213 = vmatprep.subr.mxu0 %v4033
    %4214 = vmatpush2.msra.mxu0 %v4032
    %4215 = vmatprep.subr.mxu0 %v4027
    %4216 = vmatpush2.msra.mxu0 %v4026
    %4217 = vmatprep.subr.mxu0 %v4021
    %4218 = vmatpush2.msra.mxu0 %v4020
    %4219 = vmatprep.subr.mxu0 %v4015
    %4220 = vmatpush2.msra.mxu0 %v4014
    %4221 = vmatprep.subr.mxu0 %v4009
    %4222 = vmatpush2.msra.mxu0 %v4008
    %4223 = vmatprep.subr.mxu0 %v4003
    %4224 = vmatpush2.msra.mxu0 %v4002
    %4225 = vmatprep.subr.mxu0 %v3997
    %4226 = vmatpush2.msra.mxu0 %v3996
    %4227 = vmatprep.mubr.f32.mxu0 %v4091
    %4228 = vmatmul.mubr.f32.gmra.mxu0 %v4090
    %v4229 = vpop.f32.mrf.mxu0
    %v4230 = vadd.f32 0.0, %v4229
    %v4231 = vpop.f32.mrf.mxu0
    %v4232 = vadd.f32 0.0, %v4231
    %4233 = vdwg.mxu0
    %4234 = vmatprep.subr.mxu0 %v3993
    %4235 = vmatpush1.msra.mxu0 %v3992
    %4236 = vmatprep.subr.mxu0 %v3987
    %4237 = vmatpush1.msra.mxu0 %v3986
    %4238 = vmatprep.subr.mxu0 %v3981
    %4239 = vmatpush1.msra.mxu0 %v3980
    %4240 = vmatprep.subr.mxu0 %v3975
    %4241 = vmatpush1.msra.mxu0 %v3974
    %4242 = vmatprep.subr.mxu0 %v3969
    %4243 = vmatpush1.msra.mxu0 %v3968
    %4244 = vmatprep.subr.mxu0 %v3963
    %4245 = vmatpush1.msra.mxu0 %v3962
    %4246 = vmatprep.subr.mxu0 %v3957
    %4247 = vmatpush1.msra.mxu0 %v3956
    %4248 = vmatprep.subr.mxu0 %v3951
    %4249 = vmatpush1.msra.mxu0 %v3950
    %4250 = vmatprep.subr.mxu0 %v3945
    %4251 = vmatpush1.msra.mxu0 %v3944
    %4252 = vmatprep.subr.mxu0 %v3939
    %4253 = vmatpush1.msra.mxu0 %v3938
    %4254 = vmatprep.subr.mxu0 %v3933
    %4255 = vmatpush1.msra.mxu0 %v3932
    %4256 = vmatprep.subr.mxu0 %v3927
    %4257 = vmatpush1.msra.mxu0 %v3926
    %4258 = vmatprep.subr.mxu0 %v3921
    %4259 = vmatpush1.msra.mxu0 %v3920
    %4260 = vmatprep.subr.mxu0 %v3915
    %4261 = vmatpush1.msra.mxu0 %v3914
    %4262 = vmatprep.subr.mxu0 %v3909
    %4263 = vmatpush1.msra.mxu0 %v3908
    %4264 = vmatprep.subr.mxu0 %v3903
    %4265 = vmatpush1.msra.mxu0 %v3902
    %4266 = vmatprep.subr.mxu0 %v4089
    %4267 = vmatpush2.msra.mxu0 %v4088
    %4268 = vmatprep.subr.mxu0 %v4083
    %4269 = vmatpush2.msra.mxu0 %v4082
    %4270 = vmatprep.subr.mxu0 %v4077
    %4271 = vmatpush2.msra.mxu0 %v4076
    %4272 = vmatprep.subr.mxu0 %v4071
    %4273 = vmatpush2.msra.mxu0 %v4070
    %4274 = vmatprep.subr.mxu0 %v4065
    %4275 = vmatpush2.msra.mxu0 %v4064
    %4276 = vmatprep.subr.mxu0 %v4059
    %4277 = vmatpush2.msra.mxu0 %v4058
    %4278 = vmatprep.subr.mxu0 %v4053
    %4279 = vmatpush2.msra.mxu0 %v4052
    %4280 = vmatprep.subr.mxu0 %v4047
    %4281 = vmatpush2.msra.mxu0 %v4046
    %4282 = vmatprep.subr.mxu0 %v4041
    %4283 = vmatpush2.msra.mxu0 %v4040
    %4284 = vmatprep.subr.mxu0 %v4035
    %4285 = vmatpush2.msra.mxu0 %v4034
    %4286 = vmatprep.subr.mxu0 %v4029
    %4287 = vmatpush2.msra.mxu0 %v4028
    %4288 = vmatprep.subr.mxu0 %v4023
    %4289 = vmatpush2.msra.mxu0 %v4022
    %4290 = vmatprep.subr.mxu0 %v4017
    %4291 = vmatpush2.msra.mxu0 %v4016
    %4292 = vmatprep.subr.mxu0 %v4011
    %4293 = vmatpush2.msra.mxu0 %v4010
    %4294 = vmatprep.subr.mxu0 %v4005
    %4295 = vmatpush2.msra.mxu0 %v4004
    %4296 = vmatprep.subr.mxu0 %v3999
    %4297 = vmatpush2.msra.mxu0 %v3998
    %4298 = vmatprep.mubr.f32.mxu0 %v4091
    %4299 = vmatmul.mubr.f32.gmra.mxu0 %v4090
    %v4300 = vpop.f32.mrf.mxu0
    %v4301 = vadd.f32 0.0, %v4300
    %v4302 = vpop.f32.mrf.mxu0
    %v4303 = vadd.f32 0.0, %v4302
    %4304 = vdwg.mxu0
    %v4305 = vld [vmem:[#allocation13] sm:$0xff]
    %v4306 = vld [vmem:[#allocation13 + $0x8] sm:$0xff]
    %v4307 = vld [vmem:[#allocation13 + $0x10] sm:$0xff]
    %v4308 = vld [vmem:[#allocation13 + $0x18] sm:$0xff]
    %v4309 = vld [vmem:[#allocation13 + $0x20] sm:$0xff]
    %v4310 = vld [vmem:[#allocation13 + $0x28] sm:$0xff]
    %v4311 = vld [vmem:[#allocation13 + $0x30] sm:$0xff]
    %v4312 = vld [vmem:[#allocation13 + $0x38] sm:$0xff]
    %v4313 = vld [vmem:[#allocation13 + $0x40] sm:$0xff]
    %v4314 = vld [vmem:[#allocation13 + $0x48] sm:$0xff]
    %v4315 = vld [vmem:[#allocation13 + $0x50] sm:$0xff]
    %v4316 = vld [vmem:[#allocation13 + $0x58] sm:$0xff]
    %v4317 = vld [vmem:[#allocation13 + $0x60] sm:$0xff]
    %v4318 = vld [vmem:[#allocation13 + $0x68] sm:$0xff]
    %v4319 = vld [vmem:[#allocation13 + $0x70] sm:$0xff]
    %v4320 = vld [vmem:[#allocation13 + $0x78] sm:$0xff]
    %v4321 = vld [vmem:[#allocation13 + $0x80] sm:$0xff]
    %v4322 = vld [vmem:[#allocation13 + $0x88] sm:$0xff]
    %v4323 = vld [vmem:[#allocation13 + $0x90] sm:$0xff]
    %v4324 = vld [vmem:[#allocation13 + $0x98] sm:$0xff]
    %v4325 = vld [vmem:[#allocation13 + $0xa0] sm:$0xff]
    %v4326 = vld [vmem:[#allocation13 + $0xa8] sm:$0xff]
    %v4327 = vld [vmem:[#allocation13 + $0xb0] sm:$0xff]
    %v4328 = vld [vmem:[#allocation13 + $0xb8] sm:$0xff]
    %v4329 = vld [vmem:[#allocation13 + $0xc0] sm:$0xff]
    %v4330 = vld [vmem:[#allocation13 + $0xc8] sm:$0xff]
    %v4331 = vld [vmem:[#allocation13 + $0xd0] sm:$0xff]
    %v4332 = vld [vmem:[#allocation13 + $0xd8] sm:$0xff]
    %v4333 = vld [vmem:[#allocation13 + $0xe0] sm:$0xff]
    %v4334 = vld [vmem:[#allocation13 + $0xe8] sm:$0xff]
    %v4335 = vld [vmem:[#allocation13 + $0xf0] sm:$0xff]
    %v4336 = vld [vmem:[#allocation13 + $0xf8] sm:$0xff]
    %v4337 = vld [vmem:[#allocation13 + $0x100] sm:$0xff]
    %v4338 = vld [vmem:[#allocation13 + $0x108] sm:$0xff]
    %v4339 = vld [vmem:[#allocation13 + $0x110] sm:$0xff]
    %v4340 = vld [vmem:[#allocation13 + $0x118] sm:$0xff]
    %v4341 = vld [vmem:[#allocation13 + $0x120] sm:$0xff]
    %v4342 = vld [vmem:[#allocation13 + $0x128] sm:$0xff]
    %v4343 = vld [vmem:[#allocation13 + $0x130] sm:$0xff]
    %v4344 = vld [vmem:[#allocation13 + $0x138] sm:$0xff]
    %v4345 = vld [vmem:[#allocation13 + $0x140] sm:$0xff]
    %v4346 = vld [vmem:[#allocation13 + $0x148] sm:$0xff]
    %v4347 = vld [vmem:[#allocation13 + $0x150] sm:$0xff]
    %v4348 = vld [vmem:[#allocation13 + $0x158] sm:$0xff]
    %v4349 = vld [vmem:[#allocation13 + $0x160] sm:$0xff]
    %v4350 = vld [vmem:[#allocation13 + $0x168] sm:$0xff]
    %v4351 = vld [vmem:[#allocation13 + $0x170] sm:$0xff]
    %v4352 = vld [vmem:[#allocation13 + $0x178] sm:$0xff]
    %v4353 = vld [vmem:[#allocation13 + $0x180] sm:$0xff]
    %v4354 = vld [vmem:[#allocation13 + $0x188] sm:$0xff]
    %v4355 = vld [vmem:[#allocation13 + $0x190] sm:$0xff]
    %v4356 = vld [vmem:[#allocation13 + $0x198] sm:$0xff]
    %v4357 = vld [vmem:[#allocation13 + $0x1a0] sm:$0xff]
    %v4358 = vld [vmem:[#allocation13 + $0x1a8] sm:$0xff]
    %v4359 = vld [vmem:[#allocation13 + $0x1b0] sm:$0xff]
    %v4360 = vld [vmem:[#allocation13 + $0x1b8] sm:$0xff]
    %v4361 = vld [vmem:[#allocation13 + $0x1c0] sm:$0xff]
    %v4362 = vld [vmem:[#allocation13 + $0x1c8] sm:$0xff]
    %v4363 = vld [vmem:[#allocation13 + $0x1d0] sm:$0xff]
    %v4364 = vld [vmem:[#allocation13 + $0x1d8] sm:$0xff]
    %v4365 = vld [vmem:[#allocation13 + $0x1e0] sm:$0xff]
    %v4366 = vld [vmem:[#allocation13 + $0x1e8] sm:$0xff]
    %v4367 = vld [vmem:[#allocation13 + $0x1f0] sm:$0xff]
    %v4368 = vld [vmem:[#allocation13 + $0x1f8] sm:$0xff]
    %v4369 = vld [vmem:[#allocation13 + $0x200] sm:$0xff]
    %v4370 = vld [vmem:[#allocation13 + $0x208] sm:$0xff]
    %v4371 = vld [vmem:[#allocation13 + $0x210] sm:$0xff]
    %v4372 = vld [vmem:[#allocation13 + $0x218] sm:$0xff]
    %v4373 = vld [vmem:[#allocation13 + $0x220] sm:$0xff]
    %v4374 = vld [vmem:[#allocation13 + $0x228] sm:$0xff]
    %v4375 = vld [vmem:[#allocation13 + $0x230] sm:$0xff]
    %v4376 = vld [vmem:[#allocation13 + $0x238] sm:$0xff]
    %v4377 = vld [vmem:[#allocation13 + $0x240] sm:$0xff]
    %v4378 = vld [vmem:[#allocation13 + $0x248] sm:$0xff]
    %v4379 = vld [vmem:[#allocation13 + $0x250] sm:$0xff]
    %v4380 = vld [vmem:[#allocation13 + $0x258] sm:$0xff]
    %v4381 = vld [vmem:[#allocation13 + $0x260] sm:$0xff]
    %v4382 = vld [vmem:[#allocation13 + $0x268] sm:$0xff]
    %v4383 = vld [vmem:[#allocation13 + $0x270] sm:$0xff]
    %v4384 = vld [vmem:[#allocation13 + $0x278] sm:$0xff]
    %v4385 = vld [vmem:[#allocation13 + $0x280] sm:$0xff]
    %v4386 = vld [vmem:[#allocation13 + $0x288] sm:$0xff]
    %v4387 = vld [vmem:[#allocation13 + $0x290] sm:$0xff]
    %v4388 = vld [vmem:[#allocation13 + $0x298] sm:$0xff]
    %v4389 = vld [vmem:[#allocation13 + $0x2a0] sm:$0xff]
    %v4390 = vld [vmem:[#allocation13 + $0x2a8] sm:$0xff]
    %v4391 = vld [vmem:[#allocation13 + $0x2b0] sm:$0xff]
    %v4392 = vld [vmem:[#allocation13 + $0x2b8] sm:$0xff]
    %v4393 = vld [vmem:[#allocation13 + $0x2c0] sm:$0xff]
    %v4394 = vld [vmem:[#allocation13 + $0x2c8] sm:$0xff]
    %v4395 = vld [vmem:[#allocation13 + $0x2d0] sm:$0xff]
    %v4396 = vld [vmem:[#allocation13 + $0x2d8] sm:$0xff]
    %v4397 = vld [vmem:[#allocation13 + $0x2e0] sm:$0xff]
    %v4398 = vld [vmem:[#allocation13 + $0x2e8] sm:$0xff]
    %v4399 = vld [vmem:[#allocation13 + $0x2f0] sm:$0xff]
    %v4400 = vld [vmem:[#allocation13 + $0x2f8] sm:$0xff]
    %v4401 = vld [vmem:[%s8] sm:$0x1]
    %v4403 = vlaneseq
    %v4404 = vshrl.u32 %v4403, 7
    %v4405 = vsub.s32 0, %v4404
    %v4406 = vrot.slane %v4401, %v4405
    %4408 = vmatprep.subr.mxu0 0.0
    %4409 = vmatpush1.msra.mxu0 %v4320
    %4410 = vmatprep.subr.mxu0 0.0
    %4411 = vmatpush1.msra.mxu0 %v4319
    %4412 = vmatprep.subr.mxu0 0.0
    %4413 = vmatpush1.msra.mxu0 %v4318
    %4414 = vmatprep.subr.mxu0 0.0
    %4415 = vmatpush1.msra.mxu0 %v4317
    %4416 = vmatprep.subr.mxu0 0.0
    %4417 = vmatpush1.msra.mxu0 %v4316
    %4418 = vmatprep.subr.mxu0 0.0
    %4419 = vmatpush1.msra.mxu0 %v4315
    %4420 = vmatprep.subr.mxu0 0.0
    %4421 = vmatpush1.msra.mxu0 %v4314
    %4422 = vmatprep.subr.mxu0 0.0
    %4423 = vmatpush1.msra.mxu0 %v4313
    %4424 = vmatprep.subr.mxu0 0.0
    %4425 = vmatpush1.msra.mxu0 %v4312
    %4426 = vmatprep.subr.mxu0 0.0
    %4427 = vmatpush1.msra.mxu0 %v4311
    %4428 = vmatprep.subr.mxu0 0.0
    %4429 = vmatpush1.msra.mxu0 %v4310
    %4430 = vmatprep.subr.mxu0 0.0
    %4431 = vmatpush1.msra.mxu0 %v4309
    %4432 = vmatprep.subr.mxu0 0.0
    %4433 = vmatpush1.msra.mxu0 %v4308
    %4434 = vmatprep.subr.mxu0 0.0
    %4435 = vmatpush1.msra.mxu0 %v4307
    %4436 = vmatprep.subr.mxu0 0.0
    %4437 = vmatpush1.msra.mxu0 %v4306
    %4438 = vmatprep.subr.mxu0 0.0
    %4439 = vmatpush1.msra.mxu0 %v4305
    %4440 = vmatprep.subr.mxu0 0.0
    %4441 = vmatpush2.msra.mxu0 %v4336
    %4442 = vmatprep.subr.mxu0 0.0
    %4443 = vmatpush2.msra.mxu0 %v4335
    %4444 = vmatprep.subr.mxu0 0.0
    %4445 = vmatpush2.msra.mxu0 %v4334
    %4446 = vmatprep.subr.mxu0 0.0
    %4447 = vmatpush2.msra.mxu0 %v4333
    %4448 = vmatprep.subr.mxu0 0.0
    %4449 = vmatpush2.msra.mxu0 %v4332
    %4450 = vmatprep.subr.mxu0 0.0
    %4451 = vmatpush2.msra.mxu0 %v4331
    %4452 = vmatprep.subr.mxu0 0.0
    %4453 = vmatpush2.msra.mxu0 %v4330
    %4454 = vmatprep.subr.mxu0 0.0
    %4455 = vmatpush2.msra.mxu0 %v4329
    %4456 = vmatprep.subr.mxu0 0.0
    %4457 = vmatpush2.msra.mxu0 %v4328
    %4458 = vmatprep.subr.mxu0 0.0
    %4459 = vmatpush2.msra.mxu0 %v4327
    %4460 = vmatprep.subr.mxu0 0.0
    %4461 = vmatpush2.msra.mxu0 %v4326
    %4462 = vmatprep.subr.mxu0 0.0
    %4463 = vmatpush2.msra.mxu0 %v4325
    %4464 = vmatprep.subr.mxu0 0.0
    %4465 = vmatpush2.msra.mxu0 %v4324
    %4466 = vmatprep.subr.mxu0 0.0
    %4467 = vmatpush2.msra.mxu0 %v4323
    %4468 = vmatprep.subr.mxu0 0.0
    %4469 = vmatpush2.msra.mxu0 %v4322
    %4470 = vmatprep.subr.mxu0 0.0
    %4471 = vmatpush2.msra.mxu0 %v4321
    %4472 = vmatprep.mubr.f32.mxu0 %v4161
    %4473 = vmatmul.mubr.f32.gmra.mxu0 %v4159
    %v4474 = vpop.f32.mrf.mxu0
    %v4475 = vadd.f32 %v4406, %v4474
    %v4476 = vpop.f32.mrf.mxu0
    %4477 = vdwg.mxu0
    %4478 = vmatprep.subr.mxu0 0.0
    %4479 = vmatpush1.msra.mxu0 %v4352
    %4480 = vmatprep.subr.mxu0 0.0
    %4481 = vmatpush1.msra.mxu0 %v4351
    %4482 = vmatprep.subr.mxu0 0.0
    %4483 = vmatpush1.msra.mxu0 %v4350
    %4484 = vmatprep.subr.mxu0 0.0
    %4485 = vmatpush1.msra.mxu0 %v4349
    %4486 = vmatprep.subr.mxu0 0.0
    %4487 = vmatpush1.msra.mxu0 %v4348
    %4488 = vmatprep.subr.mxu0 0.0
    %4489 = vmatpush1.msra.mxu0 %v4347
    %4490 = vmatprep.subr.mxu0 0.0
    %4491 = vmatpush1.msra.mxu0 %v4346
    %4492 = vmatprep.subr.mxu0 0.0
    %4493 = vmatpush1.msra.mxu0 %v4345
    %4494 = vmatprep.subr.mxu0 0.0
    %4495 = vmatpush1.msra.mxu0 %v4344
    %4496 = vmatprep.subr.mxu0 0.0
    %4497 = vmatpush1.msra.mxu0 %v4343
    %4498 = vmatprep.subr.mxu0 0.0
    %4499 = vmatpush1.msra.mxu0 %v4342
    %4500 = vmatprep.subr.mxu0 0.0
    %4501 = vmatpush1.msra.mxu0 %v4341
    %4502 = vmatprep.subr.mxu0 0.0
    %4503 = vmatpush1.msra.mxu0 %v4340
    %4504 = vmatprep.subr.mxu0 0.0
    %4505 = vmatpush1.msra.mxu0 %v4339
    %4506 = vmatprep.subr.mxu0 0.0
    %4507 = vmatpush1.msra.mxu0 %v4338
    %4508 = vmatprep.subr.mxu0 0.0
    %4509 = vmatpush1.msra.mxu0 %v4337
    %4510 = vmatprep.subr.mxu0 0.0
    %4511 = vmatpush2.msra.mxu0 %v4368
    %4512 = vmatprep.subr.mxu0 0.0
    %4513 = vmatpush2.msra.mxu0 %v4367
    %4514 = vmatprep.subr.mxu0 0.0
    %4515 = vmatpush2.msra.mxu0 %v4366
    %4516 = vmatprep.subr.mxu0 0.0
    %4517 = vmatpush2.msra.mxu0 %v4365
    %4518 = vmatprep.subr.mxu0 0.0
    %4519 = vmatpush2.msra.mxu0 %v4364
    %4520 = vmatprep.subr.mxu0 0.0
    %4521 = vmatpush2.msra.mxu0 %v4363
    %4522 = vmatprep.subr.mxu0 0.0
    %4523 = vmatpush2.msra.mxu0 %v4362
    %4524 = vmatprep.subr.mxu0 0.0
    %4525 = vmatpush2.msra.mxu0 %v4361
    %4526 = vmatprep.subr.mxu0 0.0
    %4527 = vmatpush2.msra.mxu0 %v4360
    %4528 = vmatprep.subr.mxu0 0.0
    %4529 = vmatpush2.msra.mxu0 %v4359
    %4530 = vmatprep.subr.mxu0 0.0
    %4531 = vmatpush2.msra.mxu0 %v4358
    %4532 = vmatprep.subr.mxu0 0.0
    %4533 = vmatpush2.msra.mxu0 %v4357
    %4534 = vmatprep.subr.mxu0 0.0
    %4535 = vmatpush2.msra.mxu0 %v4356
    %4536 = vmatprep.subr.mxu0 0.0
    %4537 = vmatpush2.msra.mxu0 %v4355
    %4538 = vmatprep.subr.mxu0 0.0
    %4539 = vmatpush2.msra.mxu0 %v4354
    %4540 = vmatprep.subr.mxu0 0.0
    %4541 = vmatpush2.msra.mxu0 %v4353
    %4542 = vmatprep.mubr.f32.mxu0 %v4232
    %4543 = vmatmul.mubr.f32.gmra.mxu0 %v4230
    %v4544 = vpop.f32.mrf.mxu0
    %v4545 = vadd.f32 %v4475, %v4544
    %v4546 = vpop.f32.mrf.mxu0
    %4547 = vdwg.mxu0
    %4548 = vmatprep.subr.mxu0 0.0
    %4549 = vmatpush1.msra.mxu0 %v4384
    %4550 = vmatprep.subr.mxu0 0.0
    %4551 = vmatpush1.msra.mxu0 %v4383
    %4552 = vmatprep.subr.mxu0 0.0
    %4553 = vmatpush1.msra.mxu0 %v4382
    %4554 = vmatprep.subr.mxu0 0.0
    %4555 = vmatpush1.msra.mxu0 %v4381
    %4556 = vmatprep.subr.mxu0 0.0
    %4557 = vmatpush1.msra.mxu0 %v4380
    %4558 = vmatprep.subr.mxu0 0.0
    %4559 = vmatpush1.msra.mxu0 %v4379
    %4560 = vmatprep.subr.mxu0 0.0
    %4561 = vmatpush1.msra.mxu0 %v4378
    %4562 = vmatprep.subr.mxu0 0.0
    %4563 = vmatpush1.msra.mxu0 %v4377
    %4564 = vmatprep.subr.mxu0 0.0
    %4565 = vmatpush1.msra.mxu0 %v4376
    %4566 = vmatprep.subr.mxu0 0.0
    %4567 = vmatpush1.msra.mxu0 %v4375
    %4568 = vmatprep.subr.mxu0 0.0
    %4569 = vmatpush1.msra.mxu0 %v4374
    %4570 = vmatprep.subr.mxu0 0.0
    %4571 = vmatpush1.msra.mxu0 %v4373
    %4572 = vmatprep.subr.mxu0 0.0
    %4573 = vmatpush1.msra.mxu0 %v4372
    %4574 = vmatprep.subr.mxu0 0.0
    %4575 = vmatpush1.msra.mxu0 %v4371
    %4576 = vmatprep.subr.mxu0 0.0
    %4577 = vmatpush1.msra.mxu0 %v4370
    %4578 = vmatprep.subr.mxu0 0.0
    %4579 = vmatpush1.msra.mxu0 %v4369
    %4580 = vmatprep.subr.mxu0 0.0
    %4581 = vmatpush2.msra.mxu0 %v4400
    %4582 = vmatprep.subr.mxu0 0.0
    %4583 = vmatpush2.msra.mxu0 %v4399
    %4584 = vmatprep.subr.mxu0 0.0
    %4585 = vmatpush2.msra.mxu0 %v4398
    %4586 = vmatprep.subr.mxu0 0.0
    %4587 = vmatpush2.msra.mxu0 %v4397
    %4588 = vmatprep.subr.mxu0 0.0
    %4589 = vmatpush2.msra.mxu0 %v4396
    %4590 = vmatprep.subr.mxu0 0.0
    %4591 = vmatpush2.msra.mxu0 %v4395
    %4592 = vmatprep.subr.mxu0 0.0
    %4593 = vmatpush2.msra.mxu0 %v4394
    %4594 = vmatprep.subr.mxu0 0.0
    %4595 = vmatpush2.msra.mxu0 %v4393
    %4596 = vmatprep.subr.mxu0 0.0
    %4597 = vmatpush2.msra.mxu0 %v4392
    %4598 = vmatprep.subr.mxu0 0.0
    %4599 = vmatpush2.msra.mxu0 %v4391
    %4600 = vmatprep.subr.mxu0 0.0
    %4601 = vmatpush2.msra.mxu0 %v4390
    %4602 = vmatprep.subr.mxu0 0.0
    %4603 = vmatpush2.msra.mxu0 %v4389
    %4604 = vmatprep.subr.mxu0 0.0
    %4605 = vmatpush2.msra.mxu0 %v4388
    %4606 = vmatprep.subr.mxu0 0.0
    %4607 = vmatpush2.msra.mxu0 %v4387
    %4608 = vmatprep.subr.mxu0 0.0
    %4609 = vmatpush2.msra.mxu0 %v4386
    %4610 = vmatprep.subr.mxu0 0.0
    %4611 = vmatpush2.msra.mxu0 %v4385
    %4612 = vmatprep.mubr.f32.mxu0 %v4303
    %4613 = vmatmul.mubr.f32.gmra.mxu0 %v4301
    %v4614 = vpop.f32.mrf.mxu0
    %v4615 = vadd.f32 %v4545, %v4614
    %v4616 = vpop.f32.mrf.mxu0
    %4617 = vdwg.mxu0
    %4618 = vst [vmem:[#allocation14] sm:$0xff] %v4615
    // Predicated region
    $region66: #{tpu_custom_call.1} parent=1 // pred_check
      _
    $region67: #{tpu_custom_call.1} parent=1 // pred_check_branch
      %4620 = sbr.rel (0) target = $region69
    $region68: #{tpu_custom_call.1} parent=1 // pred_region
      %s4622 = ssub.s32 128, 128
      %4623 = vsyncadd [#allocation4], %s4622
      %s4625 = sshll.u32 [#allocation14], 4
      %s4626 = int_to_ptr.vmem [resolvable:$true] %s4625
      %4628 = dma.vmem_to_hbm [thread:$0]  %s4626, 128, %s9, [#allocation4]
    $region69: #{tpu_custom_call.1} parent=1 // pred_fallthru
      _
    // Predicated region
    $region70: #{tpu_custom_call.1} parent=1 // pred_check
      _
    $region71: #{tpu_custom_call.1} parent=1 // pred_check_branch
      %4630 = sbr.rel (0) target = $region73
    $region72: #{tpu_custom_call.1} parent=1 // pred_region
      %4631 = dma.done [#allocation4], 128
    $region73: #{tpu_custom_call.1} parent=1 // pred_fallthru
      _
    %4632 = vsyncpa [#allocation3], 1
    %4633 = vsyncpa [#allocation6], 1
    %4634 = vsyncpa [#allocation9], 1
    %4635 = vsyncpa [#allocation12], 1
    %4636 = vsyncpa [#allocation4], 1

</llo_original>
